<compile_context>
chip_gen: v5e
topology: v5e:2x2
jax: 0.10.0
libtpu: 0.0.40
codegen_flags: <defaults>
</compile_context>

<pallas_src>
import numpy as np
import jax
import jax.numpy as jnp
from jax import lax
from jax.experimental import pallas as pl
from jax.experimental.pallas import tpu as pltpu

LANE = 128


def _round_up(x, m):
    return (x + m - 1) // m * m


def _vmem_limit_bytes():
    """~75% of physical VMEM, capped at 100 MiB (96 MiB v5e/v6e, 48 MiB v7x)."""
    try:
        cap = int(pltpu.get_tpu_info().vmem_capacity_bytes)
    except Exception:
        cap = 64 * 1024 * 1024          # conservative: v7x-sized fallback
    return min(cap * 3 // 4, 100 * 1024 * 1024)


def _make_bottleneck_kernel(TH, Wp, W_real):
    """Kernel specialized for a TH-output-row tile of (padded) width Wp."""
    MW_WIN = (TH + 2) * Wp     # flattened rows in the haloed window
    MW_OUT = TH * Wp           # flattened rows actually produced

    def kernel(x_ref,
               bn1_s_ref, bn1_b_ref, w1_ref,
               bn2_s_ref, bn2_b_ref, w2_ref,
               bn3_s_ref, bn3_b_ref, w3_ref,
               wid_ref, bfin_ref,
               o_ref):
        h = pl.program_id(1)
        nh = pl.num_programs(1)
        cin_p = x_ref.shape[-1]
        cout_p = o_ref.shape[-1]

        # Haloed window: rows [h*TH, h*TH + TH + 2) of the H-padded image.
        # x stays fully resident per batch element (index_map ignores h).
        row0 = pl.multiple_of(h * TH, TH)
        xw = x_ref[0, pl.ds(row0, TH + 2)].reshape(MW_WIN, cin_p)   # bf16

        # ---- pre-activation BN1 + ReLU (f32), then 1x1 conv (bf16 MXU) ----
        t1 = jnp.maximum(xw.astype(jnp.float32) * bn1_s_ref[...]
                         + bn1_b_ref[...], 0.0)
        y1 = jnp.dot(t1.astype(jnp.bfloat16), w1_ref[...],
                     preferred_element_type=jnp.float32)

        # ---- BN2 + ReLU (conv1 bias folded into the BN2 shift) ----
        t2 = jnp.maximum(y1 * bn2_s_ref[...] + bn2_b_ref[...], 0.0)

        # conv2 is zero-padded (padding=1): halo rows outside the image (and
        # the W sublane-pad columns) must be exactly zero, so mask them.
        fr = lax.broadcasted_iota(jnp.int32, (MW_WIN, 1), 0)
        col = fr % Wp
        keep = jnp.logical_and(
            jnp.logical_or(h > 0, fr >= Wp),
            jnp.logical_or(h < nh - 1, fr < (TH + 1) * Wp))
        if W_real < Wp:
            keep = jnp.logical_and(keep, col < W_real)
        t2 = jnp.where(keep, t2, 0.0)

        # dx = -1 / +1 column taps via aligned sublane rolls (XLU) + column
        # masks; pieces cast to bf16 *before* the concat so only one bf16
        # (MW_WIN, 3*Cp) buffer is materialized (no f32 concat + recast copy).
        t2l = jnp.where(col != 0, pltpu.roll(t2, shift=1, axis=0), 0.0)
        t2r = jnp.where(col != Wp - 1,
                        pltpu.roll(t2, shift=MW_WIN - 1, axis=0), 0.0)
        t2cat = jnp.concatenate([t2l.astype(jnp.bfloat16),
                                 t2.astype(jnp.bfloat16),
                                 t2r.astype(jnp.bfloat16)], axis=-1)

        # ---- 3x3 conv: 3 deep matmuls (one per dy, K = 3*Cp each) ----
        acc = jnp.dot(t2cat[0:MW_OUT], w2_ref[0],
                      preferred_element_type=jnp.float32)
        acc = acc + jnp.dot(t2cat[Wp:Wp + MW_OUT], w2_ref[1],
                            preferred_element_type=jnp.float32)
        acc = acc + jnp.dot(t2cat[2 * Wp:2 * Wp + MW_OUT], w2_ref[2],
                            preferred_element_type=jnp.float32)

        # ---- BN3 + ReLU (conv2 bias folded), then 1x1 conv ----
        t3 = jnp.maximum(acc * bn3_s_ref[...] + bn3_b_ref[...], 0.0)
        y3 = jnp.dot(t3.astype(jnp.bfloat16), w3_ref[...],
                     preferred_element_type=jnp.float32)

        # ---- identity branch: 1x1 conv on raw x (fresh bf16 interior slice,
        # keeps the haloed f32 window's live range short) ----
        xi = x_ref[0, pl.ds(row0 + 1, TH)].reshape(MW_OUT, cin_p)
        idy = jnp.dot(xi, wid_ref[...], preferred_element_type=jnp.float32)

        # b3 + bid folded into one final bias, added once.
        o_ref[0] = (y3 + idy + bfin_ref[...]).reshape(TH, Wp, cout_p)

    return kernel


_PARAM_ORDER = ("bn1_s", "bn1_b", "w1",
                "bn2_s", "bn2_b", "w2c",
                "bn3_s", "bn3_b", "w3",
                "wid", "bfin")


def bottleneck_forward(x_nchw, kp, *, tile_rows=32):
    """x_nchw: (N, Cin, H, W) f32 -> (N, Cout, H, W) f32.

    kp: packed kernel params from pack_params() (lane-padded, bf16 weights,
    biases folded into BN shifts / a single final bias).
    """
    N, Cin, H, W = x_nchw.shape
    cin_p = kp["w1"].shape[0]
    cout_p = kp["w3"].shape[1]
    cout = int(kp["_cout"])

    # Largest multiple-of-8 divisor of H that is <= tile_rows: keeps the
    # flattened row slices sublane-aligned and keeps the h axis pipelined.
    TH = 0
    for d in range(8, min(tile_rows, H) + 1, 8):
        if H % d == 0:
            TH = d
    if TH == 0:
        TH = H   # TODO(synk): pad H + mask when H has no multiple-of-8 divisor
    nh = H // TH

    Wp = _round_up(W, 8)

    # NCHW -> NHWC, pad channels to the 128-lane width, H by the 1-row conv2
    # halo and W to a sublane multiple; ship x as bf16 (halves HBM traffic).
    # (In a full NHWC model the boundary transposes disappear.)
    x = jnp.transpose(x_nchw, (0, 2, 3, 1))
    x = jnp.pad(x, ((0, 0), (1, 1), (0, Wp - W), (0, cin_p - Cin)))
    x = x.astype(jnp.bfloat16)

    def full_spec(a):
        # TODO(synk): single-buffer these grid-invariant params
        # (pipeline_mode=pl.Buffered(1)) to halve resident weight VMEM on v7x.
        return pl.BlockSpec(a.shape, lambda n, h, _nd=a.ndim: (0,) * _nd)

    in_specs = [pl.BlockSpec((1, H + 2, Wp, cin_p), lambda n, h: (n, 0, 0, 0))]
    in_specs += [full_spec(kp[k]) for k in _PARAM_ORDER]

    out_nhwc = pl.pallas_call(
        _make_bottleneck_kernel(TH, Wp, W),
        out_shape=jax.ShapeDtypeStruct((N, H, Wp, cout_p), jnp.float32),
        grid_spec=pltpu.PrefetchScalarGridSpec(
            num_scalar_prefetch=0,
            grid=(N, nh),
            in_specs=in_specs,
            out_specs=pl.BlockSpec((1, TH, Wp, cout_p),
                                   lambda n, h: (n, h, 0, 0)),
        ),
        compiler_params=pltpu.CompilerParams(
            dimension_semantics=("parallel", "parallel"),
            vmem_limit_bytes=_vmem_limit_bytes()),
    )(x, *(kp[k] for k in _PARAM_ORDER))

    return jnp.transpose(out_nhwc[:, :, :W, :cout], (0, 3, 1, 2))


def make_params(key, inplanes, planes, expansion=4):
    """Logical (unpadded) parameters; BatchNorm folded to scale/shift."""
    outplanes = planes * expansion
    eps = 1e-5
    ks = jax.random.split(key, 24)
    ki = iter(ks)

    def bn_params(c):
        g = jax.random.normal(next(ki), (c,), jnp.float32) * 0.1 + 1.0
        b = jax.random.normal(next(ki), (c,), jnp.float32) * 0.1
        m = jax.random.normal(next(ki), (c,), jnp.float32) * 0.1
        v = jax.random.uniform(next(ki), (c,), jnp.float32, 0.5, 1.5)
        scale = g / jnp.sqrt(v + eps)
        shift = b - m * scale
        return scale, shift

    bn1_s, bn1_b = bn_params(inplanes)   # conv1_bn = BatchNorm2d(prev_layer_depth)
    bn2_s, bn2_b = bn_params(planes)     # conv2_bn = BatchNorm2d(planes)
    bn3_s, bn3_b = bn_params(planes)     # conv3_bn = BatchNorm2d(planes)

    def conv_w(shape, fan_in):
        return jax.random.normal(next(ki), shape, jnp.float32) / np.sqrt(fan_in)

    return dict(
        bn1_s=bn1_s, bn1_b=bn1_b,
        w1=conv_w((inplanes, planes), inplanes),            # 1x1, IC -> OC
        b1=conv_w((planes,), planes),
        bn2_s=bn2_s, bn2_b=bn2_b,
        w2=conv_w((3, 3, planes, planes), 9 * planes),      # 3x3, HWIO
        b2=conv_w((planes,), planes),
        bn3_s=bn3_s, bn3_b=bn3_b,
        w3=conv_w((planes, outplanes), planes),             # 1x1
        b3=conv_w((outplanes,), outplanes),
        wid=conv_w((inplanes, outplanes), inplanes),        # identity 1x1
        bid=conv_w((outplanes,), outplanes),
    )


def pack_params(p):
    """Lane-pad to 128, cast matmul weights to bf16, concat w2 over dx,
    and fold conv biases into the following BN affine / one final bias."""
    inplanes, planes = p["w1"].shape
    cout = p["w3"].shape[1]
    cin_p = _round_up(inplanes, LANE)
    cp = _round_up(planes, LANE)
    cout_p = _round_up(cout, LANE)

    def pad_vec(v, n):
        return jnp.pad(v, (0, n - v.shape[0])).reshape(1, n).astype(jnp.float32)

    def pad_mat(w, r, c):
        return jnp.pad(w, ((0, r - w.shape[0]), (0, c - w.shape[1])))

    # bias folding (algebraically identical, removes three VPU adds per tile)
    bn2_b = p["bn2_b"] + p["b1"] * p["bn2_s"]
    bn3_b = p["bn3_b"] + p["b2"] * p["bn3_s"]
    bfin = p["b3"] + p["bid"]

    w2p = jnp.pad(p["w2"], ((0, 0), (0, 0),
                            (0, cp - planes), (0, cp - planes)))
    # (3, 3, Cp, Cp) -> (3, 3*Cp, Cp): K rows ordered [dx=0 | dx=1 | dx=2],
    # matching the kernel's concat([t2(c-1), t2(c), t2(c+1)]) channel layout.
    w2c = w2p.reshape(3, 3 * cp, cp).astype(jnp.bfloat16)

    return dict(
        bn1_s=pad_vec(p["bn1_s"], cin_p), bn1_b=pad_vec(p["bn1_b"], cin_p),
        w1=pad_mat(p["w1"], cin_p, cp).astype(jnp.bfloat16),
        bn2_s=pad_vec(p["bn2_s"], cp), bn2_b=pad_vec(bn2_b, cp),
        w2c=w2c,
        bn3_s=pad_vec(p["bn3_s"], cp), bn3_b=pad_vec(bn3_b, cp),
        w3=pad_mat(p["w3"], cp, cout_p).astype(jnp.bfloat16),
        wid=pad_mat(p["wid"], cin_p, cout_p).astype(jnp.bfloat16),
        bfin=pad_vec(bfin, cout_p),
        _cout=cout,
    )


def ref_forward(x_nchw, p):
    """Pure-JAX reference with the same bf16-input / f32-accumulate numerics
    (x is quantized to bf16 on ingestion, matching the kernel's bf16 x stream)."""
    bf16, f32 = jnp.bfloat16, jnp.float32
    x = jnp.transpose(x_nchw, (0, 2, 3, 1)).astype(bf16).astype(f32)
    dn = ("NHWC", "HWIO", "NHWC")

    def conv(v, w4, b, padding):
        return lax.conv_general_dilated(
            v.astype(bf16), w4.astype(bf16), (1, 1), padding,
            dimension_numbers=dn, preferred_element_type=f32) + b

    def conv1x1(v, w, b):
        return conv(v, w.reshape(1, 1, *w.shape), b, "VALID")

    t = jax.nn.relu(x * p["bn1_s"] + p["bn1_b"])
    y1 = conv1x1(t, p["w1"], p["b1"])
    t = jax.nn.relu(y1 * p["bn2_s"] + p["bn2_b"])
    y2 = conv(t, p["w2"], p["b2"], ((1, 1), (1, 1)))
    t = jax.nn.relu(y2 * p["bn3_s"] + p["bn3_b"])
    y3 = conv1x1(t, p["w3"], p["b3"])
    idy = conv1x1(x, p["wid"], p["bid"])
    return jnp.transpose(y3 + idy, (0, 3, 1, 2))


if __name__ == "__main__":
    N, Cin, H, W = 2, 4, 16, 16
    planes, expansion = 4, 4

    key = jax.random.PRNGKey(0)
    kx, kparam = jax.random.split(key)
    x = jax.random.normal(kx, (N, Cin, H, W), jnp.float32)
    params = make_params(kparam, Cin, planes, expansion)
    kparams = pack_params(params)

    out = jax.block_until_ready(bottleneck_forward(x, kparams))
    ref = jax.block_until_ready(ref_forward(x, params))

    assert out.shape == (N, planes * expansion, H, W)
    # bf16 matmul inputs -> allow a couple of bf16 ulps of drift vs the
    # (identically-quantized) conv reference.
    np.testing.assert_allclose(np.asarray(out), np.asarray(ref),
                               rtol=1e-2, atol=1e-2)
    print("KERNEL_OK")
</pallas_src>

<mosaic_0001>
module attributes {stable_mosaic.version = 11 : i64} {
  func.func @kernel(%arg0: i32, %arg1: i32, %arg2: memref<1x18x16x128xbf16, #tpu.memory_space<vmem>>, %arg3: memref<1x128xf32, #tpu.memory_space<vmem>>, %arg4: memref<1x128xf32, #tpu.memory_space<vmem>>, %arg5: memref<128x128xbf16, #tpu.memory_space<vmem>>, %arg6: memref<1x128xf32, #tpu.memory_space<vmem>>, %arg7: memref<1x128xf32, #tpu.memory_space<vmem>>, %arg8: memref<3x384x128xbf16, #tpu.memory_space<vmem>>, %arg9: memref<1x128xf32, #tpu.memory_space<vmem>>, %arg10: memref<1x128xf32, #tpu.memory_space<vmem>>, %arg11: memref<128x128xbf16, #tpu.memory_space<vmem>>, %arg12: memref<128x128xbf16, #tpu.memory_space<vmem>>, %arg13: memref<1x128xf32, #tpu.memory_space<vmem>>, %arg14: memref<1x16x16x128xf32, #tpu.memory_space<vmem>>) attributes {dimension_semantics = [#tpu.dimension_semantics<parallel>, #tpu.dimension_semantics<parallel>], iteration_bounds = array<i64: 2, 1>, scalar_prefetch = 0 : i64, scratch_operands = 0 : i64, tpu.core_type = #tpu.core_type<tc>, window_params = [{transform_indices = @transform_0, window_bounds = array<i64: 1, 18, 16, 128>}, {pipeline_mode = #tpu.pipeline_mode<synchronous>, transform_indices = @transform_1, window_bounds = array<i64: 1, 128>}, {pipeline_mode = #tpu.pipeline_mode<synchronous>, transform_indices = @transform_2, window_bounds = array<i64: 1, 128>}, {pipeline_mode = #tpu.pipeline_mode<synchronous>, transform_indices = @transform_3, window_bounds = array<i64: 128, 128>}, {pipeline_mode = #tpu.pipeline_mode<synchronous>, transform_indices = @transform_4, window_bounds = array<i64: 1, 128>}, {pipeline_mode = #tpu.pipeline_mode<synchronous>, transform_indices = @transform_5, window_bounds = array<i64: 1, 128>}, {pipeline_mode = #tpu.pipeline_mode<synchronous>, transform_indices = @transform_6, window_bounds = array<i64: 3, 384, 128>}, {pipeline_mode = #tpu.pipeline_mode<synchronous>, transform_indices = @transform_7, window_bounds = array<i64: 1, 128>}, {pipeline_mode = #tpu.pipeline_mode<synchronous>, transform_indices = @transform_8, window_bounds = array<i64: 1, 128>}, {pipeline_mode = #tpu.pipeline_mode<synchronous>, transform_indices = @transform_9, window_bounds = array<i64: 128, 128>}, {pipeline_mode = #tpu.pipeline_mode<synchronous>, transform_indices = @transform_10, window_bounds = array<i64: 128, 128>}, {pipeline_mode = #tpu.pipeline_mode<synchronous>, transform_indices = @transform_11, window_bounds = array<i64: 1, 128>}, {transform_indices = @transform_12, window_bounds = array<i64: 1, 16, 16, 128>}]} {
    %c16_i32 = arith.constant 16 : i32
    %0 = arith.muli %arg1, %c16_i32 : i32
    %1 = tpu.assume_multiple %0, 16 : i32
    %c0 = arith.constant 0 : index
    %2 = arith.index_cast %1 : i32 to index
    %c0_0 = arith.constant 0 : index
    %c0_1 = arith.constant 0 : index
    %3 = vector.load %arg2[%c0, %2, %c0_0, %c0_1] : memref<1x18x16x128xbf16, #tpu.memory_space<vmem>>, vector<1x18x16x128xbf16>
    %4 = vector.shape_cast %3 : vector<1x18x16x128xbf16> to vector<18x16x128xbf16>
    %5 = vector.shape_cast %4 : vector<18x16x128xbf16> to vector<288x128xbf16>
    %6 = arith.extf %5 : vector<288x128xbf16> to vector<288x128xf32>
    %c0_2 = arith.constant 0 : index
    %c0_3 = arith.constant 0 : index
    %7 = vector.load %arg3[%c0_2, %c0_3] : memref<1x128xf32, #tpu.memory_space<vmem>>, vector<1x128xf32>
    %8 = vector.broadcast %7 : vector<1x128xf32> to vector<288x128xf32>
    %9 = arith.mulf %6, %8 : vector<288x128xf32>
    %c0_4 = arith.constant 0 : index
    %c0_5 = arith.constant 0 : index
    %10 = vector.load %arg4[%c0_4, %c0_5] : memref<1x128xf32, #tpu.memory_space<vmem>>, vector<1x128xf32>
    %11 = vector.broadcast %10 : vector<1x128xf32> to vector<288x128xf32>
    %12 = arith.addf %9, %11 : vector<288x128xf32>
    %cst = arith.constant 0.000000e+00 : f32
    %13 = vector.broadcast %cst : f32 to vector<288x128xf32>
    %14 = arith.maximumf %12, %13 : vector<288x128xf32>
    %15 = arith.truncf %14 : vector<288x128xf32> to vector<288x128xbf16>
    %c0_6 = arith.constant 0 : index
    %c0_7 = arith.constant 0 : index
    %16 = vector.load %arg5[%c0_6, %c0_7] : memref<128x128xbf16, #tpu.memory_space<vmem>>, vector<128x128xbf16>
    %cst_8 = arith.constant dense<0.000000e+00> : vector<288x128xf32>
    %17 = tpu.matmul %15, %16, %cst_8 {dimension_numbers = #tpu.dot_dimension_numbers<[1], [0], [0], [1], [0, 0, 1, 1], [], []>} : vector<288x128xbf16>, vector<128x128xbf16>, vector<288x128xf32> -> vector<288x128xf32>
    %c0_9 = arith.constant 0 : index
    %c0_10 = arith.constant 0 : index
    %18 = vector.load %arg6[%c0_9, %c0_10] : memref<1x128xf32, #tpu.memory_space<vmem>>, vector<1x128xf32>
    %19 = vector.broadcast %18 : vector<1x128xf32> to vector<288x128xf32>
    %20 = arith.mulf %17, %19 : vector<288x128xf32>
    %c0_11 = arith.constant 0 : index
    %c0_12 = arith.constant 0 : index
    %21 = vector.load %arg7[%c0_11, %c0_12] : memref<1x128xf32, #tpu.memory_space<vmem>>, vector<1x128xf32>
    %22 = vector.broadcast %21 : vector<1x128xf32> to vector<288x128xf32>
    %23 = arith.addf %20, %22 : vector<288x128xf32>
    %cst_13 = arith.constant 0.000000e+00 : f32
    %24 = vector.broadcast %cst_13 : f32 to vector<288x128xf32>
    %25 = arith.maximumf %23, %24 : vector<288x128xf32>
    %26 = tpu.iota {dimensions = array<i32: 0>} : vector<288x1xi32>
    %c16_i32_14 = arith.constant 16 : i32
    %c0_i32 = arith.constant 0 : i32
    %27 = arith.cmpi eq, %c16_i32_14, %c0_i32 : i32
    %c1_i32 = arith.constant 1 : i32
    %28 = arith.select %27, %c1_i32, %c16_i32_14 : i32
    %29 = vector.broadcast %28 : i32 to vector<288x1xi32>
    %30 = arith.remsi %26, %29 : vector<288x1xi32>
    %c0_i32_15 = arith.constant 0 : i32
    %31 = vector.broadcast %c0_i32_15 : i32 to vector<288x1xi32>
    %32 = arith.cmpi ne, %30, %31 : vector<288x1xi32>
    %c0_i32_16 = arith.constant 0 : i32
    %33 = vector.broadcast %c0_i32_16 : i32 to vector<288x1xi32>
    %34 = arith.cmpi slt, %30, %33 : vector<288x1xi32>
    %c0_i32_17 = arith.constant 0 : i32
    %35 = arith.cmpi slt, %28, %c0_i32_17 : i32
    %36 = vector.broadcast %35 : i1 to vector<288x1xi1>
    %37 = vector.broadcast %36 : vector<288x1xi1> to vector<288x1xi1>
    %38 = arith.xori %34, %37 : vector<288x1xi1>
    %39 = arith.andi %38, %32 : vector<288x1xi1>
    %40 = vector.broadcast %28 : i32 to vector<288x1xi32>
    %41 = arith.addi %30, %40 : vector<288x1xi32>
    %42 = arith.select %39, %41, %30 : vector<288x1xi1>, vector<288x1xi32>
    %c0_i32_18 = arith.constant 0 : i32
    %43 = arith.cmpi sgt, %arg1, %c0_i32_18 : i32
    %c16_i32_19 = arith.constant 16 : i32
    %44 = vector.broadcast %c16_i32_19 : i32 to vector<288x1xi32>
    %45 = arith.cmpi sge, %26, %44 : vector<288x1xi32>
    %46 = vector.broadcast %43 : i1 to vector<288x1xi1>
    %47 = arith.ori %46, %45 : vector<288x1xi1>
    %c0_i32_20 = arith.constant 0 : i32
    %48 = arith.cmpi slt, %arg1, %c0_i32_20 : i32
    %c272_i32 = arith.constant 272 : i32
    %49 = vector.broadcast %c272_i32 : i32 to vector<288x1xi32>
    %50 = arith.cmpi slt, %26, %49 : vector<288x1xi32>
    %51 = vector.broadcast %48 : i1 to vector<288x1xi1>
    %52 = arith.ori %51, %50 : vector<288x1xi1>
    %53 = arith.andi %47, %52 : vector<288x1xi1>
    %cst_21 = arith.constant 0.000000e+00 : f32
    %54 = vector.shape_cast %53 : vector<288x1xi1> to vector<288x1xi1>
    %55 = vector.broadcast %54 : vector<288x1xi1> to vector<288x128xi1>
    %56 = vector.broadcast %cst_21 : f32 to vector<288x128xf32>
    %57 = arith.select %55, %25, %56 : vector<288x128xi1>, vector<288x128xf32>
    %c0_i32_22 = arith.constant 0 : i32
    %58 = vector.broadcast %c0_i32_22 : i32 to vector<288x1xi32>
    %59 = arith.cmpi ne, %42, %58 : vector<288x1xi32>
    %c1_i32_23 = arith.constant 1 : i32
    %60 = tpu.dynamic_rotate %57 by %c1_i32_23 dim 0 : vector<288x128xf32>, i32 -> vector<288x128xf32>
    %cst_24 = arith.constant 0.000000e+00 : f32
    %61 = vector.shape_cast %59 : vector<288x1xi1> to vector<288x1xi1>
    %62 = vector.broadcast %61 : vector<288x1xi1> to vector<288x128xi1>
    %63 = vector.broadcast %cst_24 : f32 to vector<288x128xf32>
    %64 = arith.select %62, %60, %63 : vector<288x128xi1>, vector<288x128xf32>
    %c15_i32 = arith.constant 15 : i32
    %65 = vector.broadcast %c15_i32 : i32 to vector<288x1xi32>
    %66 = arith.cmpi ne, %42, %65 : vector<288x1xi32>
    %c287_i32 = arith.constant 287 : i32
    %67 = tpu.dynamic_rotate %57 by %c287_i32 dim 0 : vector<288x128xf32>, i32 -> vector<288x128xf32>
    %cst_25 = arith.constant 0.000000e+00 : f32
    %68 = vector.shape_cast %66 : vector<288x1xi1> to vector<288x1xi1>
    %69 = vector.broadcast %68 : vector<288x1xi1> to vector<288x128xi1>
    %70 = vector.broadcast %cst_25 : f32 to vector<288x128xf32>
    %71 = arith.select %69, %67, %70 : vector<288x128xi1>, vector<288x128xf32>
    %72 = arith.truncf %64 : vector<288x128xf32> to vector<288x128xbf16>
    %73 = arith.truncf %57 : vector<288x128xf32> to vector<288x128xbf16>
    %74 = arith.truncf %71 : vector<288x128xf32> to vector<288x128xbf16>
    %75 = tpu.concatenate %72, %73, %74 in 1 : vector<288x128xbf16>, vector<288x128xbf16>, vector<288x128xbf16> -> vector<288x384xbf16>
    %76 = vector.extract_strided_slice %75 {offsets = [0, 0], sizes = [256, 384], strides = [1, 1]} : vector<288x384xbf16> to vector<256x384xbf16>
    %c0_26 = arith.constant 0 : index
    %c0_27 = arith.constant 0 : index
    %c0_28 = arith.constant 0 : index
    %77 = vector.load %arg8[%c0_26, %c0_27, %c0_28] : memref<3x384x128xbf16, #tpu.memory_space<vmem>>, vector<1x384x128xbf16>
    %78 = vector.shape_cast %77 : vector<1x384x128xbf16> to vector<384x128xbf16>
    %cst_29 = arith.constant dense<0.000000e+00> : vector<256x128xf32>
    %79 = tpu.matmul %76, %78, %cst_29 {dimension_numbers = #tpu.dot_dimension_numbers<[1], [0], [0], [1], [0, 0, 1, 1], [], []>} : vector<256x384xbf16>, vector<384x128xbf16>, vector<256x128xf32> -> vector<256x128xf32>
    %80 = vector.extract_strided_slice %75 {offsets = [16, 0], sizes = [256, 384], strides = [1, 1]} : vector<288x384xbf16> to vector<256x384xbf16>
    %c1 = arith.constant 1 : index
    %c0_30 = arith.constant 0 : index
    %c0_31 = arith.constant 0 : index
    %81 = vector.load %arg8[%c1, %c0_30, %c0_31] : memref<3x384x128xbf16, #tpu.memory_space<vmem>>, vector<1x384x128xbf16>
    %82 = vector.shape_cast %81 : vector<1x384x128xbf16> to vector<384x128xbf16>
    %cst_32 = arith.constant dense<0.000000e+00> : vector<256x128xf32>
    %83 = tpu.matmul %80, %82, %cst_32 {dimension_numbers = #tpu.dot_dimension_numbers<[1], [0], [0], [1], [0, 0, 1, 1], [], []>} : vector<256x384xbf16>, vector<384x128xbf16>, vector<256x128xf32> -> vector<256x128xf32>
    %84 = arith.addf %79, %83 : vector<256x128xf32>
    %85 = vector.extract_strided_slice %75 {offsets = [32, 0], sizes = [256, 384], strides = [1, 1]} : vector<288x384xbf16> to vector<256x384xbf16>
    %c2 = arith.constant 2 : index
    %c0_33 = arith.constant 0 : index
    %c0_34 = arith.constant 0 : index
    %86 = vector.load %arg8[%c2, %c0_33, %c0_34] : memref<3x384x128xbf16, #tpu.memory_space<vmem>>, vector<1x384x128xbf16>
    %87 = vector.shape_cast %86 : vector<1x384x128xbf16> to vector<384x128xbf16>
    %cst_35 = arith.constant dense<0.000000e+00> : vector<256x128xf32>
    %88 = tpu.matmul %85, %87, %cst_35 {dimension_numbers = #tpu.dot_dimension_numbers<[1], [0], [0], [1], [0, 0, 1, 1], [], []>} : vector<256x384xbf16>, vector<384x128xbf16>, vector<256x128xf32> -> vector<256x128xf32>
    %89 = arith.addf %84, %88 : vector<256x128xf32>
    %c0_36 = arith.constant 0 : index
    %c0_37 = arith.constant 0 : index
    %90 = vector.load %arg9[%c0_36, %c0_37] : memref<1x128xf32, #tpu.memory_space<vmem>>, vector<1x128xf32>
    %91 = vector.broadcast %90 : vector<1x128xf32> to vector<256x128xf32>
    %92 = arith.mulf %89, %91 : vector<256x128xf32>
    %c0_38 = arith.constant 0 : index
    %c0_39 = arith.constant 0 : index
    %93 = vector.load %arg10[%c0_38, %c0_39] : memref<1x128xf32, #tpu.memory_space<vmem>>, vector<1x128xf32>
    %94 = vector.broadcast %93 : vector<1x128xf32> to vector<256x128xf32>
    %95 = arith.addf %92, %94 : vector<256x128xf32>
    %cst_40 = arith.constant 0.000000e+00 : f32
    %96 = vector.broadcast %cst_40 : f32 to vector<256x128xf32>
    %97 = arith.maximumf %95, %96 : vector<256x128xf32>
    %98 = arith.truncf %97 : vector<256x128xf32> to vector<256x128xbf16>
    %c0_41 = arith.constant 0 : index
    %c0_42 = arith.constant 0 : index
    %99 = vector.load %arg11[%c0_41, %c0_42] : memref<128x128xbf16, #tpu.memory_space<vmem>>, vector<128x128xbf16>
    %cst_43 = arith.constant dense<0.000000e+00> : vector<256x128xf32>
    %100 = tpu.matmul %98, %99, %cst_43 {dimension_numbers = #tpu.dot_dimension_numbers<[1], [0], [0], [1], [0, 0, 1, 1], [], []>} : vector<256x128xbf16>, vector<128x128xbf16>, vector<256x128xf32> -> vector<256x128xf32>
    %c1_i32_44 = arith.constant 1 : i32
    %101 = arith.addi %1, %c1_i32_44 : i32
    %c0_45 = arith.constant 0 : index
    %102 = arith.index_cast %101 : i32 to index
    %c0_46 = arith.constant 0 : index
    %c0_47 = arith.constant 0 : index
    %103 = vector.load %arg2[%c0_45, %102, %c0_46, %c0_47] : memref<1x18x16x128xbf16, #tpu.memory_space<vmem>>, vector<1x16x16x128xbf16>
    %104 = vector.shape_cast %103 : vector<1x16x16x128xbf16> to vector<16x16x128xbf16>
    %105 = vector.shape_cast %104 : vector<16x16x128xbf16> to vector<256x128xbf16>
    %c0_48 = arith.constant 0 : index
    %c0_49 = arith.constant 0 : index
    %106 = vector.load %arg12[%c0_48, %c0_49] : memref<128x128xbf16, #tpu.memory_space<vmem>>, vector<128x128xbf16>
    %cst_50 = arith.constant dense<0.000000e+00> : vector<256x128xf32>
    %107 = tpu.matmul %105, %106, %cst_50 {dimension_numbers = #tpu.dot_dimension_numbers<[1], [0], [0], [1], [0, 0, 1, 1], [], []>} : vector<256x128xbf16>, vector<128x128xbf16>, vector<256x128xf32> -> vector<256x128xf32>
    %108 = arith.addf %100, %107 : vector<256x128xf32>
    %c0_51 = arith.constant 0 : index
    %c0_52 = arith.constant 0 : index
    %109 = vector.load %arg13[%c0_51, %c0_52] : memref<1x128xf32, #tpu.memory_space<vmem>>, vector<1x128xf32>
    %110 = vector.broadcast %109 : vector<1x128xf32> to vector<256x128xf32>
    %111 = arith.addf %108, %110 : vector<256x128xf32>
    %112 = vector.shape_cast %111 : vector<256x128xf32> to vector<16x16x128xf32>
    %c0_53 = arith.constant 0 : index
    %c0_54 = arith.constant 0 : index
    %c0_55 = arith.constant 0 : index
    %c0_56 = arith.constant 0 : index
    %113 = vector.load %arg14[%c0_53, %c0_54, %c0_55, %c0_56] : memref<1x16x16x128xf32, #tpu.memory_space<vmem>>, vector<1x16x16x128xf32>
    %114 = vector.shape_cast %113 : vector<1x16x16x128xf32> to vector<16x16x128xf32>
    %115 = vector.shape_cast %112 : vector<16x16x128xf32> to vector<1x16x16x128xf32>
    tpu.vector_store %arg14[%c0_53, %c0_54, %c0_55, %c0_56], %115 {strides = array<i32>} : memref<1x16x16x128xf32, #tpu.memory_space<vmem>>, vector<1x16x16x128xf32>,
    return
  }
  func.func @transform_0(%arg0: i32, %arg1: i32) -> (i32, i32, i32, i32) {
    %c0_i32 = arith.constant 0 : i32
    %c0_i32_0 = arith.constant 0 : i32
    %c0_i32_1 = arith.constant 0 : i32
    %c0_i32_2 = arith.constant 0 : i32
    return %arg0, %c0_i32, %c0_i32_0, %c0_i32_1 : i32, i32, i32, i32
  }
  func.func @transform_1(%arg0: i32, %arg1: i32) -> (i32, i32) {
    %c0_i32 = arith.constant 0 : i32
    %c0_i32_0 = arith.constant 0 : i32
    %c0_i32_1 = arith.constant 0 : i32
    return %c0_i32, %c0_i32_0 : i32, i32
  }
  func.func @transform_2(%arg0: i32, %arg1: i32) -> (i32, i32) {
    %c0_i32 = arith.constant 0 : i32
    %c0_i32_0 = arith.constant 0 : i32
    %c0_i32_1 = arith.constant 0 : i32
    return %c0_i32, %c0_i32_0 : i32, i32
  }
  func.func @transform_3(%arg0: i32, %arg1: i32) -> (i32, i32) {
    %c0_i32 = arith.constant 0 : i32
    %c0_i32_0 = arith.constant 0 : i32
    %c0_i32_1 = arith.constant 0 : i32
    return %c0_i32, %c0_i32_0 : i32, i32
  }
  func.func @transform_4(%arg0: i32, %arg1: i32) -> (i32, i32) {
    %c0_i32 = arith.constant 0 : i32
    %c0_i32_0 = arith.constant 0 : i32
    %c0_i32_1 = arith.constant 0 : i32
    return %c0_i32, %c0_i32_0 : i32, i32
  }
  func.func @transform_5(%arg0: i32, %arg1: i32) -> (i32, i32) {
    %c0_i32 = arith.constant 0 : i32
    %c0_i32_0 = arith.constant 0 : i32
    %c0_i32_1 = arith.constant 0 : i32
    return %c0_i32, %c0_i32_0 : i32, i32
  }
  func.func @transform_6(%arg0: i32, %arg1: i32) -> (i32, i32, i32) {
    %c0_i32 = arith.constant 0 : i32
    %c0_i32_0 = arith.constant 0 : i32
    %c0_i32_1 = arith.constant 0 : i32
    %c0_i32_2 = arith.constant 0 : i32
    return %c0_i32, %c0_i32_0, %c0_i32_1 : i32, i32, i32
  }
  func.func @transform_7(%arg0: i32, %arg1: i32) -> (i32, i32) {
    %c0_i32 = arith.constant 0 : i32
    %c0_i32_0 = arith.constant 0 : i32
    %c0_i32_1 = arith.constant 0 : i32
    return %c0_i32, %c0_i32_0 : i32, i32
  }
  func.func @transform_8(%arg0: i32, %arg1: i32) -> (i32, i32) {
    %c0_i32 = arith.constant 0 : i32
    %c0_i32_0 = arith.constant 0 : i32
    %c0_i32_1 = arith.constant 0 : i32
    return %c0_i32, %c0_i32_0 : i32, i32
  }
  func.func @transform_9(%arg0: i32, %arg1: i32) -> (i32, i32) {
    %c0_i32 = arith.constant 0 : i32
    %c0_i32_0 = arith.constant 0 : i32
    %c0_i32_1 = arith.constant 0 : i32
    return %c0_i32, %c0_i32_0 : i32, i32
  }
  func.func @transform_10(%arg0: i32, %arg1: i32) -> (i32, i32) {
    %c0_i32 = arith.constant 0 : i32
    %c0_i32_0 = arith.constant 0 : i32
    %c0_i32_1 = arith.constant 0 : i32
    return %c0_i32, %c0_i32_0 : i32, i32
  }
  func.func @transform_11(%arg0: i32, %arg1: i32) -> (i32, i32) {
    %c0_i32 = arith.constant 0 : i32
    %c0_i32_0 = arith.constant 0 : i32
    %c0_i32_1 = arith.constant 0 : i32
    return %c0_i32, %c0_i32_0 : i32, i32
  }
  func.func @transform_12(%arg0: i32, %arg1: i32) -> (i32, i32, i32, i32) {
    %c0_i32 = arith.constant 0 : i32
    %c0_i32_0 = arith.constant 0 : i32
    %c0_i32_1 = arith.constant 0 : i32
    return %arg0, %arg1, %c0_i32, %c0_i32_0 : i32, i32, i32, i32
  }
}

</mosaic_0001>

<llo_original>
// kernel: tpu_custom_call.1
$region0: #{tpu_custom_call.1}
  #allocation0 [shape = 'u32[]', space=smem, size = 0x4, offset = 0x4, fixed_abs, tag = 'smem constant byte address 0x4 - core index']
  #allocation1 [shape = 'u32[72,128]{1,0:T(1,128)}', space=vmem, size = 0x9000, scoped, tag = 'internal scratch']
  %s0 = inlined_call_operand.hbm [shape: bf16[2,18,16,128], index: 0, kind: input, shape index: {}]
  %s1 = inlined_call_operand.hbm [shape: f32[1,128], index: 1, kind: input, shape index: {}]
  %s2 = inlined_call_operand.vmem [shape: f32[1,128], index: 2, kind: input, shape index: {}]
  %s3 = inlined_call_operand.hbm [shape: bf16[128,128], index: 3, kind: input, shape index: {}]
  %s4 = inlined_call_operand.vmem [shape: f32[1,128], index: 4, kind: input, shape index: {}]
  %s5 = inlined_call_operand.vmem [shape: f32[1,128], index: 5, kind: input, shape index: {}]
  %s6 = inlined_call_operand.hbm [shape: bf16[3,384,128], index: 6, kind: input, shape index: {}]
  %s7 = inlined_call_operand.vmem [shape: f32[1,128], index: 7, kind: input, shape index: {}]
  %s8 = inlined_call_operand.vmem [shape: f32[1,128], index: 8, kind: input, shape index: {}]
  %s9 = inlined_call_operand.hbm [shape: bf16[128,128], index: 9, kind: input, shape index: {}]
  %s10 = inlined_call_operand.hbm [shape: bf16[128,128], index: 10, kind: input, shape index: {}]
  %s11 = inlined_call_operand.vmem [shape: f32[1,128], index: 11, kind: input, shape index: {}]
  %s12 = inlined_call_operand.hbm [shape: f32[2,16,16,128], index: 12, kind: output, shape index: {}]
  %s13 = sld [smem:[#allocation0]]
  $region105: #{tpu_custom_call.1} parent=0
    _
  %s15 = ssub.s32 1, %s13
  %s16 = scalar_select 0, %s15, %s13
  $region1: #{tpu_custom_call.1} parent=0
    #allocation2 [shape = 'u8[147456]{0}', space=vmem, size = 0x24000, scoped, tag = 'input window, operand 0']
    #allocation3 [shape = 's32[2]{0}', space=sflag, size = 0x8, scoped, tag = 'scoped memory for tpu_custom_call.1']
    #allocation4 [shape = 's32[2]{0}', space=sflag, size = 0x8, scoped, tag = 'scoped memory for tpu_custom_call.1']
    #allocation5 [shape = 'u8[512]{0}', space=vmem, size = 0x400, scoped, tag = 'input window, operand 1, single buffered']
    #allocation6 [shape = 's32[1]{0}', space=sflag, size = 0x4, scoped, tag = 'scoped memory for tpu_custom_call.1']
    #allocation7 [shape = 'u8[32768]{0}', space=vmem, size = 0x8000, scoped, tag = 'input window, operand 3, single buffered']
    #allocation8 [shape = 'u8[294912]{0}', space=vmem, size = 0x48000, scoped, tag = 'input window, operand 6, single buffered']
    #allocation9 [shape = 's32[1]{0}', space=sflag, size = 0x4, scoped, tag = 'scoped memory for tpu_custom_call.1']
    #allocation10 [shape = 'u8[32768]{0}', space=vmem, size = 0x8000, scoped, tag = 'input window, operand 9, single buffered']
    #allocation11 [shape = 'u8[32768]{0}', space=vmem, size = 0x8000, scoped, tag = 'input window, operand 10, single buffered']
    #allocation12 [shape = 's32[1]{0}', space=sflag, size = 0x4, scoped, tag = 'scoped memory for tpu_custom_call.1']
    #allocation13 [shape = 'u8[262144]{0}', space=vmem, size = 0x40000, scoped, tag = 'output window, operand 0']
    %17 = vsyncpa [#allocation3], 0
    %s18 = scalar_lea.sflag [#allocation3], 1
    %19 = vsyncpa %s18, 0
    %20 = vsyncpa [#allocation6], 0
    %21 = vsyncpa [#allocation9], 0
    %22 = vsyncpa [#allocation12], 0
    %23 = vsyncpa [#allocation4], 0
    %s24 = scalar_lea.sflag [#allocation4], 1
    %25 = vsyncpa %s24, 0
    loop: start=0, step=1, limit=4
    $region2: #{tpu_custom_call.1} parent=1 // loop_pre_header
      _
    $region3: #{tpu_custom_call.1} parent=1 // loop_header
      %s27 = sphi 0, %s31
      %p28 = scmp.ge.s32.totalorder %s27, 4
      %s34 = sphi 0, %s46
      %s35 = sphi 0, %s42
      %s36 = sphi 0, %s34
      %s37 = sphi 0, %s35
      %s38 = sphi 0, %s36
      %s39 = sphi 0, %s37
      %s49 = sphi 0, %s51
      %s52 = sphi 0, %s49
      %s53 = sphi 0, %s52
      %s69 = sphi 0, %s53
      %s73 = sphi 0, %s73
      %s75 = sphi 0, %s73
      %s76 = sphi 0, %s75
      %s90 = sphi 0, %s76
      %s94 = sphi 0, %s94
      %s96 = sphi 0, %s94
      %s97 = sphi 0, %s96
      %s111 = sphi 0, %s97
      %s115 = sphi 0, %s115
      %s117 = sphi 0, %s115
      %s118 = sphi 0, %s117
      %s132 = sphi 0, %s118
      %s136 = sphi 0, %s136
      %s138 = sphi 0, %s136
      %s139 = sphi 0, %s138
      %s153 = sphi 0, %s139
      %s157 = sphi 0, %s157
      %s159 = sphi 0, %s157
      %s160 = sphi 0, %s159
      %s174 = sphi 0, %s160
      %s178 = sphi 0, %s178
      %s180 = sphi 0, %s178
      %s181 = sphi 0, %s180
      %s195 = sphi 0, %s181
      %s199 = sphi 0, %s199
      %s201 = sphi 0, %s199
      %s202 = sphi 0, %s201
      %s216 = sphi 0, %s202
      %s220 = sphi 0, %s220
      %s222 = sphi 0, %s220
      %s223 = sphi 0, %s222
      %s237 = sphi 0, %s223
      %s241 = sphi 0, %s241
      %s243 = sphi 0, %s241
      %s244 = sphi 0, %s243
      %s258 = sphi 0, %s244
      %s262 = sphi 0, %s262
      %s264 = sphi 0, %s262
      %s265 = sphi 0, %s264
      %s279 = sphi 0, %s265
      %s283 = sphi 0, %s283
      %s285 = sphi 0, %s283
      %s286 = sphi 0, %s285
      %s300 = sphi 0, %s286
      %s308 = sphi 0, %s310
      %s311 = sphi 0, %s308
      %s312 = sphi 0, %s311
      %s328 = sphi 0, %s312
    $region4: #{tpu_custom_call.1} parent=1 // loop_header_branch
      %30 = sbr.rel (%p28) target = $region8
    $region5: #{tpu_custom_call.1} parent=1 // loop_body
      %s32 = ssub.s32 %s27, 1
      %s33 = ssub.s32 %s27, 2
      %s40 = sadd.s32 1, %s35
      %p41 = scmp.ge.s32.totalorder %s40, 1
      %s42 = scalar_select %p41, 0, %s40
      %s43 = sadd.s32 1, %s34
      %s44 = scalar_select %p41, %s43, %s34
      %p45 = scmp.ge.s32.totalorder %s44, 2
      %s46 = scalar_select %p45, 0, %s44
      %s47 = ssub.s32 %s34, %s46
      %p48 = scmp.eq.s32.totalorder %s47, 0
      %s50 = sadd.s32 %s49, 1
      %s51 = scalar_select %p48, %s49, %s50
      %p54 = pneg %p48
      %p55 = scmp.eq.s32.totalorder %s27, 1
      %p56 = por %p54, %p55
      %p57 = scmp.ne.s32.totalorder %s49, %s52
      %p58 = scmp.eq.s32.totalorder %s27, 0
      %p59 = por %p57, %p58
      %p60 = scmp.ne.s32.totalorder %s49, %s52
      %p61 = scmp.eq.s32.totalorder %s32, 1
      %p62 = por %p60, %p61
      %p63 = scmp.ne.s32.totalorder %s52, %s53
      %p64 = scmp.eq.s32.totalorder %s32, 0
      %p65 = por %p63, %p64
      %p66 = scmp.ne.s32.totalorder %s52, %s53
      %p67 = scmp.eq.s32.totalorder %s33, 1
      %p68 = por %p66, %p67
      %p70 = scmp.ne.s32.totalorder %s53, %s69
      %p71 = scmp.eq.s32.totalorder %s33, 0
      %p72 = por %p70, %p71
      %s74 = sadd.s32 %s73, 1
      %p77 = scmp.eq.s32.totalorder %s27, 1
      %p78 = scmp.ne.s32.totalorder %s73, %s75
      %p79 = scmp.eq.s32.totalorder %s27, 0
      %p80 = por %p78, %p79
      %p81 = scmp.ne.s32.totalorder %s73, %s75
      %p82 = scmp.eq.s32.totalorder %s32, 1
      %p83 = por %p81, %p82
      %p84 = scmp.ne.s32.totalorder %s75, %s76
      %p85 = scmp.eq.s32.totalorder %s32, 0
      %p86 = por %p84, %p85
      %p87 = scmp.ne.s32.totalorder %s75, %s76
      %p88 = scmp.eq.s32.totalorder %s33, 1
      %p89 = por %p87, %p88
      %p91 = scmp.ne.s32.totalorder %s76, %s90
      %p92 = scmp.eq.s32.totalorder %s33, 0
      %p93 = por %p91, %p92
      %s95 = sadd.s32 %s94, 1
      %p98 = scmp.eq.s32.totalorder %s27, 1
      %p99 = scmp.ne.s32.totalorder %s94, %s96
      %p100 = scmp.eq.s32.totalorder %s27, 0
      %p101 = por %p99, %p100
      %p102 = scmp.ne.s32.totalorder %s94, %s96
      %p103 = scmp.eq.s32.totalorder %s32, 1
      %p104 = por %p102, %p103
      %p105 = scmp.ne.s32.totalorder %s96, %s97
      %p106 = scmp.eq.s32.totalorder %s32, 0
      %p107 = por %p105, %p106
      %p108 = scmp.ne.s32.totalorder %s96, %s97
      %p109 = scmp.eq.s32.totalorder %s33, 1
      %p110 = por %p108, %p109
      %p112 = scmp.ne.s32.totalorder %s97, %s111
      %p113 = scmp.eq.s32.totalorder %s33, 0
      %p114 = por %p112, %p113
      %s116 = sadd.s32 %s115, 1
      %p119 = scmp.eq.s32.totalorder %s27, 1
      %p120 = scmp.ne.s32.totalorder %s115, %s117
      %p121 = scmp.eq.s32.totalorder %s27, 0
      %p122 = por %p120, %p121
      %p123 = scmp.ne.s32.totalorder %s115, %s117
      %p124 = scmp.eq.s32.totalorder %s32, 1
      %p125 = por %p123, %p124
      %p126 = scmp.ne.s32.totalorder %s117, %s118
      %p127 = scmp.eq.s32.totalorder %s32, 0
      %p128 = por %p126, %p127
      %p129 = scmp.ne.s32.totalorder %s117, %s118
      %p130 = scmp.eq.s32.totalorder %s33, 1
      %p131 = por %p129, %p130
      %p133 = scmp.ne.s32.totalorder %s118, %s132
      %p134 = scmp.eq.s32.totalorder %s33, 0
      %p135 = por %p133, %p134
      %s137 = sadd.s32 %s136, 1
      %p140 = scmp.eq.s32.totalorder %s27, 1
      %p141 = scmp.ne.s32.totalorder %s136, %s138
      %p142 = scmp.eq.s32.totalorder %s27, 0
      %p143 = por %p141, %p142
      %p144 = scmp.ne.s32.totalorder %s136, %s138
      %p145 = scmp.eq.s32.totalorder %s32, 1
      %p146 = por %p144, %p145
      %p147 = scmp.ne.s32.totalorder %s138, %s139
      %p148 = scmp.eq.s32.totalorder %s32, 0
      %p149 = por %p147, %p148
      %p150 = scmp.ne.s32.totalorder %s138, %s139
      %p151 = scmp.eq.s32.totalorder %s33, 1
      %p152 = por %p150, %p151
      %p154 = scmp.ne.s32.totalorder %s139, %s153
      %p155 = scmp.eq.s32.totalorder %s33, 0
      %p156 = por %p154, %p155
      %s158 = sadd.s32 %s157, 1
      %p161 = scmp.eq.s32.totalorder %s27, 1
      %p162 = scmp.ne.s32.totalorder %s157, %s159
      %p163 = scmp.eq.s32.totalorder %s27, 0
      %p164 = por %p162, %p163
      %p165 = scmp.ne.s32.totalorder %s157, %s159
      %p166 = scmp.eq.s32.totalorder %s32, 1
      %p167 = por %p165, %p166
      %p168 = scmp.ne.s32.totalorder %s159, %s160
      %p169 = scmp.eq.s32.totalorder %s32, 0
      %p170 = por %p168, %p169
      %p171 = scmp.ne.s32.totalorder %s159, %s160
      %p172 = scmp.eq.s32.totalorder %s33, 1
      %p173 = por %p171, %p172
      %p175 = scmp.ne.s32.totalorder %s160, %s174
      %p176 = scmp.eq.s32.totalorder %s33, 0
      %p177 = por %p175, %p176
      %s179 = sadd.s32 %s178, 1
      %p182 = scmp.eq.s32.totalorder %s27, 1
      %p183 = scmp.ne.s32.totalorder %s178, %s180
      %p184 = scmp.eq.s32.totalorder %s27, 0
      %p185 = por %p183, %p184
      %p186 = scmp.ne.s32.totalorder %s178, %s180
      %p187 = scmp.eq.s32.totalorder %s32, 1
      %p188 = por %p186, %p187
      %p189 = scmp.ne.s32.totalorder %s180, %s181
      %p190 = scmp.eq.s32.totalorder %s32, 0
      %p191 = por %p189, %p190
      %p192 = scmp.ne.s32.totalorder %s180, %s181
      %p193 = scmp.eq.s32.totalorder %s33, 1
      %p194 = por %p192, %p193
      %p196 = scmp.ne.s32.totalorder %s181, %s195
      %p197 = scmp.eq.s32.totalorder %s33, 0
      %p198 = por %p196, %p197
      %s200 = sadd.s32 %s199, 1
      %p203 = scmp.eq.s32.totalorder %s27, 1
      %p204 = scmp.ne.s32.totalorder %s199, %s201
      %p205 = scmp.eq.s32.totalorder %s27, 0
      %p206 = por %p204, %p205
      %p207 = scmp.ne.s32.totalorder %s199, %s201
      %p208 = scmp.eq.s32.totalorder %s32, 1
      %p209 = por %p207, %p208
      %p210 = scmp.ne.s32.totalorder %s201, %s202
      %p211 = scmp.eq.s32.totalorder %s32, 0
      %p212 = por %p210, %p211
      %p213 = scmp.ne.s32.totalorder %s201, %s202
      %p214 = scmp.eq.s32.totalorder %s33, 1
      %p215 = por %p213, %p214
      %p217 = scmp.ne.s32.totalorder %s202, %s216
      %p218 = scmp.eq.s32.totalorder %s33, 0
      %p219 = por %p217, %p218
      %s221 = sadd.s32 %s220, 1
      %p224 = scmp.eq.s32.totalorder %s27, 1
      %p225 = scmp.ne.s32.totalorder %s220, %s222
      %p226 = scmp.eq.s32.totalorder %s27, 0
      %p227 = por %p225, %p226
      %p228 = scmp.ne.s32.totalorder %s220, %s222
      %p229 = scmp.eq.s32.totalorder %s32, 1
      %p230 = por %p228, %p229
      %p231 = scmp.ne.s32.totalorder %s222, %s223
      %p232 = scmp.eq.s32.totalorder %s32, 0
      %p233 = por %p231, %p232
      %p234 = scmp.ne.s32.totalorder %s222, %s223
      %p235 = scmp.eq.s32.totalorder %s33, 1
      %p236 = por %p234, %p235
      %p238 = scmp.ne.s32.totalorder %s223, %s237
      %p239 = scmp.eq.s32.totalorder %s33, 0
      %p240 = por %p238, %p239
      %s242 = sadd.s32 %s241, 1
      %p245 = scmp.eq.s32.totalorder %s27, 1
      %p246 = scmp.ne.s32.totalorder %s241, %s243
      %p247 = scmp.eq.s32.totalorder %s27, 0
      %p248 = por %p246, %p247
      %p249 = scmp.ne.s32.totalorder %s241, %s243
      %p250 = scmp.eq.s32.totalorder %s32, 1
      %p251 = por %p249, %p250
      %p252 = scmp.ne.s32.totalorder %s243, %s244
      %p253 = scmp.eq.s32.totalorder %s32, 0
      %p254 = por %p252, %p253
      %p255 = scmp.ne.s32.totalorder %s243, %s244
      %p256 = scmp.eq.s32.totalorder %s33, 1
      %p257 = por %p255, %p256
      %p259 = scmp.ne.s32.totalorder %s244, %s258
      %p260 = scmp.eq.s32.totalorder %s33, 0
      %p261 = por %p259, %p260
      %s263 = sadd.s32 %s262, 1
      %p266 = scmp.eq.s32.totalorder %s27, 1
      %p267 = scmp.ne.s32.totalorder %s262, %s264
      %p268 = scmp.eq.s32.totalorder %s27, 0
      %p269 = por %p267, %p268
      %p270 = scmp.ne.s32.totalorder %s262, %s264
      %p271 = scmp.eq.s32.totalorder %s32, 1
      %p272 = por %p270, %p271
      %p273 = scmp.ne.s32.totalorder %s264, %s265
      %p274 = scmp.eq.s32.totalorder %s32, 0
      %p275 = por %p273, %p274
      %p276 = scmp.ne.s32.totalorder %s264, %s265
      %p277 = scmp.eq.s32.totalorder %s33, 1
      %p278 = por %p276, %p277
      %p280 = scmp.ne.s32.totalorder %s265, %s279
      %p281 = scmp.eq.s32.totalorder %s33, 0
      %p282 = por %p280, %p281
      %s284 = sadd.s32 %s283, 1
      %p287 = scmp.eq.s32.totalorder %s27, 1
      %p288 = scmp.ne.s32.totalorder %s283, %s285
      %p289 = scmp.eq.s32.totalorder %s27, 0
      %p290 = por %p288, %p289
      %p291 = scmp.ne.s32.totalorder %s283, %s285
      %p292 = scmp.eq.s32.totalorder %s32, 1
      %p293 = por %p291, %p292
      %p294 = scmp.ne.s32.totalorder %s285, %s286
      %p295 = scmp.eq.s32.totalorder %s32, 0
      %p296 = por %p294, %p295
      %p297 = scmp.ne.s32.totalorder %s285, %s286
      %p298 = scmp.eq.s32.totalorder %s33, 1
      %p299 = por %p297, %p298
      %p301 = scmp.ne.s32.totalorder %s286, %s300
      %p302 = scmp.eq.s32.totalorder %s33, 0
      %p303 = por %p301, %p302
      %s304 = ssub.s32 %s34, %s46
      %s305 = ssub.s32 %s35, %s42
      %s306 = sor.u32 %s304, %s305
      %p307 = scmp.eq.s32.totalorder %s306, 0
      %s309 = sadd.s32 %s308, 1
      %s310 = scalar_select %p307, %s308, %s309
      %p313 = pneg %p307
      %p314 = scmp.eq.s32.totalorder %s27, 1
      %p315 = por %p313, %p314
      %p316 = scmp.ne.s32.totalorder %s308, %s311
      %p317 = scmp.eq.s32.totalorder %s27, 0
      %p318 = por %p316, %p317
      %p319 = scmp.ne.s32.totalorder %s308, %s311
      %p320 = scmp.eq.s32.totalorder %s32, 1
      %p321 = por %p319, %p320
      %p322 = scmp.ne.s32.totalorder %s311, %s312
      %p323 = scmp.eq.s32.totalorder %s32, 0
      %p324 = por %p322, %p323
      %p325 = scmp.ne.s32.totalorder %s311, %s312
      %p326 = scmp.eq.s32.totalorder %s33, 1
      %p327 = por %p325, %p326
      %p329 = scmp.ne.s32.totalorder %s312, %s328
      %p330 = scmp.eq.s32.totalorder %s33, 0
      %p331 = por %p329, %p330
      %p332 = scmp.le.s32.totalorder 1, %s27
      %p333 = scmp.lt.s32.totalorder %s27, 3
      %p334 = pnand %p332, %p333
      %p335 = pneg %p334
      // Predicated region
      $region9: #{tpu_custom_call.1} parent=5 // pred_check
        _
      $region10: #{tpu_custom_call.1} parent=5 // pred_check_branch
        %337 = sbr.rel (%p334) target = $region12
      $region11: #{tpu_custom_call.1} parent=5 // pred_region
        %s338 = ssub.s32 %s27, 1
        // Predicated region
        $region13: #{tpu_custom_call.1} parent=11 // pred_check
          %p339 = pneg %p86
        $region14: #{tpu_custom_call.1} parent=11 // pred_check_branch
          %341 = sbr.rel (%p339) target = $region16
        $region15: #{tpu_custom_call.1} parent=11 // pred_region
          %343 = vsyncadd [#allocation6], 0
          %s345 = sshll.u32 %s1, 4
          %s346 = int_to_ptr.hbm [resolvable:$true] %s345
          %s347 = sshll.u32 [#allocation5], 4
          %s348 = int_to_ptr.vmem [resolvable:$true] %s347
          %350 = dma.hbm_to_vmem [thread:$0]  %s346, 16, %s348, [#allocation6]
        $region16: #{tpu_custom_call.1} parent=11 // pred_fallthru
          _
        // Predicated region
        $region17: #{tpu_custom_call.1} parent=11 // pred_check
          %p351 = pneg %p107
        $region18: #{tpu_custom_call.1} parent=11 // pred_check_branch
          %353 = sbr.rel (%p351) target = $region20
        $region19: #{tpu_custom_call.1} parent=11 // pred_region
          _
        $region20: #{tpu_custom_call.1} parent=11 // pred_fallthru
          _
        // Predicated region
        $region21: #{tpu_custom_call.1} parent=11 // pred_check
          %p354 = pneg %p128
        $region22: #{tpu_custom_call.1} parent=11 // pred_check_branch
          %356 = sbr.rel (%p354) target = $region24
        $region23: #{tpu_custom_call.1} parent=11 // pred_region
          %358 = vsyncadd [#allocation6], 0
          %s359 = sshll.u32 %s3, 4
          %s360 = int_to_ptr.hbm [resolvable:$true] %s359
          %s361 = sshll.u32 [#allocation7], 4
          %s362 = int_to_ptr.vmem [resolvable:$true] %s361
          %367 = dma.hbm_to_vmem [thread:$0]  %s360, 1024, %s362, [#allocation6], 64, 64, 4
        $region24: #{tpu_custom_call.1} parent=11 // pred_fallthru
          _
        // Predicated region
        $region25: #{tpu_custom_call.1} parent=11 // pred_check
          %p368 = pneg %p149
        $region26: #{tpu_custom_call.1} parent=11 // pred_check_branch
          %370 = sbr.rel (%p368) target = $region28
        $region27: #{tpu_custom_call.1} parent=11 // pred_region
          _
        $region28: #{tpu_custom_call.1} parent=11 // pred_fallthru
          _
        // Predicated region
        $region29: #{tpu_custom_call.1} parent=11 // pred_check
          %p371 = pneg %p170
        $region30: #{tpu_custom_call.1} parent=11 // pred_check_branch
          %373 = sbr.rel (%p371) target = $region32
        $region31: #{tpu_custom_call.1} parent=11 // pred_region
          _
        $region32: #{tpu_custom_call.1} parent=11 // pred_fallthru
          _
        // Predicated region
        $region33: #{tpu_custom_call.1} parent=11 // pred_check
          %p374 = pneg %p191
        $region34: #{tpu_custom_call.1} parent=11 // pred_check_branch
          %376 = sbr.rel (%p374) target = $region36
        $region35: #{tpu_custom_call.1} parent=11 // pred_region
          %378 = vsyncadd [#allocation9], 0
          %s379 = sshll.u32 %s6, 4
          %s380 = int_to_ptr.hbm [resolvable:$true] %s379
          %s381 = sshll.u32 [#allocation8], 4
          %s382 = int_to_ptr.vmem [resolvable:$true] %s381
          %387 = dma.hbm_to_vmem [thread:$0]  %s380, 9216, %s382, [#allocation9], 64, 64, 4
        $region36: #{tpu_custom_call.1} parent=11 // pred_fallthru
          _
        // Predicated region
        $region37: #{tpu_custom_call.1} parent=11 // pred_check
          %p388 = pneg %p212
        $region38: #{tpu_custom_call.1} parent=11 // pred_check_branch
          %390 = sbr.rel (%p388) target = $region40
        $region39: #{tpu_custom_call.1} parent=11 // pred_region
          _
        $region40: #{tpu_custom_call.1} parent=11 // pred_fallthru
          _
        // Predicated region
        $region41: #{tpu_custom_call.1} parent=11 // pred_check
          %p391 = pneg %p233
        $region42: #{tpu_custom_call.1} parent=11 // pred_check_branch
          %393 = sbr.rel (%p391) target = $region44
        $region43: #{tpu_custom_call.1} parent=11 // pred_region
          _
        $region44: #{tpu_custom_call.1} parent=11 // pred_fallthru
          _
        // Predicated region
        $region45: #{tpu_custom_call.1} parent=11 // pred_check
          %p394 = pneg %p254
        $region46: #{tpu_custom_call.1} parent=11 // pred_check_branch
          %396 = sbr.rel (%p394) target = $region48
        $region47: #{tpu_custom_call.1} parent=11 // pred_region
          %398 = vsyncadd [#allocation9], 0
          %s399 = sshll.u32 %s9, 4
          %s400 = int_to_ptr.hbm [resolvable:$true] %s399
          %s401 = sshll.u32 [#allocation10], 4
          %s402 = int_to_ptr.vmem [resolvable:$true] %s401
          %407 = dma.hbm_to_vmem [thread:$0]  %s400, 1024, %s402, [#allocation9], 64, 64, 4
        $region48: #{tpu_custom_call.1} parent=11 // pred_fallthru
          _
        // Predicated region
        $region49: #{tpu_custom_call.1} parent=11 // pred_check
          %p408 = pneg %p275
        $region50: #{tpu_custom_call.1} parent=11 // pred_check_branch
          %410 = sbr.rel (%p408) target = $region52
        $region51: #{tpu_custom_call.1} parent=11 // pred_region
          %412 = vsyncadd [#allocation12], 0
          %s413 = sshll.u32 %s10, 4
          %s414 = int_to_ptr.hbm [resolvable:$true] %s413
          %s415 = sshll.u32 [#allocation11], 4
          %s416 = int_to_ptr.vmem [resolvable:$true] %s415
          %421 = dma.hbm_to_vmem [thread:$0]  %s414, 1024, %s416, [#allocation12], 64, 64, 4
        $region52: #{tpu_custom_call.1} parent=11 // pred_fallthru
          _
        // Predicated region
        $region53: #{tpu_custom_call.1} parent=11 // pred_check
          %p422 = pneg %p296
        $region54: #{tpu_custom_call.1} parent=11 // pred_check_branch
          %424 = sbr.rel (%p422) target = $region56
        $region55: #{tpu_custom_call.1} parent=11 // pred_region
          _
        $region56: #{tpu_custom_call.1} parent=11 // pred_fallthru
          _
      $region12: #{tpu_custom_call.1} parent=5 // pred_fallthru
        _
      %p425 = scmp.lt.s32.totalorder %s27, 2
      // Predicated region
      $region57: #{tpu_custom_call.1} parent=5 // pred_check
        %p426 = pneg %p425
      $region58: #{tpu_custom_call.1} parent=5 // pred_check_branch
        %428 = sbr.rel (%p426) target = $region60
      $region59: #{tpu_custom_call.1} parent=5 // pred_region
        // Predicated region
        $region61: #{tpu_custom_call.1} parent=59 // pred_check
          %p429 = pneg %p59
        $region62: #{tpu_custom_call.1} parent=59 // pred_check_branch
          %431 = sbr.rel (%p429) target = $region64
        $region63: #{tpu_custom_call.1} parent=59 // pred_region
          %s432 = sand.u32 %s49, 1
          %s433 = scalar_lea.sflag [#allocation3], %s432
          %s434 = sand.u32 %s49, 1
          %s435 = smul.addr %s434, 144
          %s436 = scalar_lea.vmem [#allocation2], %s435
          %438 = vsyncadd %s433, 0
          %s439 = smul.addr %s34, 36
          %s440 = smul.addr %s439, 4
          %s441 = scalar_lea.hbm %s0, %s440
          %s442 = sshll.u32 %s441, 4
          %s443 = int_to_ptr.hbm [resolvable:$true] %s442
          %s444 = sshll.u32 %s436, 4
          %s445 = int_to_ptr.vmem [resolvable:$true] %s444
          %450 = dma.hbm_to_vmem [thread:$0]  %s443, 2304, %s445, %s433, 64, 64, 4
        $region64: #{tpu_custom_call.1} parent=59 // pred_fallthru
          _
      $region60: #{tpu_custom_call.1} parent=5 // pred_fallthru
        _
      %p451 = scmp.le.s32.totalorder 1, %s27
      %p452 = scmp.lt.s32.totalorder %s27, 3
      %p453 = pnand %p451, %p452
      %p454 = pneg %p453
      // Predicated region
      $region65: #{tpu_custom_call.1} parent=5 // pred_check
        _
      $region66: #{tpu_custom_call.1} parent=5 // pred_check_branch
        %456 = sbr.rel (%p453) target = $region68
      $region67: #{tpu_custom_call.1} parent=5 // pred_region
        %s457 = ssub.s32 %s27, 1
        %s458 = sand.u32 %s52, 1
        %s459 = scalar_lea.sflag [#allocation3], %s458
        %s460 = sand.u32 %s52, 1
        %s461 = smul.addr %s460, 144
        %s462 = scalar_lea.vmem [#allocation2], %s461
        // Predicated region
        $region69: #{tpu_custom_call.1} parent=67 // pred_check
          %p463 = pneg %p65
        $region70: #{tpu_custom_call.1} parent=67 // pred_check_branch
          %465 = sbr.rel (%p463) target = $region72
        $region71: #{tpu_custom_call.1} parent=67 // pred_region
          %467 = dma.done %s459, 2304
        $region72: #{tpu_custom_call.1} parent=67 // pred_fallthru
          _
        // Predicated region
        $region73: #{tpu_custom_call.1} parent=67 // pred_check
          %p468 = pneg %p86
        $region74: #{tpu_custom_call.1} parent=67 // pred_check_branch
          %470 = sbr.rel (%p468) target = $region76
        $region75: #{tpu_custom_call.1} parent=67 // pred_region
          %472 = dma.done [#allocation6], 16
        $region76: #{tpu_custom_call.1} parent=67 // pred_fallthru
          _
        // Predicated region
        $region77: #{tpu_custom_call.1} parent=67 // pred_check
          %p473 = pneg %p128
        $region78: #{tpu_custom_call.1} parent=67 // pred_check_branch
          %475 = sbr.rel (%p473) target = $region80
        $region79: #{tpu_custom_call.1} parent=67 // pred_region
          %477 = dma.done [#allocation6], 1024
        $region80: #{tpu_custom_call.1} parent=67 // pred_fallthru
          _
        // Predicated region
        $region81: #{tpu_custom_call.1} parent=67 // pred_check
          %p478 = pneg %p191
        $region82: #{tpu_custom_call.1} parent=67 // pred_check_branch
          %480 = sbr.rel (%p478) target = $region84
        $region83: #{tpu_custom_call.1} parent=67 // pred_region
          %482 = dma.done [#allocation9], 9216
        $region84: #{tpu_custom_call.1} parent=67 // pred_fallthru
          _
        // Predicated region
        $region85: #{tpu_custom_call.1} parent=67 // pred_check
          %p483 = pneg %p254
        $region86: #{tpu_custom_call.1} parent=67 // pred_check_branch
          %485 = sbr.rel (%p483) target = $region88
        $region87: #{tpu_custom_call.1} parent=67 // pred_region
          %487 = dma.done [#allocation9], 1024
        $region88: #{tpu_custom_call.1} parent=67 // pred_fallthru
          _
        // Predicated region
        $region89: #{tpu_custom_call.1} parent=67 // pred_check
          %p488 = pneg %p275
        $region90: #{tpu_custom_call.1} parent=67 // pred_check_branch
          %490 = sbr.rel (%p488) target = $region92
        $region91: #{tpu_custom_call.1} parent=67 // pred_region
          %492 = dma.done [#allocation12], 1024
        $region92: #{tpu_custom_call.1} parent=67 // pred_fallthru
          _
        %s493 = sand.u32 %s52, 1
        %s494 = scalar_lea.sflag [#allocation3], %s493
        %s495 = sand.u32 %s52, 1
        %s496 = smul.addr %s495, 144
        %s497 = scalar_lea.vmem [#allocation2], %s496
        %p498 = pneg %p65
        %p499 = pneg %p62
        %p500 = pneg %p86
        %p501 = pneg %p83
        %p502 = pneg %p107
        %p503 = pneg %p104
        %p504 = pneg %p128
        %p505 = pneg %p125
        %p506 = pneg %p149
        %p507 = pneg %p146
        %p508 = pneg %p170
        %p509 = pneg %p167
        %p510 = pneg %p191
        %p511 = pneg %p188
        %p512 = pneg %p212
        %p513 = pneg %p209
        %p514 = pneg %p233
        %p515 = pneg %p230
        %p516 = pneg %p254
        %p517 = pneg %p251
        %p518 = pneg %p275
        %p519 = pneg %p272
        %p520 = pneg %p296
        %p521 = pneg %p293
        %p522 = pneg %p324
        %p523 = pneg %p321
        %s524 = sand.u32 %s311, 1
        %s525 = scalar_lea.sflag [#allocation4], %s524
        %s526 = sand.u32 %s311, 1
        %s527 = smul.addr %s526, 256
        %s528 = scalar_lea.vmem [#allocation13], %s527
        %s529 = smul.u32 16, %s37
        %s530 = smul.u32 %s37, 16
        %s531 = smul.u32 %s530, 2
        %s532 = smul.addr %s531, 4
        %s533 = scalar_lea.vmem %s462, %s532 [#allocation2]
        %v534 = vld [vmem:[%s533] sm:$0xf]
        %v535 = vld [vmem:[%s533 + $0x4] sm:$0xf]
        %v536 = vld [vmem:[%s533 + $0x8] sm:$0xf]
        %v537 = vld [vmem:[%s533 + $0xc] sm:$0xf]
        %v538 = vld [vmem:[%s533 + $0x10] sm:$0xf]
        %v539 = vld [vmem:[%s533 + $0x14] sm:$0xf]
        %v540 = vld [vmem:[%s533 + $0x18] sm:$0xf]
        %v541 = vld [vmem:[%s533 + $0x1c] sm:$0xf]
        %v542 = vld [vmem:[%s533 + $0x20] sm:$0xf]
        %v543 = vld [vmem:[%s533 + $0x24] sm:$0xf]
        %v544 = vld [vmem:[%s533 + $0x28] sm:$0xf]
        %v545 = vld [vmem:[%s533 + $0x2c] sm:$0xf]
        %v546 = vld [vmem:[%s533 + $0x30] sm:$0xf]
        %v547 = vld [vmem:[%s533 + $0x34] sm:$0xf]
        %v548 = vld [vmem:[%s533 + $0x38] sm:$0xf]
        %v549 = vld [vmem:[%s533 + $0x3c] sm:$0xf]
        %v550 = vld [vmem:[%s533 + $0x40] sm:$0xf]
        %v551 = vld [vmem:[%s533 + $0x44] sm:$0xf]
        %v552 = vld [vmem:[%s533 + $0x48] sm:$0xf]
        %v553 = vld [vmem:[%s533 + $0x4c] sm:$0xf]
        %v554 = vld [vmem:[%s533 + $0x50] sm:$0xf]
        %v555 = vld [vmem:[%s533 + $0x54] sm:$0xf]
        %v556 = vld [vmem:[%s533 + $0x58] sm:$0xf]
        %v557 = vld [vmem:[%s533 + $0x5c] sm:$0xf]
        %v558 = vld [vmem:[%s533 + $0x60] sm:$0xf]
        %v559 = vld [vmem:[%s533 + $0x64] sm:$0xf]
        %v560 = vld [vmem:[%s533 + $0x68] sm:$0xf]
        %v561 = vld [vmem:[%s533 + $0x6c] sm:$0xf]
        %v562 = vld [vmem:[%s533 + $0x70] sm:$0xf]
        %v563 = vld [vmem:[%s533 + $0x74] sm:$0xf]
        %v564 = vld [vmem:[%s533 + $0x78] sm:$0xf]
        %v565 = vld [vmem:[%s533 + $0x7c] sm:$0xf]
        %v566 = vld [vmem:[%s533 + $0x80] sm:$0xf]
        %v567 = vld [vmem:[%s533 + $0x84] sm:$0xf]
        %v568 = vld [vmem:[%s533 + $0x88] sm:$0xf]
        %v569 = vld [vmem:[%s533 + $0x8c] sm:$0xf]
        %v570 = vunpack.c.l.bf16 %v534
        %v571 = vunpack.c.l.bf16 %v535
        %v572 = vunpack.c.l.bf16 %v536
        %v573 = vunpack.c.l.bf16 %v537
        %v574 = vunpack.c.l.bf16 %v538
        %v575 = vunpack.c.l.bf16 %v539
        %v576 = vunpack.c.l.bf16 %v540
        %v577 = vunpack.c.l.bf16 %v541
        %v578 = vunpack.c.l.bf16 %v542
        %v579 = vunpack.c.l.bf16 %v543
        %v580 = vunpack.c.l.bf16 %v544
        %v581 = vunpack.c.l.bf16 %v545
        %v582 = vunpack.c.l.bf16 %v546
        %v583 = vunpack.c.l.bf16 %v547
        %v584 = vunpack.c.l.bf16 %v548
        %v585 = vunpack.c.l.bf16 %v549
        %v586 = vunpack.c.l.bf16 %v550
        %v587 = vunpack.c.l.bf16 %v551
        %v588 = vunpack.c.l.bf16 %v552
        %v589 = vunpack.c.l.bf16 %v553
        %v590 = vunpack.c.l.bf16 %v554
        %v591 = vunpack.c.l.bf16 %v555
        %v592 = vunpack.c.l.bf16 %v556
        %v593 = vunpack.c.l.bf16 %v557
        %v594 = vunpack.c.l.bf16 %v558
        %v595 = vunpack.c.l.bf16 %v559
        %v596 = vunpack.c.l.bf16 %v560
        %v597 = vunpack.c.l.bf16 %v561
        %v598 = vunpack.c.l.bf16 %v562
        %v599 = vunpack.c.l.bf16 %v563
        %v600 = vunpack.c.l.bf16 %v564
        %v601 = vunpack.c.l.bf16 %v565
        %v602 = vunpack.c.l.bf16 %v566
        %v603 = vunpack.c.l.bf16 %v567
        %v604 = vunpack.c.l.bf16 %v568
        %v605 = vunpack.c.l.bf16 %v569
        %v606 = vld [vmem:[#allocation5] sm:$0x1]
        %v608 = vperm.slane %v606, 0
        %v610 = vmul.f32 %v570, %v608
        %v611 = vmul.f32 %v571, %v608
        %v612 = vmul.f32 %v572, %v608
        %v613 = vmul.f32 %v573, %v608
        %v614 = vmul.f32 %v574, %v608
        %v615 = vmul.f32 %v575, %v608
        %v616 = vmul.f32 %v576, %v608
        %v617 = vmul.f32 %v577, %v608
        %v618 = vmul.f32 %v578, %v608
        %v619 = vmul.f32 %v579, %v608
        %v620 = vmul.f32 %v580, %v608
        %v621 = vmul.f32 %v581, %v608
        %v622 = vmul.f32 %v582, %v608
        %v623 = vmul.f32 %v583, %v608
        %v624 = vmul.f32 %v584, %v608
        %v625 = vmul.f32 %v585, %v608
        %v626 = vmul.f32 %v586, %v608
        %v627 = vmul.f32 %v587, %v608
        %v628 = vmul.f32 %v588, %v608
        %v629 = vmul.f32 %v589, %v608
        %v630 = vmul.f32 %v590, %v608
        %v631 = vmul.f32 %v591, %v608
        %v632 = vmul.f32 %v592, %v608
        %v633 = vmul.f32 %v593, %v608
        %v634 = vmul.f32 %v594, %v608
        %v635 = vmul.f32 %v595, %v608
        %v636 = vmul.f32 %v596, %v608
        %v637 = vmul.f32 %v597, %v608
        %v638 = vmul.f32 %v598, %v608
        %v639 = vmul.f32 %v599, %v608
        %v640 = vmul.f32 %v600, %v608
        %v641 = vmul.f32 %v601, %v608
        %v642 = vmul.f32 %v602, %v608
        %v643 = vmul.f32 %v603, %v608
        %v644 = vmul.f32 %v604, %v608
        %v645 = vmul.f32 %v605, %v608
        %v646 = vld [vmem:[%s2] sm:$0x1]
        %v648 = vperm.slane %v646, 0
        %v650 = vadd.f32 %v610, %v648
        %v651 = vadd.f32 %v611, %v648
        %v652 = vadd.f32 %v612, %v648
        %v653 = vadd.f32 %v613, %v648
        %v654 = vadd.f32 %v614, %v648
        %v655 = vadd.f32 %v615, %v648
        %v656 = vadd.f32 %v616, %v648
        %v657 = vadd.f32 %v617, %v648
        %v658 = vadd.f32 %v618, %v648
        %v659 = vadd.f32 %v619, %v648
        %v660 = vadd.f32 %v620, %v648
        %v661 = vadd.f32 %v621, %v648
        %v662 = vadd.f32 %v622, %v648
        %v663 = vadd.f32 %v623, %v648
        %v664 = vadd.f32 %v624, %v648
        %v665 = vadd.f32 %v625, %v648
        %v666 = vadd.f32 %v626, %v648
        %v667 = vadd.f32 %v627, %v648
        %v668 = vadd.f32 %v628, %v648
        %v669 = vadd.f32 %v629, %v648
        %v670 = vadd.f32 %v630, %v648
        %v671 = vadd.f32 %v631, %v648
        %v672 = vadd.f32 %v632, %v648
        %v673 = vadd.f32 %v633, %v648
        %v674 = vadd.f32 %v634, %v648
        %v675 = vadd.f32 %v635, %v648
        %v676 = vadd.f32 %v636, %v648
        %v677 = vadd.f32 %v637, %v648
        %v678 = vadd.f32 %v638, %v648
        %v679 = vadd.f32 %v639, %v648
        %v680 = vadd.f32 %v640, %v648
        %v681 = vadd.f32 %v641, %v648
        %v682 = vadd.f32 %v642, %v648
        %v683 = vadd.f32 %v643, %v648
        %v684 = vadd.f32 %v644, %v648
        %v685 = vadd.f32 %v645, %v648
        %v686 = vmax.f32 %v650, 0.0
        %v687 = vmax.f32 %v651, 0.0
        %v688 = vmax.f32 %v652, 0.0
        %v689 = vmax.f32 %v653, 0.0
        %v690 = vmax.f32 %v654, 0.0
        %v691 = vmax.f32 %v655, 0.0
        %v692 = vmax.f32 %v656, 0.0
        %v693 = vmax.f32 %v657, 0.0
        %v694 = vmax.f32 %v658, 0.0
        %v695 = vmax.f32 %v659, 0.0
        %v696 = vmax.f32 %v660, 0.0
        %v697 = vmax.f32 %v661, 0.0
        %v698 = vmax.f32 %v662, 0.0
        %v699 = vmax.f32 %v663, 0.0
        %v700 = vmax.f32 %v664, 0.0
        %v701 = vmax.f32 %v665, 0.0
        %v702 = vmax.f32 %v666, 0.0
        %v703 = vmax.f32 %v667, 0.0
        %v704 = vmax.f32 %v668, 0.0
        %v705 = vmax.f32 %v669, 0.0
        %v706 = vmax.f32 %v670, 0.0
        %v707 = vmax.f32 %v671, 0.0
        %v708 = vmax.f32 %v672, 0.0
        %v709 = vmax.f32 %v673, 0.0
        %v710 = vmax.f32 %v674, 0.0
        %v711 = vmax.f32 %v675, 0.0
        %v712 = vmax.f32 %v676, 0.0
        %v713 = vmax.f32 %v677, 0.0
        %v714 = vmax.f32 %v678, 0.0
        %v715 = vmax.f32 %v679, 0.0
        %v716 = vmax.f32 %v680, 0.0
        %v717 = vmax.f32 %v681, 0.0
        %v718 = vmax.f32 %v682, 0.0
        %v719 = vmax.f32 %v683, 0.0
        %v720 = vmax.f32 %v684, 0.0
        %v721 = vmax.f32 %v685, 0.0
        %v722 = vpack.c.bf16 %v687, %v686
        %v723 = vpack.c.bf16 %v689, %v688
        %v724 = vpack.c.bf16 %v691, %v690
        %v725 = vpack.c.bf16 %v693, %v692
        %v726 = vpack.c.bf16 %v695, %v694
        %v727 = vpack.c.bf16 %v697, %v696
        %v728 = vpack.c.bf16 %v699, %v698
        %v729 = vpack.c.bf16 %v701, %v700
        %v730 = vpack.c.bf16 %v703, %v702
        %v731 = vpack.c.bf16 %v705, %v704
        %v732 = vpack.c.bf16 %v707, %v706
        %v733 = vpack.c.bf16 %v709, %v708
        %v734 = vpack.c.bf16 %v711, %v710
        %v735 = vpack.c.bf16 %v713, %v712
        %v736 = vpack.c.bf16 %v715, %v714
        %v737 = vpack.c.bf16 %v717, %v716
        %v738 = vpack.c.bf16 %v719, %v718
        %v739 = vpack.c.bf16 %v721, %v720
        %v740 = vld [vmem:[#allocation7] sm:$0xf]
        %v741 = vld [vmem:[#allocation7 + $0x4] sm:$0xf]
        %v742 = vld [vmem:[#allocation7 + $0x8] sm:$0xf]
        %v743 = vld [vmem:[#allocation7 + $0xc] sm:$0xf]
        %v744 = vld [vmem:[#allocation7 + $0x10] sm:$0xf]
        %v745 = vld [vmem:[#allocation7 + $0x14] sm:$0xf]
        %v746 = vld [vmem:[#allocation7 + $0x18] sm:$0xf]
        %v747 = vld [vmem:[#allocation7 + $0x1c] sm:$0xf]
        %v748 = vld [vmem:[#allocation7 + $0x20] sm:$0xf]
        %v749 = vld [vmem:[#allocation7 + $0x24] sm:$0xf]
        %v750 = vld [vmem:[#allocation7 + $0x28] sm:$0xf]
        %v751 = vld [vmem:[#allocation7 + $0x2c] sm:$0xf]
        %v752 = vld [vmem:[#allocation7 + $0x30] sm:$0xf]
        %v753 = vld [vmem:[#allocation7 + $0x34] sm:$0xf]
        %v754 = vld [vmem:[#allocation7 + $0x38] sm:$0xf]
        %v755 = vld [vmem:[#allocation7 + $0x3c] sm:$0xf]
        %v772 = vunpack.c.l.b16 %v740
        %v773 = vunpack.c.l.b16 %v741
        %v774 = vunpack.c.l.b16 %v742
        %v775 = vunpack.c.l.b16 %v743
        %v776 = vunpack.c.l.b16 %v744
        %v777 = vunpack.c.l.b16 %v745
        %v778 = vunpack.c.l.b16 %v746
        %v779 = vunpack.c.l.b16 %v747
        %v780 = vunpack.c.l.b16 %v748
        %v781 = vunpack.c.l.b16 %v749
        %v782 = vunpack.c.l.b16 %v750
        %v783 = vunpack.c.l.b16 %v751
        %v784 = vunpack.c.l.b16 %v752
        %v785 = vunpack.c.l.b16 %v753
        %v786 = vunpack.c.l.b16 %v754
        %v787 = vunpack.c.l.b16 %v755
        %v788 = vpack.c.b16 %v773, %v772
        %v789 = vpack.c.b16 %v775, %v774
        %v790 = vpack.c.b16 %v777, %v776
        %v791 = vpack.c.b16 %v779, %v778
        %v792 = vpack.c.b16 %v781, %v780
        %v793 = vpack.c.b16 %v783, %v782
        %v794 = vpack.c.b16 %v785, %v784
        %v795 = vpack.c.b16 %v787, %v786
        %804 = vmatpush.bf16.msra.mxu0 %v795
        %805 = vmatpush.bf16.msra.mxu0 %v794
        %806 = vmatpush.bf16.msra.mxu0 %v793
        %807 = vmatpush.bf16.msra.mxu0 %v792
        %808 = vmatpush.bf16.msra.mxu0 %v791
        %809 = vmatpush.bf16.msra.mxu0 %v790
        %810 = vmatpush.bf16.msra.mxu0 %v789
        %811 = vmatpush.bf16.msra.mxu0 %v788
        %812 = vmatmul.bf16.gmra.mxu0 %v722
        %v813 = vpop.f32.mrf.mxu0
        %v814 = vadd.f32 0.0, %v813
        %v815 = vpop.f32.mrf.mxu0
        %v816 = vadd.f32 0.0, %v815
        %817 = vmatmul.bf16.gmra.mxu0 %v723
        %v818 = vpop.f32.mrf.mxu0
        %v819 = vadd.f32 0.0, %v818
        %v820 = vpop.f32.mrf.mxu0
        %v821 = vadd.f32 0.0, %v820
        %822 = vmatmul.bf16.gmra.mxu0 %v724
        %v823 = vpop.f32.mrf.mxu0
        %v824 = vadd.f32 0.0, %v823
        %v825 = vpop.f32.mrf.mxu0
        %v826 = vadd.f32 0.0, %v825
        %827 = vmatmul.bf16.gmra.mxu0 %v725
        %v828 = vpop.f32.mrf.mxu0
        %v829 = vadd.f32 0.0, %v828
        %v830 = vpop.f32.mrf.mxu0
        %v831 = vadd.f32 0.0, %v830
        %832 = vmatmul.bf16.gmra.mxu0 %v726
        %v833 = vpop.f32.mrf.mxu0
        %v834 = vadd.f32 0.0, %v833
        %v835 = vpop.f32.mrf.mxu0
        %v836 = vadd.f32 0.0, %v835
        %837 = vmatmul.bf16.gmra.mxu0 %v727
        %v838 = vpop.f32.mrf.mxu0
        %v839 = vadd.f32 0.0, %v838
        %v840 = vpop.f32.mrf.mxu0
        %v841 = vadd.f32 0.0, %v840
        %842 = vmatmul.bf16.gmra.mxu0 %v728
        %v843 = vpop.f32.mrf.mxu0
        %v844 = vadd.f32 0.0, %v843
        %v845 = vpop.f32.mrf.mxu0
        %v846 = vadd.f32 0.0, %v845
        %847 = vmatmul.bf16.gmra.mxu0 %v729
        %v848 = vpop.f32.mrf.mxu0
        %v849 = vadd.f32 0.0, %v848
        %v850 = vpop.f32.mrf.mxu0
        %v851 = vadd.f32 0.0, %v850
        %852 = vmatmul.bf16.gmra.mxu0 %v730
        %v853 = vpop.f32.mrf.mxu0
        %v854 = vadd.f32 0.0, %v853
        %v855 = vpop.f32.mrf.mxu0
        %v856 = vadd.f32 0.0, %v855
        %857 = vmatmul.bf16.gmra.mxu0 %v731
        %v858 = vpop.f32.mrf.mxu0
        %v859 = vadd.f32 0.0, %v858
        %v860 = vpop.f32.mrf.mxu0
        %v861 = vadd.f32 0.0, %v860
        %862 = vmatmul.bf16.gmra.mxu0 %v732
        %v863 = vpop.f32.mrf.mxu0
        %v864 = vadd.f32 0.0, %v863
        %v865 = vpop.f32.mrf.mxu0
        %v866 = vadd.f32 0.0, %v865
        %867 = vmatmul.bf16.gmra.mxu0 %v733
        %v868 = vpop.f32.mrf.mxu0
        %v869 = vadd.f32 0.0, %v868
        %v870 = vpop.f32.mrf.mxu0
        %v871 = vadd.f32 0.0, %v870
        %872 = vmatmul.bf16.gmra.mxu0 %v734
        %v873 = vpop.f32.mrf.mxu0
        %v874 = vadd.f32 0.0, %v873
        %v875 = vpop.f32.mrf.mxu0
        %v876 = vadd.f32 0.0, %v875
        %877 = vmatmul.bf16.gmra.mxu0 %v735
        %v878 = vpop.f32.mrf.mxu0
        %v879 = vadd.f32 0.0, %v878
        %v880 = vpop.f32.mrf.mxu0
        %v881 = vadd.f32 0.0, %v880
        %882 = vmatmul.bf16.gmra.mxu0 %v736
        %v883 = vpop.f32.mrf.mxu0
        %v884 = vadd.f32 0.0, %v883
        %v885 = vpop.f32.mrf.mxu0
        %v886 = vadd.f32 0.0, %v885
        %887 = vmatmul.bf16.gmra.mxu0 %v737
        %v888 = vpop.f32.mrf.mxu0
        %v889 = vadd.f32 0.0, %v888
        %v890 = vpop.f32.mrf.mxu0
        %v891 = vadd.f32 0.0, %v890
        %892 = vmatmul.bf16.gmra.mxu0 %v738
        %v893 = vpop.f32.mrf.mxu0
        %v894 = vadd.f32 0.0, %v893
        %v895 = vpop.f32.mrf.mxu0
        %v896 = vadd.f32 0.0, %v895
        %897 = vmatmul.bf16.gmra.mxu0 %v739
        %v898 = vpop.f32.mrf.mxu0
        %v899 = vadd.f32 0.0, %v898
        %v900 = vpop.f32.mrf.mxu0
        %v901 = vadd.f32 0.0, %v900
        %902 = vdwg.mxu0
        %v903 = vld [vmem:[%s4] sm:$0x1]
        %v905 = vperm.slane %v903, 0
        %v907 = vmul.f32 %v814, %v905
        %v908 = vmul.f32 %v816, %v905
        %v909 = vmul.f32 %v819, %v905
        %v910 = vmul.f32 %v821, %v905
        %v911 = vmul.f32 %v824, %v905
        %v912 = vmul.f32 %v826, %v905
        %v913 = vmul.f32 %v829, %v905
        %v914 = vmul.f32 %v831, %v905
        %v915 = vmul.f32 %v834, %v905
        %v916 = vmul.f32 %v836, %v905
        %v917 = vmul.f32 %v839, %v905
        %v918 = vmul.f32 %v841, %v905
        %v919 = vmul.f32 %v844, %v905
        %v920 = vmul.f32 %v846, %v905
        %v921 = vmul.f32 %v849, %v905
        %v922 = vmul.f32 %v851, %v905
        %v923 = vmul.f32 %v854, %v905
        %v924 = vmul.f32 %v856, %v905
        %v925 = vmul.f32 %v859, %v905
        %v926 = vmul.f32 %v861, %v905
        %v927 = vmul.f32 %v864, %v905
        %v928 = vmul.f32 %v866, %v905
        %v929 = vmul.f32 %v869, %v905
        %v930 = vmul.f32 %v871, %v905
        %v931 = vmul.f32 %v874, %v905
        %v932 = vmul.f32 %v876, %v905
        %v933 = vmul.f32 %v879, %v905
        %v934 = vmul.f32 %v881, %v905
        %v935 = vmul.f32 %v884, %v905
        %v936 = vmul.f32 %v886, %v905
        %v937 = vmul.f32 %v889, %v905
        %v938 = vmul.f32 %v891, %v905
        %v939 = vmul.f32 %v894, %v905
        %v940 = vmul.f32 %v896, %v905
        %v941 = vmul.f32 %v899, %v905
        %v942 = vmul.f32 %v901, %v905
        %v943 = vld [vmem:[%s5] sm:$0x1]
        %v945 = vperm.slane %v943, 0
        %v947 = vadd.f32 %v907, %v945
        %v948 = vadd.f32 %v908, %v945
        %v949 = vadd.f32 %v909, %v945
        %v950 = vadd.f32 %v910, %v945
        %v951 = vadd.f32 %v911, %v945
        %v952 = vadd.f32 %v912, %v945
        %v953 = vadd.f32 %v913, %v945
        %v954 = vadd.f32 %v914, %v945
        %v955 = vadd.f32 %v915, %v945
        %v956 = vadd.f32 %v916, %v945
        %v957 = vadd.f32 %v917, %v945
        %v958 = vadd.f32 %v918, %v945
        %v959 = vadd.f32 %v919, %v945
        %v960 = vadd.f32 %v920, %v945
        %v961 = vadd.f32 %v921, %v945
        %v962 = vadd.f32 %v922, %v945
        %v963 = vadd.f32 %v923, %v945
        %v964 = vadd.f32 %v924, %v945
        %v965 = vadd.f32 %v925, %v945
        %v966 = vadd.f32 %v926, %v945
        %v967 = vadd.f32 %v927, %v945
        %v968 = vadd.f32 %v928, %v945
        %v969 = vadd.f32 %v929, %v945
        %v970 = vadd.f32 %v930, %v945
        %v971 = vadd.f32 %v931, %v945
        %v972 = vadd.f32 %v932, %v945
        %v973 = vadd.f32 %v933, %v945
        %v974 = vadd.f32 %v934, %v945
        %v975 = vadd.f32 %v935, %v945
        %v976 = vadd.f32 %v936, %v945
        %v977 = vadd.f32 %v937, %v945
        %v978 = vadd.f32 %v938, %v945
        %v979 = vadd.f32 %v939, %v945
        %v980 = vadd.f32 %v940, %v945
        %v981 = vadd.f32 %v941, %v945
        %v982 = vadd.f32 %v942, %v945
        %v983 = vmax.f32 %v947, 0.0
        %v984 = vmax.f32 %v948, 0.0
        %v985 = vmax.f32 %v949, 0.0
        %v986 = vmax.f32 %v950, 0.0
        %v987 = vmax.f32 %v951, 0.0
        %v988 = vmax.f32 %v952, 0.0
        %v989 = vmax.f32 %v953, 0.0
        %v990 = vmax.f32 %v954, 0.0
        %v991 = vmax.f32 %v955, 0.0
        %v992 = vmax.f32 %v956, 0.0
        %v993 = vmax.f32 %v957, 0.0
        %v994 = vmax.f32 %v958, 0.0
        %v995 = vmax.f32 %v959, 0.0
        %v996 = vmax.f32 %v960, 0.0
        %v997 = vmax.f32 %v961, 0.0
        %v998 = vmax.f32 %v962, 0.0
        %v999 = vmax.f32 %v963, 0.0
        %v1000 = vmax.f32 %v964, 0.0
        %v1001 = vmax.f32 %v965, 0.0
        %v1002 = vmax.f32 %v966, 0.0
        %v1003 = vmax.f32 %v967, 0.0
        %v1004 = vmax.f32 %v968, 0.0
        %v1005 = vmax.f32 %v969, 0.0
        %v1006 = vmax.f32 %v970, 0.0
        %v1007 = vmax.f32 %v971, 0.0
        %v1008 = vmax.f32 %v972, 0.0
        %v1009 = vmax.f32 %v973, 0.0
        %v1010 = vmax.f32 %v974, 0.0
        %v1011 = vmax.f32 %v975, 0.0
        %v1012 = vmax.f32 %v976, 0.0
        %v1013 = vmax.f32 %v977, 0.0
        %v1014 = vmax.f32 %v978, 0.0
        %v1015 = vmax.f32 %v979, 0.0
        %v1016 = vmax.f32 %v980, 0.0
        %v1017 = vmax.f32 %v981, 0.0
        %v1018 = vmax.f32 %v982, 0.0
        %v1019 = vlaneseq
        %v1020 = vshrl.u32 %v1019, 7
        %v1021 = vadd.s32 %v1020, 8
        %v1022 = vadd.s32 %v1020, 16
        %v1023 = vadd.s32 %v1020, 24
        %v1024 = vadd.s32 %v1020, 32
        %v1025 = vadd.s32 %v1020, 40
        %v1026 = vadd.s32 %v1020, 48
        %v1027 = vadd.s32 %v1020, 56
        %v1028 = vadd.s32 %v1020, 64
        %v1029 = vadd.s32 %v1020, 72
        %v1030 = vadd.s32 %v1020, 80
        %v1031 = vadd.s32 %v1020, 88
        %v1032 = vadd.s32 %v1020, 96
        %v1033 = vadd.s32 %v1020, 104
        %v1034 = vadd.s32 %v1020, 112
        %v1035 = vadd.s32 %v1020, 120
        %v1036 = vadd.s32 %v1020, 128
        %v1037 = vadd.s32 %v1020, 136
        %v1038 = vadd.s32 %v1020, 144
        %v1039 = vadd.s32 %v1020, 152
        %v1040 = vadd.s32 %v1020, 160
        %v1041 = vadd.s32 %v1020, 168
        %v1042 = vadd.s32 %v1020, 176
        %v1043 = vadd.s32 %v1020, 184
        %v1044 = vadd.s32 %v1020, 192
        %v1045 = vadd.s32 %v1020, 200
        %v1046 = vadd.s32 %v1020, 208
        %v1047 = vadd.s32 %v1020, 216
        %v1048 = vadd.s32 %v1020, 224
        %v1049 = vadd.s32 %v1020, 232
        %v1050 = vadd.s32 %v1020, 240
        %v1051 = vadd.s32 %v1020, 248
        %v1052 = vadd.s32 %v1020, 256
        %v1053 = vadd.s32 %v1020, 264
        %v1054 = vadd.s32 %v1020, 272
        %v1055 = vadd.s32 %v1020, 280
        %vm1056 = vcmp.lt.s32.totalorder %v1020, 0
        %v1057 = vsub.s32 0, %v1020
        %v1058 = vsel %vm1056, %v1057, %v1020
        %v1059 = vshrl.u32 %v1058, 4
        %v1060 = vand.u32 %v1058, 15
        %v1061 = vsub.s32 0, %v1060
        %v1062 = vsel %vm1056, %v1061, %v1060
        %vm1063 = vcmp.lt.s32.totalorder %v1021, 0
        %v1064 = vsub.s32 0, %v1021
        %v1065 = vsel %vm1063, %v1064, %v1021
        %v1066 = vshrl.u32 %v1065, 4
        %v1067 = vand.u32 %v1065, 15
        %v1068 = vsub.s32 0, %v1067
        %v1069 = vsel %vm1063, %v1068, %v1067
        %vm1070 = vcmp.lt.s32.totalorder %v1022, 0
        %v1071 = vsub.s32 0, %v1022
        %v1072 = vsel %vm1070, %v1071, %v1022
        %v1073 = vshrl.u32 %v1072, 4
        %v1074 = vand.u32 %v1072, 15
        %v1075 = vsub.s32 0, %v1074
        %v1076 = vsel %vm1070, %v1075, %v1074
        %vm1077 = vcmp.lt.s32.totalorder %v1023, 0
        %v1078 = vsub.s32 0, %v1023
        %v1079 = vsel %vm1077, %v1078, %v1023
        %v1080 = vshrl.u32 %v1079, 4
        %v1081 = vand.u32 %v1079, 15
        %v1082 = vsub.s32 0, %v1081
        %v1083 = vsel %vm1077, %v1082, %v1081
        %vm1084 = vcmp.lt.s32.totalorder %v1024, 0
        %v1085 = vsub.s32 0, %v1024
        %v1086 = vsel %vm1084, %v1085, %v1024
        %v1087 = vshrl.u32 %v1086, 4
        %v1088 = vand.u32 %v1086, 15
        %v1089 = vsub.s32 0, %v1088
        %v1090 = vsel %vm1084, %v1089, %v1088
        %vm1091 = vcmp.lt.s32.totalorder %v1025, 0
        %v1092 = vsub.s32 0, %v1025
        %v1093 = vsel %vm1091, %v1092, %v1025
        %v1094 = vshrl.u32 %v1093, 4
        %v1095 = vand.u32 %v1093, 15
        %v1096 = vsub.s32 0, %v1095
        %v1097 = vsel %vm1091, %v1096, %v1095
        %vm1098 = vcmp.lt.s32.totalorder %v1026, 0
        %v1099 = vsub.s32 0, %v1026
        %v1100 = vsel %vm1098, %v1099, %v1026
        %v1101 = vshrl.u32 %v1100, 4
        %v1102 = vand.u32 %v1100, 15
        %v1103 = vsub.s32 0, %v1102
        %v1104 = vsel %vm1098, %v1103, %v1102
        %vm1105 = vcmp.lt.s32.totalorder %v1027, 0
        %v1106 = vsub.s32 0, %v1027
        %v1107 = vsel %vm1105, %v1106, %v1027
        %v1108 = vshrl.u32 %v1107, 4
        %v1109 = vand.u32 %v1107, 15
        %v1110 = vsub.s32 0, %v1109
        %v1111 = vsel %vm1105, %v1110, %v1109
        %vm1112 = vcmp.lt.s32.totalorder %v1028, 0
        %v1113 = vsub.s32 0, %v1028
        %v1114 = vsel %vm1112, %v1113, %v1028
        %v1115 = vshrl.u32 %v1114, 4
        %v1116 = vand.u32 %v1114, 15
        %v1117 = vsub.s32 0, %v1116
        %v1118 = vsel %vm1112, %v1117, %v1116
        %vm1119 = vcmp.lt.s32.totalorder %v1029, 0
        %v1120 = vsub.s32 0, %v1029
        %v1121 = vsel %vm1119, %v1120, %v1029
        %v1122 = vshrl.u32 %v1121, 4
        %v1123 = vand.u32 %v1121, 15
        %v1124 = vsub.s32 0, %v1123
        %v1125 = vsel %vm1119, %v1124, %v1123
        %vm1126 = vcmp.lt.s32.totalorder %v1030, 0
        %v1127 = vsub.s32 0, %v1030
        %v1128 = vsel %vm1126, %v1127, %v1030
        %v1129 = vshrl.u32 %v1128, 4
        %v1130 = vand.u32 %v1128, 15
        %v1131 = vsub.s32 0, %v1130
        %v1132 = vsel %vm1126, %v1131, %v1130
        %vm1133 = vcmp.lt.s32.totalorder %v1031, 0
        %v1134 = vsub.s32 0, %v1031
        %v1135 = vsel %vm1133, %v1134, %v1031
        %v1136 = vshrl.u32 %v1135, 4
        %v1137 = vand.u32 %v1135, 15
        %v1138 = vsub.s32 0, %v1137
        %v1139 = vsel %vm1133, %v1138, %v1137
        %vm1140 = vcmp.lt.s32.totalorder %v1032, 0
        %v1141 = vsub.s32 0, %v1032
        %v1142 = vsel %vm1140, %v1141, %v1032
        %v1143 = vshrl.u32 %v1142, 4
        %v1144 = vand.u32 %v1142, 15
        %v1145 = vsub.s32 0, %v1144
        %v1146 = vsel %vm1140, %v1145, %v1144
        %vm1147 = vcmp.lt.s32.totalorder %v1033, 0
        %v1148 = vsub.s32 0, %v1033
        %v1149 = vsel %vm1147, %v1148, %v1033
        %v1150 = vshrl.u32 %v1149, 4
        %v1151 = vand.u32 %v1149, 15
        %v1152 = vsub.s32 0, %v1151
        %v1153 = vsel %vm1147, %v1152, %v1151
        %vm1154 = vcmp.lt.s32.totalorder %v1034, 0
        %v1155 = vsub.s32 0, %v1034
        %v1156 = vsel %vm1154, %v1155, %v1034
        %v1157 = vshrl.u32 %v1156, 4
        %v1158 = vand.u32 %v1156, 15
        %v1159 = vsub.s32 0, %v1158
        %v1160 = vsel %vm1154, %v1159, %v1158
        %vm1161 = vcmp.lt.s32.totalorder %v1035, 0
        %v1162 = vsub.s32 0, %v1035
        %v1163 = vsel %vm1161, %v1162, %v1035
        %v1164 = vshrl.u32 %v1163, 4
        %v1165 = vand.u32 %v1163, 15
        %v1166 = vsub.s32 0, %v1165
        %v1167 = vsel %vm1161, %v1166, %v1165
        %vm1168 = vcmp.lt.s32.totalorder %v1036, 0
        %v1169 = vsub.s32 0, %v1036
        %v1170 = vsel %vm1168, %v1169, %v1036
        %v1171 = vshrl.u32 %v1170, 4
        %v1172 = vand.u32 %v1170, 15
        %v1173 = vsub.s32 0, %v1172
        %v1174 = vsel %vm1168, %v1173, %v1172
        %vm1175 = vcmp.lt.s32.totalorder %v1037, 0
        %v1176 = vsub.s32 0, %v1037
        %v1177 = vsel %vm1175, %v1176, %v1037
        %v1178 = vshrl.u32 %v1177, 4
        %v1179 = vand.u32 %v1177, 15
        %v1180 = vsub.s32 0, %v1179
        %v1181 = vsel %vm1175, %v1180, %v1179
        %vm1182 = vcmp.lt.s32.totalorder %v1038, 0
        %v1183 = vsub.s32 0, %v1038
        %v1184 = vsel %vm1182, %v1183, %v1038
        %v1185 = vshrl.u32 %v1184, 4
        %v1186 = vand.u32 %v1184, 15
        %v1187 = vsub.s32 0, %v1186
        %v1188 = vsel %vm1182, %v1187, %v1186
        %vm1189 = vcmp.lt.s32.totalorder %v1039, 0
        %v1190 = vsub.s32 0, %v1039
        %v1191 = vsel %vm1189, %v1190, %v1039
        %v1192 = vshrl.u32 %v1191, 4
        %v1193 = vand.u32 %v1191, 15
        %v1194 = vsub.s32 0, %v1193
        %v1195 = vsel %vm1189, %v1194, %v1193
        %vm1196 = vcmp.lt.s32.totalorder %v1040, 0
        %v1197 = vsub.s32 0, %v1040
        %v1198 = vsel %vm1196, %v1197, %v1040
        %v1199 = vshrl.u32 %v1198, 4
        %v1200 = vand.u32 %v1198, 15
        %v1201 = vsub.s32 0, %v1200
        %v1202 = vsel %vm1196, %v1201, %v1200
        %vm1203 = vcmp.lt.s32.totalorder %v1041, 0
        %v1204 = vsub.s32 0, %v1041
        %v1205 = vsel %vm1203, %v1204, %v1041
        %v1206 = vshrl.u32 %v1205, 4
        %v1207 = vand.u32 %v1205, 15
        %v1208 = vsub.s32 0, %v1207
        %v1209 = vsel %vm1203, %v1208, %v1207
        %vm1210 = vcmp.lt.s32.totalorder %v1042, 0
        %v1211 = vsub.s32 0, %v1042
        %v1212 = vsel %vm1210, %v1211, %v1042
        %v1213 = vshrl.u32 %v1212, 4
        %v1214 = vand.u32 %v1212, 15
        %v1215 = vsub.s32 0, %v1214
        %v1216 = vsel %vm1210, %v1215, %v1214
        %vm1217 = vcmp.lt.s32.totalorder %v1043, 0
        %v1218 = vsub.s32 0, %v1043
        %v1219 = vsel %vm1217, %v1218, %v1043
        %v1220 = vshrl.u32 %v1219, 4
        %v1221 = vand.u32 %v1219, 15
        %v1222 = vsub.s32 0, %v1221
        %v1223 = vsel %vm1217, %v1222, %v1221
        %vm1224 = vcmp.lt.s32.totalorder %v1044, 0
        %v1225 = vsub.s32 0, %v1044
        %v1226 = vsel %vm1224, %v1225, %v1044
        %v1227 = vshrl.u32 %v1226, 4
        %v1228 = vand.u32 %v1226, 15
        %v1229 = vsub.s32 0, %v1228
        %v1230 = vsel %vm1224, %v1229, %v1228
        %vm1231 = vcmp.lt.s32.totalorder %v1045, 0
        %v1232 = vsub.s32 0, %v1045
        %v1233 = vsel %vm1231, %v1232, %v1045
        %v1234 = vshrl.u32 %v1233, 4
        %v1235 = vand.u32 %v1233, 15
        %v1236 = vsub.s32 0, %v1235
        %v1237 = vsel %vm1231, %v1236, %v1235
        %vm1238 = vcmp.lt.s32.totalorder %v1046, 0
        %v1239 = vsub.s32 0, %v1046
        %v1240 = vsel %vm1238, %v1239, %v1046
        %v1241 = vshrl.u32 %v1240, 4
        %v1242 = vand.u32 %v1240, 15
        %v1243 = vsub.s32 0, %v1242
        %v1244 = vsel %vm1238, %v1243, %v1242
        %vm1245 = vcmp.lt.s32.totalorder %v1047, 0
        %v1246 = vsub.s32 0, %v1047
        %v1247 = vsel %vm1245, %v1246, %v1047
        %v1248 = vshrl.u32 %v1247, 4
        %v1249 = vand.u32 %v1247, 15
        %v1250 = vsub.s32 0, %v1249
        %v1251 = vsel %vm1245, %v1250, %v1249
        %vm1252 = vcmp.lt.s32.totalorder %v1048, 0
        %v1253 = vsub.s32 0, %v1048
        %v1254 = vsel %vm1252, %v1253, %v1048
        %v1255 = vshrl.u32 %v1254, 4
        %v1256 = vand.u32 %v1254, 15
        %v1257 = vsub.s32 0, %v1256
        %v1258 = vsel %vm1252, %v1257, %v1256
        %vm1259 = vcmp.lt.s32.totalorder %v1049, 0
        %v1260 = vsub.s32 0, %v1049
        %v1261 = vsel %vm1259, %v1260, %v1049
        %v1262 = vshrl.u32 %v1261, 4
        %v1263 = vand.u32 %v1261, 15
        %v1264 = vsub.s32 0, %v1263
        %v1265 = vsel %vm1259, %v1264, %v1263
        %vm1266 = vcmp.lt.s32.totalorder %v1050, 0
        %v1267 = vsub.s32 0, %v1050
        %v1268 = vsel %vm1266, %v1267, %v1050
        %v1269 = vshrl.u32 %v1268, 4
        %v1270 = vand.u32 %v1268, 15
        %v1271 = vsub.s32 0, %v1270
        %v1272 = vsel %vm1266, %v1271, %v1270
        %vm1273 = vcmp.lt.s32.totalorder %v1051, 0
        %v1274 = vsub.s32 0, %v1051
        %v1275 = vsel %vm1273, %v1274, %v1051
        %v1276 = vshrl.u32 %v1275, 4
        %v1277 = vand.u32 %v1275, 15
        %v1278 = vsub.s32 0, %v1277
        %v1279 = vsel %vm1273, %v1278, %v1277
        %vm1280 = vcmp.lt.s32.totalorder %v1052, 0
        %v1281 = vsub.s32 0, %v1052
        %v1282 = vsel %vm1280, %v1281, %v1052
        %v1283 = vshrl.u32 %v1282, 4
        %v1284 = vand.u32 %v1282, 15
        %v1285 = vsub.s32 0, %v1284
        %v1286 = vsel %vm1280, %v1285, %v1284
        %vm1287 = vcmp.lt.s32.totalorder %v1053, 0
        %v1288 = vsub.s32 0, %v1053
        %v1289 = vsel %vm1287, %v1288, %v1053
        %v1290 = vshrl.u32 %v1289, 4
        %v1291 = vand.u32 %v1289, 15
        %v1292 = vsub.s32 0, %v1291
        %v1293 = vsel %vm1287, %v1292, %v1291
        %vm1294 = vcmp.lt.s32.totalorder %v1054, 0
        %v1295 = vsub.s32 0, %v1054
        %v1296 = vsel %vm1294, %v1295, %v1054
        %v1297 = vshrl.u32 %v1296, 4
        %v1298 = vand.u32 %v1296, 15
        %v1299 = vsub.s32 0, %v1298
        %v1300 = vsel %vm1294, %v1299, %v1298
        %vm1301 = vcmp.lt.s32.totalorder %v1055, 0
        %v1302 = vsub.s32 0, %v1055
        %v1303 = vsel %vm1301, %v1302, %v1055
        %v1304 = vshrl.u32 %v1303, 4
        %v1305 = vand.u32 %v1303, 15
        %v1306 = vsub.s32 0, %v1305
        %v1307 = vsel %vm1301, %v1306, %v1305
        %vm1308 = vcmp.ne.s32.totalorder %v1062, 0
        %vm1309 = vcmp.ne.s32.totalorder %v1069, 0
        %vm1310 = vcmp.ne.s32.totalorder %v1076, 0
        %vm1311 = vcmp.ne.s32.totalorder %v1083, 0
        %vm1312 = vcmp.ne.s32.totalorder %v1090, 0
        %vm1313 = vcmp.ne.s32.totalorder %v1097, 0
        %vm1314 = vcmp.ne.s32.totalorder %v1104, 0
        %vm1315 = vcmp.ne.s32.totalorder %v1111, 0
        %vm1316 = vcmp.ne.s32.totalorder %v1118, 0
        %vm1317 = vcmp.ne.s32.totalorder %v1125, 0
        %vm1318 = vcmp.ne.s32.totalorder %v1132, 0
        %vm1319 = vcmp.ne.s32.totalorder %v1139, 0
        %vm1320 = vcmp.ne.s32.totalorder %v1146, 0
        %vm1321 = vcmp.ne.s32.totalorder %v1153, 0
        %vm1322 = vcmp.ne.s32.totalorder %v1160, 0
        %vm1323 = vcmp.ne.s32.totalorder %v1167, 0
        %vm1324 = vcmp.ne.s32.totalorder %v1174, 0
        %vm1325 = vcmp.ne.s32.totalorder %v1181, 0
        %vm1326 = vcmp.ne.s32.totalorder %v1188, 0
        %vm1327 = vcmp.ne.s32.totalorder %v1195, 0
        %vm1328 = vcmp.ne.s32.totalorder %v1202, 0
        %vm1329 = vcmp.ne.s32.totalorder %v1209, 0
        %vm1330 = vcmp.ne.s32.totalorder %v1216, 0
        %vm1331 = vcmp.ne.s32.totalorder %v1223, 0
        %vm1332 = vcmp.ne.s32.totalorder %v1230, 0
        %vm1333 = vcmp.ne.s32.totalorder %v1237, 0
        %vm1334 = vcmp.ne.s32.totalorder %v1244, 0
        %vm1335 = vcmp.ne.s32.totalorder %v1251, 0
        %vm1336 = vcmp.ne.s32.totalorder %v1258, 0
        %vm1337 = vcmp.ne.s32.totalorder %v1265, 0
        %vm1338 = vcmp.ne.s32.totalorder %v1272, 0
        %vm1339 = vcmp.ne.s32.totalorder %v1279, 0
        %vm1340 = vcmp.ne.s32.totalorder %v1286, 0
        %vm1341 = vcmp.ne.s32.totalorder %v1293, 0
        %vm1342 = vcmp.ne.s32.totalorder %v1300, 0
        %vm1343 = vcmp.ne.s32.totalorder %v1307, 0
        %vm1344 = vcmp.lt.s32.totalorder %v1062, 0
        %vm1345 = vcmp.lt.s32.totalorder %v1069, 0
        %vm1346 = vcmp.lt.s32.totalorder %v1076, 0
        %vm1347 = vcmp.lt.s32.totalorder %v1083, 0
        %vm1348 = vcmp.lt.s32.totalorder %v1090, 0
        %vm1349 = vcmp.lt.s32.totalorder %v1097, 0
        %vm1350 = vcmp.lt.s32.totalorder %v1104, 0
        %vm1351 = vcmp.lt.s32.totalorder %v1111, 0
        %vm1352 = vcmp.lt.s32.totalorder %v1118, 0
        %vm1353 = vcmp.lt.s32.totalorder %v1125, 0
        %vm1354 = vcmp.lt.s32.totalorder %v1132, 0
        %vm1355 = vcmp.lt.s32.totalorder %v1139, 0
        %vm1356 = vcmp.lt.s32.totalorder %v1146, 0
        %vm1357 = vcmp.lt.s32.totalorder %v1153, 0
        %vm1358 = vcmp.lt.s32.totalorder %v1160, 0
        %vm1359 = vcmp.lt.s32.totalorder %v1167, 0
        %vm1360 = vcmp.lt.s32.totalorder %v1174, 0
        %vm1361 = vcmp.lt.s32.totalorder %v1181, 0
        %vm1362 = vcmp.lt.s32.totalorder %v1188, 0
        %vm1363 = vcmp.lt.s32.totalorder %v1195, 0
        %vm1364 = vcmp.lt.s32.totalorder %v1202, 0
        %vm1365 = vcmp.lt.s32.totalorder %v1209, 0
        %vm1366 = vcmp.lt.s32.totalorder %v1216, 0
        %vm1367 = vcmp.lt.s32.totalorder %v1223, 0
        %vm1368 = vcmp.lt.s32.totalorder %v1230, 0
        %vm1369 = vcmp.lt.s32.totalorder %v1237, 0
        %vm1370 = vcmp.lt.s32.totalorder %v1244, 0
        %vm1371 = vcmp.lt.s32.totalorder %v1251, 0
        %vm1372 = vcmp.lt.s32.totalorder %v1258, 0
        %vm1373 = vcmp.lt.s32.totalorder %v1265, 0
        %vm1374 = vcmp.lt.s32.totalorder %v1272, 0
        %vm1375 = vcmp.lt.s32.totalorder %v1279, 0
        %vm1376 = vcmp.lt.s32.totalorder %v1286, 0
        %vm1377 = vcmp.lt.s32.totalorder %v1293, 0
        %vm1378 = vcmp.lt.s32.totalorder %v1300, 0
        %vm1379 = vcmp.lt.s32.totalorder %v1307, 0
        %vm1380 = vmand %vm1344, %vm1308
        %vm1381 = vmand %vm1345, %vm1309
        %vm1382 = vmand %vm1346, %vm1310
        %vm1383 = vmand %vm1347, %vm1311
        %vm1384 = vmand %vm1348, %vm1312
        %vm1385 = vmand %vm1349, %vm1313
        %vm1386 = vmand %vm1350, %vm1314
        %vm1387 = vmand %vm1351, %vm1315
        %vm1388 = vmand %vm1352, %vm1316
        %vm1389 = vmand %vm1353, %vm1317
        %vm1390 = vmand %vm1354, %vm1318
        %vm1391 = vmand %vm1355, %vm1319
        %vm1392 = vmand %vm1356, %vm1320
        %vm1393 = vmand %vm1357, %vm1321
        %vm1394 = vmand %vm1358, %vm1322
        %vm1395 = vmand %vm1359, %vm1323
        %vm1396 = vmand %vm1360, %vm1324
        %vm1397 = vmand %vm1361, %vm1325
        %vm1398 = vmand %vm1362, %vm1326
        %vm1399 = vmand %vm1363, %vm1327
        %vm1400 = vmand %vm1364, %vm1328
        %vm1401 = vmand %vm1365, %vm1329
        %vm1402 = vmand %vm1366, %vm1330
        %vm1403 = vmand %vm1367, %vm1331
        %vm1404 = vmand %vm1368, %vm1332
        %vm1405 = vmand %vm1369, %vm1333
        %vm1406 = vmand %vm1370, %vm1334
        %vm1407 = vmand %vm1371, %vm1335
        %vm1408 = vmand %vm1372, %vm1336
        %vm1409 = vmand %vm1373, %vm1337
        %vm1410 = vmand %vm1374, %vm1338
        %vm1411 = vmand %vm1375, %vm1339
        %vm1412 = vmand %vm1376, %vm1340
        %vm1413 = vmand %vm1377, %vm1341
        %vm1414 = vmand %vm1378, %vm1342
        %vm1415 = vmand %vm1379, %vm1343
        %v1416 = vadd.s32 %v1062, 16
        %v1417 = vadd.s32 %v1069, 16
        %v1418 = vadd.s32 %v1076, 16
        %v1419 = vadd.s32 %v1083, 16
        %v1420 = vadd.s32 %v1090, 16
        %v1421 = vadd.s32 %v1097, 16
        %v1422 = vadd.s32 %v1104, 16
        %v1423 = vadd.s32 %v1111, 16
        %v1424 = vadd.s32 %v1118, 16
        %v1425 = vadd.s32 %v1125, 16
        %v1426 = vadd.s32 %v1132, 16
        %v1427 = vadd.s32 %v1139, 16
        %v1428 = vadd.s32 %v1146, 16
        %v1429 = vadd.s32 %v1153, 16
        %v1430 = vadd.s32 %v1160, 16
        %v1431 = vadd.s32 %v1167, 16
        %v1432 = vadd.s32 %v1174, 16
        %v1433 = vadd.s32 %v1181, 16
        %v1434 = vadd.s32 %v1188, 16
        %v1435 = vadd.s32 %v1195, 16
        %v1436 = vadd.s32 %v1202, 16
        %v1437 = vadd.s32 %v1209, 16
        %v1438 = vadd.s32 %v1216, 16
        %v1439 = vadd.s32 %v1223, 16
        %v1440 = vadd.s32 %v1230, 16
        %v1441 = vadd.s32 %v1237, 16
        %v1442 = vadd.s32 %v1244, 16
        %v1443 = vadd.s32 %v1251, 16
        %v1444 = vadd.s32 %v1258, 16
        %v1445 = vadd.s32 %v1265, 16
        %v1446 = vadd.s32 %v1272, 16
        %v1447 = vadd.s32 %v1279, 16
        %v1448 = vadd.s32 %v1286, 16
        %v1449 = vadd.s32 %v1293, 16
        %v1450 = vadd.s32 %v1300, 16
        %v1451 = vadd.s32 %v1307, 16
        %v1452 = vsel %vm1380, %v1416, %v1062
        %v1453 = vsel %vm1381, %v1417, %v1069
        %v1454 = vsel %vm1382, %v1418, %v1076
        %v1455 = vsel %vm1383, %v1419, %v1083
        %v1456 = vsel %vm1384, %v1420, %v1090
        %v1457 = vsel %vm1385, %v1421, %v1097
        %v1458 = vsel %vm1386, %v1422, %v1104
        %v1459 = vsel %vm1387, %v1423, %v1111
        %v1460 = vsel %vm1388, %v1424, %v1118
        %v1461 = vsel %vm1389, %v1425, %v1125
        %v1462 = vsel %vm1390, %v1426, %v1132
        %v1463 = vsel %vm1391, %v1427, %v1139
        %v1464 = vsel %vm1392, %v1428, %v1146
        %v1465 = vsel %vm1393, %v1429, %v1153
        %v1466 = vsel %vm1394, %v1430, %v1160
        %v1467 = vsel %vm1395, %v1431, %v1167
        %v1468 = vsel %vm1396, %v1432, %v1174
        %v1469 = vsel %vm1397, %v1433, %v1181
        %v1470 = vsel %vm1398, %v1434, %v1188
        %v1471 = vsel %vm1399, %v1435, %v1195
        %v1472 = vsel %vm1400, %v1436, %v1202
        %v1473 = vsel %vm1401, %v1437, %v1209
        %v1474 = vsel %vm1402, %v1438, %v1216
        %v1475 = vsel %vm1403, %v1439, %v1223
        %v1476 = vsel %vm1404, %v1440, %v1230
        %v1477 = vsel %vm1405, %v1441, %v1237
        %v1478 = vsel %vm1406, %v1442, %v1244
        %v1479 = vsel %vm1407, %v1443, %v1251
        %v1480 = vsel %vm1408, %v1444, %v1258
        %v1481 = vsel %vm1409, %v1445, %v1265
        %v1482 = vsel %vm1410, %v1446, %v1272
        %v1483 = vsel %vm1411, %v1447, %v1279
        %v1484 = vsel %vm1412, %v1448, %v1286
        %v1485 = vsel %vm1413, %v1449, %v1293
        %v1486 = vsel %vm1414, %v1450, %v1300
        %v1487 = vsel %vm1415, %v1451, %v1307
        %p1488 = scmp.gt.s32.totalorder %s37, 0
        %vm1489 = vcmp.ge.s32.totalorder %v1020, 16
        %vm1490 = vcmp.ge.s32.totalorder %v1021, 16
        %vm1491 = vcmp.ge.s32.totalorder %v1022, 16
        %vm1492 = vcmp.ge.s32.totalorder %v1023, 16
        %vm1493 = vcmp.ge.s32.totalorder %v1024, 16
        %vm1494 = vcmp.ge.s32.totalorder %v1025, 16
        %vm1495 = vcmp.ge.s32.totalorder %v1026, 16
        %vm1496 = vcmp.ge.s32.totalorder %v1027, 16
        %vm1497 = vcmp.ge.s32.totalorder %v1028, 16
        %vm1498 = vcmp.ge.s32.totalorder %v1029, 16
        %vm1499 = vcmp.ge.s32.totalorder %v1030, 16
        %vm1500 = vcmp.ge.s32.totalorder %v1031, 16
        %vm1501 = vcmp.ge.s32.totalorder %v1032, 16
        %vm1502 = vcmp.ge.s32.totalorder %v1033, 16
        %vm1503 = vcmp.ge.s32.totalorder %v1034, 16
        %vm1504 = vcmp.ge.s32.totalorder %v1035, 16
        %vm1505 = vcmp.ge.s32.totalorder %v1036, 16
        %vm1506 = vcmp.ge.s32.totalorder %v1037, 16
        %vm1507 = vcmp.ge.s32.totalorder %v1038, 16
        %vm1508 = vcmp.ge.s32.totalorder %v1039, 16
        %vm1509 = vcmp.ge.s32.totalorder %v1040, 16
        %vm1510 = vcmp.ge.s32.totalorder %v1041, 16
        %vm1511 = vcmp.ge.s32.totalorder %v1042, 16
        %vm1512 = vcmp.ge.s32.totalorder %v1043, 16
        %vm1513 = vcmp.ge.s32.totalorder %v1044, 16
        %vm1514 = vcmp.ge.s32.totalorder %v1045, 16
        %vm1515 = vcmp.ge.s32.totalorder %v1046, 16
        %vm1516 = vcmp.ge.s32.totalorder %v1047, 16
        %vm1517 = vcmp.ge.s32.totalorder %v1048, 16
        %vm1518 = vcmp.ge.s32.totalorder %v1049, 16
        %vm1519 = vcmp.ge.s32.totalorder %v1050, 16
        %vm1520 = vcmp.ge.s32.totalorder %v1051, 16
        %vm1521 = vcmp.ge.s32.totalorder %v1052, 16
        %vm1522 = vcmp.ge.s32.totalorder %v1053, 16
        %vm1523 = vcmp.ge.s32.totalorder %v1054, 16
        %vm1524 = vcmp.ge.s32.totalorder %v1055, 16
        %s1525 = scalar_select %p1488, 1, 0
        %v1526 = vstv %s1525
        %vm1527 = vcmp.eq.s32.totalorder %v1526, 1
        %vm1528 = vmor %vm1527, %vm1489
        %vm1529 = vmor %vm1527, %vm1490
        %vm1530 = vmor %vm1527, %vm1491
        %vm1531 = vmor %vm1527, %vm1492
        %vm1532 = vmor %vm1527, %vm1493
        %vm1533 = vmor %vm1527, %vm1494
        %vm1534 = vmor %vm1527, %vm1495
        %vm1535 = vmor %vm1527, %vm1496
        %vm1536 = vmor %vm1527, %vm1497
        %vm1537 = vmor %vm1527, %vm1498
        %vm1538 = vmor %vm1527, %vm1499
        %vm1539 = vmor %vm1527, %vm1500
        %vm1540 = vmor %vm1527, %vm1501
        %vm1541 = vmor %vm1527, %vm1502
        %vm1542 = vmor %vm1527, %vm1503
        %vm1543 = vmor %vm1527, %vm1504
        %vm1544 = vmor %vm1527, %vm1505
        %vm1545 = vmor %vm1527, %vm1506
        %vm1546 = vmor %vm1527, %vm1507
        %vm1547 = vmor %vm1527, %vm1508
        %vm1548 = vmor %vm1527, %vm1509
        %vm1549 = vmor %vm1527, %vm1510
        %vm1550 = vmor %vm1527, %vm1511
        %vm1551 = vmor %vm1527, %vm1512
        %vm1552 = vmor %vm1527, %vm1513
        %vm1553 = vmor %vm1527, %vm1514
        %vm1554 = vmor %vm1527, %vm1515
        %vm1555 = vmor %vm1527, %vm1516
        %vm1556 = vmor %vm1527, %vm1517
        %vm1557 = vmor %vm1527, %vm1518
        %vm1558 = vmor %vm1527, %vm1519
        %vm1559 = vmor %vm1527, %vm1520
        %vm1560 = vmor %vm1527, %vm1521
        %vm1561 = vmor %vm1527, %vm1522
        %vm1562 = vmor %vm1527, %vm1523
        %vm1563 = vmor %vm1527, %vm1524
        %p1564 = scmp.lt.s32.totalorder %s37, 0
        %vm1565 = vcmp.lt.s32.totalorder %v1020, 272
        %vm1566 = vcmp.lt.s32.totalorder %v1021, 272
        %vm1567 = vcmp.lt.s32.totalorder %v1022, 272
        %vm1568 = vcmp.lt.s32.totalorder %v1023, 272
        %vm1569 = vcmp.lt.s32.totalorder %v1024, 272
        %vm1570 = vcmp.lt.s32.totalorder %v1025, 272
        %vm1571 = vcmp.lt.s32.totalorder %v1026, 272
        %vm1572 = vcmp.lt.s32.totalorder %v1027, 272
        %vm1573 = vcmp.lt.s32.totalorder %v1028, 272
        %vm1574 = vcmp.lt.s32.totalorder %v1029, 272
        %vm1575 = vcmp.lt.s32.totalorder %v1030, 272
        %vm1576 = vcmp.lt.s32.totalorder %v1031, 272
        %vm1577 = vcmp.lt.s32.totalorder %v1032, 272
        %vm1578 = vcmp.lt.s32.totalorder %v1033, 272
        %vm1579 = vcmp.lt.s32.totalorder %v1034, 272
        %vm1580 = vcmp.lt.s32.totalorder %v1035, 272
        %vm1581 = vcmp.lt.s32.totalorder %v1036, 272
        %vm1582 = vcmp.lt.s32.totalorder %v1037, 272
        %vm1583 = vcmp.lt.s32.totalorder %v1038, 272
        %vm1584 = vcmp.lt.s32.totalorder %v1039, 272
        %vm1585 = vcmp.lt.s32.totalorder %v1040, 272
        %vm1586 = vcmp.lt.s32.totalorder %v1041, 272
        %vm1587 = vcmp.lt.s32.totalorder %v1042, 272
        %vm1588 = vcmp.lt.s32.totalorder %v1043, 272
        %vm1589 = vcmp.lt.s32.totalorder %v1044, 272
        %vm1590 = vcmp.lt.s32.totalorder %v1045, 272
        %vm1591 = vcmp.lt.s32.totalorder %v1046, 272
        %vm1592 = vcmp.lt.s32.totalorder %v1047, 272
        %vm1593 = vcmp.lt.s32.totalorder %v1048, 272
        %vm1594 = vcmp.lt.s32.totalorder %v1049, 272
        %vm1595 = vcmp.lt.s32.totalorder %v1050, 272
        %vm1596 = vcmp.lt.s32.totalorder %v1051, 272
        %vm1597 = vcmp.lt.s32.totalorder %v1052, 272
        %vm1598 = vcmp.lt.s32.totalorder %v1053, 272
        %vm1599 = vcmp.lt.s32.totalorder %v1054, 272
        %vm1600 = vcmp.lt.s32.totalorder %v1055, 272
        %s1601 = scalar_select %p1564, 1, 0
        %v1602 = vstv %s1601
        %vm1603 = vcmp.eq.s32.totalorder %v1602, 1
        %vm1604 = vmor %vm1603, %vm1565
        %vm1605 = vmor %vm1603, %vm1566
        %vm1606 = vmor %vm1603, %vm1567
        %vm1607 = vmor %vm1603, %vm1568
        %vm1608 = vmor %vm1603, %vm1569
        %vm1609 = vmor %vm1603, %vm1570
        %vm1610 = vmor %vm1603, %vm1571
        %vm1611 = vmor %vm1603, %vm1572
        %vm1612 = vmor %vm1603, %vm1573
        %vm1613 = vmor %vm1603, %vm1574
        %vm1614 = vmor %vm1603, %vm1575
        %vm1615 = vmor %vm1603, %vm1576
        %vm1616 = vmor %vm1603, %vm1577
        %vm1617 = vmor %vm1603, %vm1578
        %vm1618 = vmor %vm1603, %vm1579
        %vm1619 = vmor %vm1603, %vm1580
        %vm1620 = vmor %vm1603, %vm1581
        %vm1621 = vmor %vm1603, %vm1582
        %vm1622 = vmor %vm1603, %vm1583
        %vm1623 = vmor %vm1603, %vm1584
        %vm1624 = vmor %vm1603, %vm1585
        %vm1625 = vmor %vm1603, %vm1586
        %vm1626 = vmor %vm1603, %vm1587
        %vm1627 = vmor %vm1603, %vm1588
        %vm1628 = vmor %vm1603, %vm1589
        %vm1629 = vmor %vm1603, %vm1590
        %vm1630 = vmor %vm1603, %vm1591
        %vm1631 = vmor %vm1603, %vm1592
        %vm1632 = vmor %vm1603, %vm1593
        %vm1633 = vmor %vm1603, %vm1594
        %vm1634 = vmor %vm1603, %vm1595
        %vm1635 = vmor %vm1603, %vm1596
        %vm1636 = vmor %vm1603, %vm1597
        %vm1637 = vmor %vm1603, %vm1598
        %vm1638 = vmor %vm1603, %vm1599
        %vm1639 = vmor %vm1603, %vm1600
        %vm1640 = vmand %vm1528, %vm1604
        %vm1641 = vmand %vm1529, %vm1605
        %vm1642 = vmand %vm1530, %vm1606
        %vm1643 = vmand %vm1531, %vm1607
        %vm1644 = vmand %vm1532, %vm1608
        %vm1645 = vmand %vm1533, %vm1609
        %vm1646 = vmand %vm1534, %vm1610
        %vm1647 = vmand %vm1535, %vm1611
        %vm1648 = vmand %vm1536, %vm1612
        %vm1649 = vmand %vm1537, %vm1613
        %vm1650 = vmand %vm1538, %vm1614
        %vm1651 = vmand %vm1539, %vm1615
        %vm1652 = vmand %vm1540, %vm1616
        %vm1653 = vmand %vm1541, %vm1617
        %vm1654 = vmand %vm1542, %vm1618
        %vm1655 = vmand %vm1543, %vm1619
        %vm1656 = vmand %vm1544, %vm1620
        %vm1657 = vmand %vm1545, %vm1621
        %vm1658 = vmand %vm1546, %vm1622
        %vm1659 = vmand %vm1547, %vm1623
        %vm1660 = vmand %vm1548, %vm1624
        %vm1661 = vmand %vm1549, %vm1625
        %vm1662 = vmand %vm1550, %vm1626
        %vm1663 = vmand %vm1551, %vm1627
        %vm1664 = vmand %vm1552, %vm1628
        %vm1665 = vmand %vm1553, %vm1629
        %vm1666 = vmand %vm1554, %vm1630
        %vm1667 = vmand %vm1555, %vm1631
        %vm1668 = vmand %vm1556, %vm1632
        %vm1669 = vmand %vm1557, %vm1633
        %vm1670 = vmand %vm1558, %vm1634
        %vm1671 = vmand %vm1559, %vm1635
        %vm1672 = vmand %vm1560, %vm1636
        %vm1673 = vmand %vm1561, %vm1637
        %vm1674 = vmand %vm1562, %vm1638
        %vm1675 = vmand %vm1563, %vm1639
        %v1676 = vsel %vm1640, 1, 0
        %v1677 = vsel %vm1641, 1, 0
        %v1678 = vsel %vm1642, 1, 0
        %v1679 = vsel %vm1643, 1, 0
        %v1680 = vsel %vm1644, 1, 0
        %v1681 = vsel %vm1645, 1, 0
        %v1682 = vsel %vm1646, 1, 0
        %v1683 = vsel %vm1647, 1, 0
        %v1684 = vsel %vm1648, 1, 0
        %v1685 = vsel %vm1649, 1, 0
        %v1686 = vsel %vm1650, 1, 0
        %v1687 = vsel %vm1651, 1, 0
        %v1688 = vsel %vm1652, 1, 0
        %v1689 = vsel %vm1653, 1, 0
        %v1690 = vsel %vm1654, 1, 0
        %v1691 = vsel %vm1655, 1, 0
        %v1692 = vsel %vm1656, 1, 0
        %v1693 = vsel %vm1657, 1, 0
        %v1694 = vsel %vm1658, 1, 0
        %v1695 = vsel %vm1659, 1, 0
        %v1696 = vsel %vm1660, 1, 0
        %v1697 = vsel %vm1661, 1, 0
        %v1698 = vsel %vm1662, 1, 0
        %v1699 = vsel %vm1663, 1, 0
        %v1700 = vsel %vm1664, 1, 0
        %v1701 = vsel %vm1665, 1, 0
        %v1702 = vsel %vm1666, 1, 0
        %v1703 = vsel %vm1667, 1, 0
        %v1704 = vsel %vm1668, 1, 0
        %v1705 = vsel %vm1669, 1, 0
        %v1706 = vsel %vm1670, 1, 0
        %v1707 = vsel %vm1671, 1, 0
        %v1708 = vsel %vm1672, 1, 0
        %v1709 = vsel %vm1673, 1, 0
        %v1710 = vsel %vm1674, 1, 0
        %v1711 = vsel %vm1675, 1, 0
        %vm1712 = vcmp.eq.s32.totalorder %v1676, 1
        %vm1713 = vcmp.eq.s32.totalorder %v1677, 1
        %vm1714 = vcmp.eq.s32.totalorder %v1678, 1
        %vm1715 = vcmp.eq.s32.totalorder %v1679, 1
        %vm1716 = vcmp.eq.s32.totalorder %v1680, 1
        %vm1717 = vcmp.eq.s32.totalorder %v1681, 1
        %vm1718 = vcmp.eq.s32.totalorder %v1682, 1
        %vm1719 = vcmp.eq.s32.totalorder %v1683, 1
        %vm1720 = vcmp.eq.s32.totalorder %v1684, 1
        %vm1721 = vcmp.eq.s32.totalorder %v1685, 1
        %vm1722 = vcmp.eq.s32.totalorder %v1686, 1
        %vm1723 = vcmp.eq.s32.totalorder %v1687, 1
        %vm1724 = vcmp.eq.s32.totalorder %v1688, 1
        %vm1725 = vcmp.eq.s32.totalorder %v1689, 1
        %vm1726 = vcmp.eq.s32.totalorder %v1690, 1
        %vm1727 = vcmp.eq.s32.totalorder %v1691, 1
        %vm1728 = vcmp.eq.s32.totalorder %v1692, 1
        %vm1729 = vcmp.eq.s32.totalorder %v1693, 1
        %vm1730 = vcmp.eq.s32.totalorder %v1694, 1
        %vm1731 = vcmp.eq.s32.totalorder %v1695, 1
        %vm1732 = vcmp.eq.s32.totalorder %v1696, 1
        %vm1733 = vcmp.eq.s32.totalorder %v1697, 1
        %vm1734 = vcmp.eq.s32.totalorder %v1698, 1
        %vm1735 = vcmp.eq.s32.totalorder %v1699, 1
        %vm1736 = vcmp.eq.s32.totalorder %v1700, 1
        %vm1737 = vcmp.eq.s32.totalorder %v1701, 1
        %vm1738 = vcmp.eq.s32.totalorder %v1702, 1
        %vm1739 = vcmp.eq.s32.totalorder %v1703, 1
        %vm1740 = vcmp.eq.s32.totalorder %v1704, 1
        %vm1741 = vcmp.eq.s32.totalorder %v1705, 1
        %vm1742 = vcmp.eq.s32.totalorder %v1706, 1
        %vm1743 = vcmp.eq.s32.totalorder %v1707, 1
        %vm1744 = vcmp.eq.s32.totalorder %v1708, 1
        %vm1745 = vcmp.eq.s32.totalorder %v1709, 1
        %vm1746 = vcmp.eq.s32.totalorder %v1710, 1
        %vm1747 = vcmp.eq.s32.totalorder %v1711, 1
        %v1748 = vsel %vm1712, %v983, 0.0
        %v1749 = vsel %vm1713, %v984, 0.0
        %v1750 = vsel %vm1714, %v985, 0.0
        %v1751 = vsel %vm1715, %v986, 0.0
        %v1752 = vsel %vm1716, %v987, 0.0
        %v1753 = vsel %vm1717, %v988, 0.0
        %v1754 = vsel %vm1718, %v989, 0.0
        %v1755 = vsel %vm1719, %v990, 0.0
        %v1756 = vsel %vm1720, %v991, 0.0
        %v1757 = vsel %vm1721, %v992, 0.0
        %v1758 = vsel %vm1722, %v993, 0.0
        %v1759 = vsel %vm1723, %v994, 0.0
        %v1760 = vsel %vm1724, %v995, 0.0
        %v1761 = vsel %vm1725, %v996, 0.0
        %v1762 = vsel %vm1726, %v997, 0.0
        %v1763 = vsel %vm1727, %v998, 0.0
        %v1764 = vsel %vm1728, %v999, 0.0
        %v1765 = vsel %vm1729, %v1000, 0.0
        %v1766 = vsel %vm1730, %v1001, 0.0
        %v1767 = vsel %vm1731, %v1002, 0.0
        %v1768 = vsel %vm1732, %v1003, 0.0
        %v1769 = vsel %vm1733, %v1004, 0.0
        %v1770 = vsel %vm1734, %v1005, 0.0
        %v1771 = vsel %vm1735, %v1006, 0.0
        %v1772 = vsel %vm1736, %v1007, 0.0
        %v1773 = vsel %vm1737, %v1008, 0.0
        %v1774 = vsel %vm1738, %v1009, 0.0
        %v1775 = vsel %vm1739, %v1010, 0.0
        %v1776 = vsel %vm1740, %v1011, 0.0
        %v1777 = vsel %vm1741, %v1012, 0.0
        %v1778 = vsel %vm1742, %v1013, 0.0
        %v1779 = vsel %vm1743, %v1014, 0.0
        %v1780 = vsel %vm1744, %v1015, 0.0
        %v1781 = vsel %vm1745, %v1016, 0.0
        %v1782 = vsel %vm1746, %v1017, 0.0
        %v1783 = vsel %vm1747, %v1018, 0.0
        %vm1784 = vcmp.ne.s32.totalorder %v1452, 0
        %vm1785 = vcmp.ne.s32.totalorder %v1453, 0
        %vm1786 = vcmp.ne.s32.totalorder %v1454, 0
        %vm1787 = vcmp.ne.s32.totalorder %v1455, 0
        %vm1788 = vcmp.ne.s32.totalorder %v1456, 0
        %vm1789 = vcmp.ne.s32.totalorder %v1457, 0
        %vm1790 = vcmp.ne.s32.totalorder %v1458, 0
        %vm1791 = vcmp.ne.s32.totalorder %v1459, 0
        %vm1792 = vcmp.ne.s32.totalorder %v1460, 0
        %vm1793 = vcmp.ne.s32.totalorder %v1461, 0
        %vm1794 = vcmp.ne.s32.totalorder %v1462, 0
        %vm1795 = vcmp.ne.s32.totalorder %v1463, 0
        %vm1796 = vcmp.ne.s32.totalorder %v1464, 0
        %vm1797 = vcmp.ne.s32.totalorder %v1465, 0
        %vm1798 = vcmp.ne.s32.totalorder %v1466, 0
        %vm1799 = vcmp.ne.s32.totalorder %v1467, 0
        %vm1800 = vcmp.ne.s32.totalorder %v1468, 0
        %vm1801 = vcmp.ne.s32.totalorder %v1469, 0
        %vm1802 = vcmp.ne.s32.totalorder %v1470, 0
        %vm1803 = vcmp.ne.s32.totalorder %v1471, 0
        %vm1804 = vcmp.ne.s32.totalorder %v1472, 0
        %vm1805 = vcmp.ne.s32.totalorder %v1473, 0
        %vm1806 = vcmp.ne.s32.totalorder %v1474, 0
        %vm1807 = vcmp.ne.s32.totalorder %v1475, 0
        %vm1808 = vcmp.ne.s32.totalorder %v1476, 0
        %vm1809 = vcmp.ne.s32.totalorder %v1477, 0
        %vm1810 = vcmp.ne.s32.totalorder %v1478, 0
        %vm1811 = vcmp.ne.s32.totalorder %v1479, 0
        %vm1812 = vcmp.ne.s32.totalorder %v1480, 0
        %vm1813 = vcmp.ne.s32.totalorder %v1481, 0
        %vm1814 = vcmp.ne.s32.totalorder %v1482, 0
        %vm1815 = vcmp.ne.s32.totalorder %v1483, 0
        %vm1816 = vcmp.ne.s32.totalorder %v1484, 0
        %vm1817 = vcmp.ne.s32.totalorder %v1485, 0
        %vm1818 = vcmp.ne.s32.totalorder %v1486, 0
        %vm1819 = vcmp.ne.s32.totalorder %v1487, 0
        %v1820 = vrot.slane %v1748, 7
        %v1821 = vrot.slane %v1749, 7
        %v1822 = vrot.slane %v1750, 7
        %v1823 = vrot.slane %v1751, 7
        %v1824 = vrot.slane %v1752, 7
        %v1825 = vrot.slane %v1753, 7
        %v1826 = vrot.slane %v1754, 7
        %v1827 = vrot.slane %v1755, 7
        %v1828 = vrot.slane %v1756, 7
        %v1829 = vrot.slane %v1757, 7
        %v1830 = vrot.slane %v1758, 7
        %v1831 = vrot.slane %v1759, 7
        %v1832 = vrot.slane %v1760, 7
        %v1833 = vrot.slane %v1761, 7
        %v1834 = vrot.slane %v1762, 7
        %v1835 = vrot.slane %v1763, 7
        %v1836 = vrot.slane %v1764, 7
        %v1837 = vrot.slane %v1765, 7
        %v1838 = vrot.slane %v1766, 7
        %v1839 = vrot.slane %v1767, 7
        %v1840 = vrot.slane %v1768, 7
        %v1841 = vrot.slane %v1769, 7
        %v1842 = vrot.slane %v1770, 7
        %v1843 = vrot.slane %v1771, 7
        %v1844 = vrot.slane %v1772, 7
        %v1845 = vrot.slane %v1773, 7
        %v1846 = vrot.slane %v1774, 7
        %v1847 = vrot.slane %v1775, 7
        %v1848 = vrot.slane %v1776, 7
        %v1849 = vrot.slane %v1777, 7
        %v1850 = vrot.slane %v1778, 7
        %v1851 = vrot.slane %v1779, 7
        %v1852 = vrot.slane %v1780, 7
        %v1853 = vrot.slane %v1781, 7
        %v1854 = vrot.slane %v1782, 7
        %v1855 = vrot.slane %v1783, 7
        %vm1856 = vcmp.lt.s32.totalorder %v1020, 1
        %v1857 = vsel %vm1856, %v1854, %v1855
        %v1858 = vsel %vm1856, %v1853, %v1854
        %v1859 = vsel %vm1856, %v1852, %v1853
        %v1860 = vsel %vm1856, %v1851, %v1852
        %v1861 = vsel %vm1856, %v1850, %v1851
        %v1862 = vsel %vm1856, %v1849, %v1850
        %v1863 = vsel %vm1856, %v1848, %v1849
        %v1864 = vsel %vm1856, %v1847, %v1848
        %v1865 = vsel %vm1856, %v1846, %v1847
        %v1866 = vsel %vm1856, %v1845, %v1846
        %v1867 = vsel %vm1856, %v1844, %v1845
        %v1868 = vsel %vm1856, %v1843, %v1844
        %v1869 = vsel %vm1856, %v1842, %v1843
        %v1870 = vsel %vm1856, %v1841, %v1842
        %v1871 = vsel %vm1856, %v1840, %v1841
        %v1872 = vsel %vm1856, %v1839, %v1840
        %v1873 = vsel %vm1856, %v1838, %v1839
        %v1874 = vsel %vm1856, %v1837, %v1838
        %v1875 = vsel %vm1856, %v1836, %v1837
        %v1876 = vsel %vm1856, %v1835, %v1836
        %v1877 = vsel %vm1856, %v1834, %v1835
        %v1878 = vsel %vm1856, %v1833, %v1834
        %v1879 = vsel %vm1856, %v1832, %v1833
        %v1880 = vsel %vm1856, %v1831, %v1832
        %v1881 = vsel %vm1856, %v1830, %v1831
        %v1882 = vsel %vm1856, %v1829, %v1830
        %v1883 = vsel %vm1856, %v1828, %v1829
        %v1884 = vsel %vm1856, %v1827, %v1828
        %v1885 = vsel %vm1856, %v1826, %v1827
        %v1886 = vsel %vm1856, %v1825, %v1826
        %v1887 = vsel %vm1856, %v1824, %v1825
        %v1888 = vsel %vm1856, %v1823, %v1824
        %v1889 = vsel %vm1856, %v1822, %v1823
        %v1890 = vsel %vm1856, %v1821, %v1822
        %v1891 = vsel %vm1856, %v1820, %v1821
        %v1892 = vsel %vm1856, %v1855, %v1820
        %v1893 = vsel %vm1784, 1, 0
        %v1894 = vsel %vm1785, 1, 0
        %v1895 = vsel %vm1786, 1, 0
        %v1896 = vsel %vm1787, 1, 0
        %v1897 = vsel %vm1788, 1, 0
        %v1898 = vsel %vm1789, 1, 0
        %v1899 = vsel %vm1790, 1, 0
        %v1900 = vsel %vm1791, 1, 0
        %v1901 = vsel %vm1792, 1, 0
        %v1902 = vsel %vm1793, 1, 0
        %v1903 = vsel %vm1794, 1, 0
        %v1904 = vsel %vm1795, 1, 0
        %v1905 = vsel %vm1796, 1, 0
        %v1906 = vsel %vm1797, 1, 0
        %v1907 = vsel %vm1798, 1, 0
        %v1908 = vsel %vm1799, 1, 0
        %v1909 = vsel %vm1800, 1, 0
        %v1910 = vsel %vm1801, 1, 0
        %v1911 = vsel %vm1802, 1, 0
        %v1912 = vsel %vm1803, 1, 0
        %v1913 = vsel %vm1804, 1, 0
        %v1914 = vsel %vm1805, 1, 0
        %v1915 = vsel %vm1806, 1, 0
        %v1916 = vsel %vm1807, 1, 0
        %v1917 = vsel %vm1808, 1, 0
        %v1918 = vsel %vm1809, 1, 0
        %v1919 = vsel %vm1810, 1, 0
        %v1920 = vsel %vm1811, 1, 0
        %v1921 = vsel %vm1812, 1, 0
        %v1922 = vsel %vm1813, 1, 0
        %v1923 = vsel %vm1814, 1, 0
        %v1924 = vsel %vm1815, 1, 0
        %v1925 = vsel %vm1816, 1, 0
        %v1926 = vsel %vm1817, 1, 0
        %v1927 = vsel %vm1818, 1, 0
        %v1928 = vsel %vm1819, 1, 0
        %vm1929 = vcmp.eq.s32.totalorder %v1893, 1
        %vm1930 = vcmp.eq.s32.totalorder %v1894, 1
        %vm1931 = vcmp.eq.s32.totalorder %v1895, 1
        %vm1932 = vcmp.eq.s32.totalorder %v1896, 1
        %vm1933 = vcmp.eq.s32.totalorder %v1897, 1
        %vm1934 = vcmp.eq.s32.totalorder %v1898, 1
        %vm1935 = vcmp.eq.s32.totalorder %v1899, 1
        %vm1936 = vcmp.eq.s32.totalorder %v1900, 1
        %vm1937 = vcmp.eq.s32.totalorder %v1901, 1
        %vm1938 = vcmp.eq.s32.totalorder %v1902, 1
        %vm1939 = vcmp.eq.s32.totalorder %v1903, 1
        %vm1940 = vcmp.eq.s32.totalorder %v1904, 1
        %vm1941 = vcmp.eq.s32.totalorder %v1905, 1
        %vm1942 = vcmp.eq.s32.totalorder %v1906, 1
        %vm1943 = vcmp.eq.s32.totalorder %v1907, 1
        %vm1944 = vcmp.eq.s32.totalorder %v1908, 1
        %vm1945 = vcmp.eq.s32.totalorder %v1909, 1
        %vm1946 = vcmp.eq.s32.totalorder %v1910, 1
        %vm1947 = vcmp.eq.s32.totalorder %v1911, 1
        %vm1948 = vcmp.eq.s32.totalorder %v1912, 1
        %vm1949 = vcmp.eq.s32.totalorder %v1913, 1
        %vm1950 = vcmp.eq.s32.totalorder %v1914, 1
        %vm1951 = vcmp.eq.s32.totalorder %v1915, 1
        %vm1952 = vcmp.eq.s32.totalorder %v1916, 1
        %vm1953 = vcmp.eq.s32.totalorder %v1917, 1
        %vm1954 = vcmp.eq.s32.totalorder %v1918, 1
        %vm1955 = vcmp.eq.s32.totalorder %v1919, 1
        %vm1956 = vcmp.eq.s32.totalorder %v1920, 1
        %vm1957 = vcmp.eq.s32.totalorder %v1921, 1
        %vm1958 = vcmp.eq.s32.totalorder %v1922, 1
        %vm1959 = vcmp.eq.s32.totalorder %v1923, 1
        %vm1960 = vcmp.eq.s32.totalorder %v1924, 1
        %vm1961 = vcmp.eq.s32.totalorder %v1925, 1
        %vm1962 = vcmp.eq.s32.totalorder %v1926, 1
        %vm1963 = vcmp.eq.s32.totalorder %v1927, 1
        %vm1964 = vcmp.eq.s32.totalorder %v1928, 1
        %v1965 = vsel %vm1929, %v1892, 0.0
        %v1966 = vsel %vm1930, %v1891, 0.0
        %v1967 = vsel %vm1931, %v1890, 0.0
        %v1968 = vsel %vm1932, %v1889, 0.0
        %v1969 = vsel %vm1933, %v1888, 0.0
        %v1970 = vsel %vm1934, %v1887, 0.0
        %v1971 = vsel %vm1935, %v1886, 0.0
        %v1972 = vsel %vm1936, %v1885, 0.0
        %v1973 = vsel %vm1937, %v1884, 0.0
        %v1974 = vsel %vm1938, %v1883, 0.0
        %v1975 = vsel %vm1939, %v1882, 0.0
        %v1976 = vsel %vm1940, %v1881, 0.0
        %v1977 = vsel %vm1941, %v1880, 0.0
        %v1978 = vsel %vm1942, %v1879, 0.0
        %v1979 = vsel %vm1943, %v1878, 0.0
        %v1980 = vsel %vm1944, %v1877, 0.0
        %v1981 = vsel %vm1945, %v1876, 0.0
        %v1982 = vsel %vm1946, %v1875, 0.0
        %v1983 = vsel %vm1947, %v1874, 0.0
        %v1984 = vsel %vm1948, %v1873, 0.0
        %v1985 = vsel %vm1949, %v1872, 0.0
        %v1986 = vsel %vm1950, %v1871, 0.0
        %v1987 = vsel %vm1951, %v1870, 0.0
        %v1988 = vsel %vm1952, %v1869, 0.0
        %v1989 = vsel %vm1953, %v1868, 0.0
        %v1990 = vsel %vm1954, %v1867, 0.0
        %v1991 = vsel %vm1955, %v1866, 0.0
        %v1992 = vsel %vm1956, %v1865, 0.0
        %v1993 = vsel %vm1957, %v1864, 0.0
        %v1994 = vsel %vm1958, %v1863, 0.0
        %v1995 = vsel %vm1959, %v1862, 0.0
        %v1996 = vsel %vm1960, %v1861, 0.0
        %v1997 = vsel %vm1961, %v1860, 0.0
        %v1998 = vsel %vm1962, %v1859, 0.0
        %v1999 = vsel %vm1963, %v1858, 0.0
        %v2000 = vsel %vm1964, %v1857, 0.0
        %vm2001 = vcmp.ne.s32.totalorder %v1452, 15
        %vm2002 = vcmp.ne.s32.totalorder %v1453, 15
        %vm2003 = vcmp.ne.s32.totalorder %v1454, 15
        %vm2004 = vcmp.ne.s32.totalorder %v1455, 15
        %vm2005 = vcmp.ne.s32.totalorder %v1456, 15
        %vm2006 = vcmp.ne.s32.totalorder %v1457, 15
        %vm2007 = vcmp.ne.s32.totalorder %v1458, 15
        %vm2008 = vcmp.ne.s32.totalorder %v1459, 15
        %vm2009 = vcmp.ne.s32.totalorder %v1460, 15
        %vm2010 = vcmp.ne.s32.totalorder %v1461, 15
        %vm2011 = vcmp.ne.s32.totalorder %v1462, 15
        %vm2012 = vcmp.ne.s32.totalorder %v1463, 15
        %vm2013 = vcmp.ne.s32.totalorder %v1464, 15
        %vm2014 = vcmp.ne.s32.totalorder %v1465, 15
        %vm2015 = vcmp.ne.s32.totalorder %v1466, 15
        %vm2016 = vcmp.ne.s32.totalorder %v1467, 15
        %vm2017 = vcmp.ne.s32.totalorder %v1468, 15
        %vm2018 = vcmp.ne.s32.totalorder %v1469, 15
        %vm2019 = vcmp.ne.s32.totalorder %v1470, 15
        %vm2020 = vcmp.ne.s32.totalorder %v1471, 15
        %vm2021 = vcmp.ne.s32.totalorder %v1472, 15
        %vm2022 = vcmp.ne.s32.totalorder %v1473, 15
        %vm2023 = vcmp.ne.s32.totalorder %v1474, 15
        %vm2024 = vcmp.ne.s32.totalorder %v1475, 15
        %vm2025 = vcmp.ne.s32.totalorder %v1476, 15
        %vm2026 = vcmp.ne.s32.totalorder %v1477, 15
        %vm2027 = vcmp.ne.s32.totalorder %v1478, 15
        %vm2028 = vcmp.ne.s32.totalorder %v1479, 15
        %vm2029 = vcmp.ne.s32.totalorder %v1480, 15
        %vm2030 = vcmp.ne.s32.totalorder %v1481, 15
        %vm2031 = vcmp.ne.s32.totalorder %v1482, 15
        %vm2032 = vcmp.ne.s32.totalorder %v1483, 15
        %vm2033 = vcmp.ne.s32.totalorder %v1484, 15
        %vm2034 = vcmp.ne.s32.totalorder %v1485, 15
        %vm2035 = vcmp.ne.s32.totalorder %v1486, 15
        %vm2036 = vcmp.ne.s32.totalorder %v1487, 15
        %v2037 = vrot.slane %v1748, 1
        %v2038 = vrot.slane %v1749, 1
        %v2039 = vrot.slane %v1750, 1
        %v2040 = vrot.slane %v1751, 1
        %v2041 = vrot.slane %v1752, 1
        %v2042 = vrot.slane %v1753, 1
        %v2043 = vrot.slane %v1754, 1
        %v2044 = vrot.slane %v1755, 1
        %v2045 = vrot.slane %v1756, 1
        %v2046 = vrot.slane %v1757, 1
        %v2047 = vrot.slane %v1758, 1
        %v2048 = vrot.slane %v1759, 1
        %v2049 = vrot.slane %v1760, 1
        %v2050 = vrot.slane %v1761, 1
        %v2051 = vrot.slane %v1762, 1
        %v2052 = vrot.slane %v1763, 1
        %v2053 = vrot.slane %v1764, 1
        %v2054 = vrot.slane %v1765, 1
        %v2055 = vrot.slane %v1766, 1
        %v2056 = vrot.slane %v1767, 1
        %v2057 = vrot.slane %v1768, 1
        %v2058 = vrot.slane %v1769, 1
        %v2059 = vrot.slane %v1770, 1
        %v2060 = vrot.slane %v1771, 1
        %v2061 = vrot.slane %v1772, 1
        %v2062 = vrot.slane %v1773, 1
        %v2063 = vrot.slane %v1774, 1
        %v2064 = vrot.slane %v1775, 1
        %v2065 = vrot.slane %v1776, 1
        %v2066 = vrot.slane %v1777, 1
        %v2067 = vrot.slane %v1778, 1
        %v2068 = vrot.slane %v1779, 1
        %v2069 = vrot.slane %v1780, 1
        %v2070 = vrot.slane %v1781, 1
        %v2071 = vrot.slane %v1782, 1
        %v2072 = vrot.slane %v1783, 1
        %vm2073 = vcmp.lt.s32.totalorder %v1020, 7
        %v2074 = vsel %vm2073, %v2071, %v2072
        %v2075 = vsel %vm2073, %v2070, %v2071
        %v2076 = vsel %vm2073, %v2069, %v2070
        %v2077 = vsel %vm2073, %v2068, %v2069
        %v2078 = vsel %vm2073, %v2067, %v2068
        %v2079 = vsel %vm2073, %v2066, %v2067
        %v2080 = vsel %vm2073, %v2065, %v2066
        %v2081 = vsel %vm2073, %v2064, %v2065
        %v2082 = vsel %vm2073, %v2063, %v2064
        %v2083 = vsel %vm2073, %v2062, %v2063
        %v2084 = vsel %vm2073, %v2061, %v2062
        %v2085 = vsel %vm2073, %v2060, %v2061
        %v2086 = vsel %vm2073, %v2059, %v2060
        %v2087 = vsel %vm2073, %v2058, %v2059
        %v2088 = vsel %vm2073, %v2057, %v2058
        %v2089 = vsel %vm2073, %v2056, %v2057
        %v2090 = vsel %vm2073, %v2055, %v2056
        %v2091 = vsel %vm2073, %v2054, %v2055
        %v2092 = vsel %vm2073, %v2053, %v2054
        %v2093 = vsel %vm2073, %v2052, %v2053
        %v2094 = vsel %vm2073, %v2051, %v2052
        %v2095 = vsel %vm2073, %v2050, %v2051
        %v2096 = vsel %vm2073, %v2049, %v2050
        %v2097 = vsel %vm2073, %v2048, %v2049
        %v2098 = vsel %vm2073, %v2047, %v2048
        %v2099 = vsel %vm2073, %v2046, %v2047
        %v2100 = vsel %vm2073, %v2045, %v2046
        %v2101 = vsel %vm2073, %v2044, %v2045
        %v2102 = vsel %vm2073, %v2043, %v2044
        %v2103 = vsel %vm2073, %v2042, %v2043
        %v2104 = vsel %vm2073, %v2041, %v2042
        %v2105 = vsel %vm2073, %v2040, %v2041
        %v2106 = vsel %vm2073, %v2039, %v2040
        %v2107 = vsel %vm2073, %v2038, %v2039
        %v2108 = vsel %vm2073, %v2037, %v2038
        %v2109 = vsel %vm2073, %v2072, %v2037
        %v2110 = vsel %vm2001, 1, 0
        %v2111 = vsel %vm2002, 1, 0
        %v2112 = vsel %vm2003, 1, 0
        %v2113 = vsel %vm2004, 1, 0
        %v2114 = vsel %vm2005, 1, 0
        %v2115 = vsel %vm2006, 1, 0
        %v2116 = vsel %vm2007, 1, 0
        %v2117 = vsel %vm2008, 1, 0
        %v2118 = vsel %vm2009, 1, 0
        %v2119 = vsel %vm2010, 1, 0
        %v2120 = vsel %vm2011, 1, 0
        %v2121 = vsel %vm2012, 1, 0
        %v2122 = vsel %vm2013, 1, 0
        %v2123 = vsel %vm2014, 1, 0
        %v2124 = vsel %vm2015, 1, 0
        %v2125 = vsel %vm2016, 1, 0
        %v2126 = vsel %vm2017, 1, 0
        %v2127 = vsel %vm2018, 1, 0
        %v2128 = vsel %vm2019, 1, 0
        %v2129 = vsel %vm2020, 1, 0
        %v2130 = vsel %vm2021, 1, 0
        %v2131 = vsel %vm2022, 1, 0
        %v2132 = vsel %vm2023, 1, 0
        %v2133 = vsel %vm2024, 1, 0
        %v2134 = vsel %vm2025, 1, 0
        %v2135 = vsel %vm2026, 1, 0
        %v2136 = vsel %vm2027, 1, 0
        %v2137 = vsel %vm2028, 1, 0
        %v2138 = vsel %vm2029, 1, 0
        %v2139 = vsel %vm2030, 1, 0
        %v2140 = vsel %vm2031, 1, 0
        %v2141 = vsel %vm2032, 1, 0
        %v2142 = vsel %vm2033, 1, 0
        %v2143 = vsel %vm2034, 1, 0
        %v2144 = vsel %vm2035, 1, 0
        %v2145 = vsel %vm2036, 1, 0
        %vm2146 = vcmp.eq.s32.totalorder %v2110, 1
        %vm2147 = vcmp.eq.s32.totalorder %v2111, 1
        %vm2148 = vcmp.eq.s32.totalorder %v2112, 1
        %vm2149 = vcmp.eq.s32.totalorder %v2113, 1
        %vm2150 = vcmp.eq.s32.totalorder %v2114, 1
        %vm2151 = vcmp.eq.s32.totalorder %v2115, 1
        %vm2152 = vcmp.eq.s32.totalorder %v2116, 1
        %vm2153 = vcmp.eq.s32.totalorder %v2117, 1
        %vm2154 = vcmp.eq.s32.totalorder %v2118, 1
        %vm2155 = vcmp.eq.s32.totalorder %v2119, 1
        %vm2156 = vcmp.eq.s32.totalorder %v2120, 1
        %vm2157 = vcmp.eq.s32.totalorder %v2121, 1
        %vm2158 = vcmp.eq.s32.totalorder %v2122, 1
        %vm2159 = vcmp.eq.s32.totalorder %v2123, 1
        %vm2160 = vcmp.eq.s32.totalorder %v2124, 1
        %vm2161 = vcmp.eq.s32.totalorder %v2125, 1
        %vm2162 = vcmp.eq.s32.totalorder %v2126, 1
        %vm2163 = vcmp.eq.s32.totalorder %v2127, 1
        %vm2164 = vcmp.eq.s32.totalorder %v2128, 1
        %vm2165 = vcmp.eq.s32.totalorder %v2129, 1
        %vm2166 = vcmp.eq.s32.totalorder %v2130, 1
        %vm2167 = vcmp.eq.s32.totalorder %v2131, 1
        %vm2168 = vcmp.eq.s32.totalorder %v2132, 1
        %vm2169 = vcmp.eq.s32.totalorder %v2133, 1
        %vm2170 = vcmp.eq.s32.totalorder %v2134, 1
        %vm2171 = vcmp.eq.s32.totalorder %v2135, 1
        %vm2172 = vcmp.eq.s32.totalorder %v2136, 1
        %vm2173 = vcmp.eq.s32.totalorder %v2137, 1
        %vm2174 = vcmp.eq.s32.totalorder %v2138, 1
        %vm2175 = vcmp.eq.s32.totalorder %v2139, 1
        %vm2176 = vcmp.eq.s32.totalorder %v2140, 1
        %vm2177 = vcmp.eq.s32.totalorder %v2141, 1
        %vm2178 = vcmp.eq.s32.totalorder %v2142, 1
        %vm2179 = vcmp.eq.s32.totalorder %v2143, 1
        %vm2180 = vcmp.eq.s32.totalorder %v2144, 1
        %vm2181 = vcmp.eq.s32.totalorder %v2145, 1
        %v2182 = vsel %vm2146, %v2108, 0.0
        %v2183 = vsel %vm2147, %v2107, 0.0
        %v2184 = vsel %vm2148, %v2106, 0.0
        %v2185 = vsel %vm2149, %v2105, 0.0
        %v2186 = vsel %vm2150, %v2104, 0.0
        %v2187 = vsel %vm2151, %v2103, 0.0
        %v2188 = vsel %vm2152, %v2102, 0.0
        %v2189 = vsel %vm2153, %v2101, 0.0
        %v2190 = vsel %vm2154, %v2100, 0.0
        %v2191 = vsel %vm2155, %v2099, 0.0
        %v2192 = vsel %vm2156, %v2098, 0.0
        %v2193 = vsel %vm2157, %v2097, 0.0
        %v2194 = vsel %vm2158, %v2096, 0.0
        %v2195 = vsel %vm2159, %v2095, 0.0
        %v2196 = vsel %vm2160, %v2094, 0.0
        %v2197 = vsel %vm2161, %v2093, 0.0
        %v2198 = vsel %vm2162, %v2092, 0.0
        %v2199 = vsel %vm2163, %v2091, 0.0
        %v2200 = vsel %vm2164, %v2090, 0.0
        %v2201 = vsel %vm2165, %v2089, 0.0
        %v2202 = vsel %vm2166, %v2088, 0.0
        %v2203 = vsel %vm2167, %v2087, 0.0
        %v2204 = vsel %vm2168, %v2086, 0.0
        %v2205 = vsel %vm2169, %v2085, 0.0
        %v2206 = vsel %vm2170, %v2084, 0.0
        %v2207 = vsel %vm2171, %v2083, 0.0
        %v2208 = vsel %vm2172, %v2082, 0.0
        %v2209 = vsel %vm2173, %v2081, 0.0
        %v2210 = vsel %vm2174, %v2080, 0.0
        %v2211 = vsel %vm2175, %v2079, 0.0
        %v2212 = vsel %vm2176, %v2078, 0.0
        %v2213 = vsel %vm2177, %v2077, 0.0
        %v2214 = vsel %vm2178, %v2076, 0.0
        %v2215 = vsel %vm2179, %v2075, 0.0
        %v2216 = vsel %vm2180, %v2074, 0.0
        %v2217 = vsel %vm2181, %v2109, 0.0
        %v2218 = vpack.c.bf16 %v1965, %v1965
        %v2219 = vpack.c.bf16 %v1966, %v1966
        %v2220 = vpack.c.bf16 %v1967, %v1967
        %v2221 = vpack.c.bf16 %v1968, %v1968
        %v2222 = vpack.c.bf16 %v1969, %v1969
        %v2223 = vpack.c.bf16 %v1970, %v1970
        %v2224 = vpack.c.bf16 %v1971, %v1971
        %v2225 = vpack.c.bf16 %v1972, %v1972
        %v2226 = vpack.c.bf16 %v1973, %v1973
        %v2227 = vpack.c.bf16 %v1974, %v1974
        %v2228 = vpack.c.bf16 %v1975, %v1975
        %v2229 = vpack.c.bf16 %v1976, %v1976
        %v2230 = vpack.c.bf16 %v1977, %v1977
        %v2231 = vpack.c.bf16 %v1978, %v1978
        %v2232 = vpack.c.bf16 %v1979, %v1979
        %v2233 = vpack.c.bf16 %v1980, %v1980
        %v2234 = vpack.c.bf16 %v1981, %v1981
        %v2235 = vpack.c.bf16 %v1982, %v1982
        %v2236 = vpack.c.bf16 %v1983, %v1983
        %v2237 = vpack.c.bf16 %v1984, %v1984
        %v2238 = vpack.c.bf16 %v1985, %v1985
        %v2239 = vpack.c.bf16 %v1986, %v1986
        %v2240 = vpack.c.bf16 %v1987, %v1987
        %v2241 = vpack.c.bf16 %v1988, %v1988
        %v2242 = vpack.c.bf16 %v1989, %v1989
        %v2243 = vpack.c.bf16 %v1990, %v1990
        %v2244 = vpack.c.bf16 %v1991, %v1991
        %v2245 = vpack.c.bf16 %v1992, %v1992
        %v2246 = vpack.c.bf16 %v1993, %v1993
        %v2247 = vpack.c.bf16 %v1994, %v1994
        %v2248 = vpack.c.bf16 %v1995, %v1995
        %v2249 = vpack.c.bf16 %v1996, %v1996
        %v2250 = vpack.c.bf16 %v1997, %v1997
        %v2251 = vpack.c.bf16 %v1998, %v1998
        %v2252 = vpack.c.bf16 %v1999, %v1999
        %v2253 = vpack.c.bf16 %v2000, %v2000
        %v2254 = vpack.c.bf16 %v1748, %v1748
        %v2255 = vpack.c.bf16 %v1749, %v1749
        %v2256 = vpack.c.bf16 %v1750, %v1750
        %v2257 = vpack.c.bf16 %v1751, %v1751
        %v2258 = vpack.c.bf16 %v1752, %v1752
        %v2259 = vpack.c.bf16 %v1753, %v1753
        %v2260 = vpack.c.bf16 %v1754, %v1754
        %v2261 = vpack.c.bf16 %v1755, %v1755
        %v2262 = vpack.c.bf16 %v1756, %v1756
        %v2263 = vpack.c.bf16 %v1757, %v1757
        %v2264 = vpack.c.bf16 %v1758, %v1758
        %v2265 = vpack.c.bf16 %v1759, %v1759
        %v2266 = vpack.c.bf16 %v1760, %v1760
        %v2267 = vpack.c.bf16 %v1761, %v1761
        %v2268 = vpack.c.bf16 %v1762, %v1762
        %v2269 = vpack.c.bf16 %v1763, %v1763
        %v2270 = vpack.c.bf16 %v1764, %v1764
        %v2271 = vpack.c.bf16 %v1765, %v1765
        %v2272 = vpack.c.bf16 %v1766, %v1766
        %v2273 = vpack.c.bf16 %v1767, %v1767
        %v2274 = vpack.c.bf16 %v1768, %v1768
        %v2275 = vpack.c.bf16 %v1769, %v1769
        %v2276 = vpack.c.bf16 %v1770, %v1770
        %v2277 = vpack.c.bf16 %v1771, %v1771
        %v2278 = vpack.c.bf16 %v1772, %v1772
        %v2279 = vpack.c.bf16 %v1773, %v1773
        %v2280 = vpack.c.bf16 %v1774, %v1774
        %v2281 = vpack.c.bf16 %v1775, %v1775
        %v2282 = vpack.c.bf16 %v1776, %v1776
        %v2283 = vpack.c.bf16 %v1777, %v1777
        %v2284 = vpack.c.bf16 %v1778, %v1778
        %v2285 = vpack.c.bf16 %v1779, %v1779
        %v2286 = vpack.c.bf16 %v1780, %v1780
        %v2287 = vpack.c.bf16 %v1781, %v1781
        %v2288 = vpack.c.bf16 %v1782, %v1782
        %v2289 = vpack.c.bf16 %v1783, %v1783
        %v2290 = vpack.c.bf16 %v2182, %v2182
        %v2291 = vpack.c.bf16 %v2183, %v2183
        %v2292 = vpack.c.bf16 %v2184, %v2184
        %v2293 = vpack.c.bf16 %v2185, %v2185
        %v2294 = vpack.c.bf16 %v2186, %v2186
        %v2295 = vpack.c.bf16 %v2187, %v2187
        %v2296 = vpack.c.bf16 %v2188, %v2188
        %v2297 = vpack.c.bf16 %v2189, %v2189
        %v2298 = vpack.c.bf16 %v2190, %v2190
        %v2299 = vpack.c.bf16 %v2191, %v2191
        %v2300 = vpack.c.bf16 %v2192, %v2192
        %v2301 = vpack.c.bf16 %v2193, %v2193
        %v2302 = vpack.c.bf16 %v2194, %v2194
        %v2303 = vpack.c.bf16 %v2195, %v2195
        %v2304 = vpack.c.bf16 %v2196, %v2196
        %v2305 = vpack.c.bf16 %v2197, %v2197
        %v2306 = vpack.c.bf16 %v2198, %v2198
        %v2307 = vpack.c.bf16 %v2199, %v2199
        %v2308 = vpack.c.bf16 %v2200, %v2200
        %v2309 = vpack.c.bf16 %v2201, %v2201
        %v2310 = vpack.c.bf16 %v2202, %v2202
        %v2311 = vpack.c.bf16 %v2203, %v2203
        %v2312 = vpack.c.bf16 %v2204, %v2204
        %v2313 = vpack.c.bf16 %v2205, %v2205
        %v2314 = vpack.c.bf16 %v2206, %v2206
        %v2315 = vpack.c.bf16 %v2207, %v2207
        %v2316 = vpack.c.bf16 %v2208, %v2208
        %v2317 = vpack.c.bf16 %v2209, %v2209
        %v2318 = vpack.c.bf16 %v2210, %v2210
        %v2319 = vpack.c.bf16 %v2211, %v2211
        %v2320 = vpack.c.bf16 %v2212, %v2212
        %v2321 = vpack.c.bf16 %v2213, %v2213
        %v2322 = vpack.c.bf16 %v2214, %v2214
        %v2323 = vpack.c.bf16 %v2215, %v2215
        %v2324 = vpack.c.bf16 %v2216, %v2216
        %v2325 = vpack.c.bf16 %v2217, %v2217
        %v2362 = vunpack.c.l.b16 %v2218
        %v2363 = vunpack.c.l.b16 %v2219
        %v2364 = vunpack.c.l.b16 %v2220
        %v2365 = vunpack.c.l.b16 %v2221
        %v2366 = vunpack.c.l.b16 %v2222
        %v2367 = vunpack.c.l.b16 %v2223
        %v2368 = vunpack.c.l.b16 %v2224
        %v2369 = vunpack.c.l.b16 %v2225
        %v2370 = vunpack.c.l.b16 %v2226
        %v2371 = vunpack.c.l.b16 %v2227
        %v2372 = vunpack.c.l.b16 %v2228
        %v2373 = vunpack.c.l.b16 %v2229
        %v2374 = vunpack.c.l.b16 %v2230
        %v2375 = vunpack.c.l.b16 %v2231
        %v2376 = vunpack.c.l.b16 %v2232
        %v2377 = vunpack.c.l.b16 %v2233
        %v2378 = vunpack.c.l.b16 %v2234
        %v2379 = vunpack.c.l.b16 %v2235
        %v2380 = vunpack.c.l.b16 %v2236
        %v2381 = vunpack.c.l.b16 %v2237
        %v2382 = vunpack.c.l.b16 %v2238
        %v2383 = vunpack.c.l.b16 %v2239
        %v2384 = vunpack.c.l.b16 %v2240
        %v2385 = vunpack.c.l.b16 %v2241
        %v2386 = vunpack.c.l.b16 %v2242
        %v2387 = vunpack.c.l.b16 %v2243
        %v2388 = vunpack.c.l.b16 %v2244
        %v2389 = vunpack.c.l.b16 %v2245
        %v2390 = vunpack.c.l.b16 %v2246
        %v2391 = vunpack.c.l.b16 %v2247
        %v2392 = vunpack.c.l.b16 %v2248
        %v2393 = vunpack.c.l.b16 %v2249
        %v2394 = vunpack.c.l.b16 %v2250
        %v2395 = vunpack.c.l.b16 %v2251
        %v2396 = vunpack.c.l.b16 %v2252
        %v2397 = vunpack.c.l.b16 %v2253
        %v2398 = vpack.c.b16 %v2363, %v2362
        %v2399 = vpack.c.b16 %v2365, %v2364
        %v2400 = vpack.c.b16 %v2367, %v2366
        %v2401 = vpack.c.b16 %v2369, %v2368
        %v2402 = vpack.c.b16 %v2371, %v2370
        %v2403 = vpack.c.b16 %v2373, %v2372
        %v2404 = vpack.c.b16 %v2375, %v2374
        %v2405 = vpack.c.b16 %v2377, %v2376
        %v2406 = vpack.c.b16 %v2379, %v2378
        %v2407 = vpack.c.b16 %v2381, %v2380
        %v2408 = vpack.c.b16 %v2383, %v2382
        %v2409 = vpack.c.b16 %v2385, %v2384
        %v2410 = vpack.c.b16 %v2387, %v2386
        %v2411 = vpack.c.b16 %v2389, %v2388
        %v2412 = vpack.c.b16 %v2391, %v2390
        %v2413 = vpack.c.b16 %v2393, %v2392
        %v2414 = vpack.c.b16 %v2395, %v2394
        %v2415 = vpack.c.b16 %v2397, %v2396
        %v2470 = vunpack.c.l.b16 %v2254
        %v2471 = vunpack.c.l.b16 %v2255
        %v2472 = vunpack.c.l.b16 %v2256
        %v2473 = vunpack.c.l.b16 %v2257
        %v2474 = vunpack.c.l.b16 %v2258
        %v2475 = vunpack.c.l.b16 %v2259
        %v2476 = vunpack.c.l.b16 %v2260
        %v2477 = vunpack.c.l.b16 %v2261
        %v2478 = vunpack.c.l.b16 %v2262
        %v2479 = vunpack.c.l.b16 %v2263
        %v2480 = vunpack.c.l.b16 %v2264
        %v2481 = vunpack.c.l.b16 %v2265
        %v2482 = vunpack.c.l.b16 %v2266
        %v2483 = vunpack.c.l.b16 %v2267
        %v2484 = vunpack.c.l.b16 %v2268
        %v2485 = vunpack.c.l.b16 %v2269
        %v2486 = vunpack.c.l.b16 %v2270
        %v2487 = vunpack.c.l.b16 %v2271
        %v2488 = vunpack.c.l.b16 %v2272
        %v2489 = vunpack.c.l.b16 %v2273
        %v2490 = vunpack.c.l.b16 %v2274
        %v2491 = vunpack.c.l.b16 %v2275
        %v2492 = vunpack.c.l.b16 %v2276
        %v2493 = vunpack.c.l.b16 %v2277
        %v2494 = vunpack.c.l.b16 %v2278
        %v2495 = vunpack.c.l.b16 %v2279
        %v2496 = vunpack.c.l.b16 %v2280
        %v2497 = vunpack.c.l.b16 %v2281
        %v2498 = vunpack.c.l.b16 %v2282
        %v2499 = vunpack.c.l.b16 %v2283
        %v2500 = vunpack.c.l.b16 %v2284
        %v2501 = vunpack.c.l.b16 %v2285
        %v2502 = vunpack.c.l.b16 %v2286
        %v2503 = vunpack.c.l.b16 %v2287
        %v2504 = vunpack.c.l.b16 %v2288
        %v2505 = vunpack.c.l.b16 %v2289
        %v2506 = vpack.c.b16 %v2471, %v2470
        %v2507 = vpack.c.b16 %v2473, %v2472
        %v2508 = vpack.c.b16 %v2475, %v2474
        %v2509 = vpack.c.b16 %v2477, %v2476
        %v2510 = vpack.c.b16 %v2479, %v2478
        %v2511 = vpack.c.b16 %v2481, %v2480
        %v2512 = vpack.c.b16 %v2483, %v2482
        %v2513 = vpack.c.b16 %v2485, %v2484
        %v2514 = vpack.c.b16 %v2487, %v2486
        %v2515 = vpack.c.b16 %v2489, %v2488
        %v2516 = vpack.c.b16 %v2491, %v2490
        %v2517 = vpack.c.b16 %v2493, %v2492
        %v2518 = vpack.c.b16 %v2495, %v2494
        %v2519 = vpack.c.b16 %v2497, %v2496
        %v2520 = vpack.c.b16 %v2499, %v2498
        %v2521 = vpack.c.b16 %v2501, %v2500
        %v2522 = vpack.c.b16 %v2503, %v2502
        %v2523 = vpack.c.b16 %v2505, %v2504
        %v2578 = vunpack.c.l.b16 %v2290
        %v2579 = vunpack.c.l.b16 %v2291
        %v2580 = vunpack.c.l.b16 %v2292
        %v2581 = vunpack.c.l.b16 %v2293
        %v2582 = vunpack.c.l.b16 %v2294
        %v2583 = vunpack.c.l.b16 %v2295
        %v2584 = vunpack.c.l.b16 %v2296
        %v2585 = vunpack.c.l.b16 %v2297
        %v2586 = vunpack.c.l.b16 %v2298
        %v2587 = vunpack.c.l.b16 %v2299
        %v2588 = vunpack.c.l.b16 %v2300
        %v2589 = vunpack.c.l.b16 %v2301
        %v2590 = vunpack.c.l.b16 %v2302
        %v2591 = vunpack.c.l.b16 %v2303
        %v2592 = vunpack.c.l.b16 %v2304
        %v2593 = vunpack.c.l.b16 %v2305
        %v2594 = vunpack.c.l.b16 %v2306
        %v2595 = vunpack.c.l.b16 %v2307
        %v2596 = vunpack.c.l.b16 %v2308
        %v2597 = vunpack.c.l.b16 %v2309
        %v2598 = vunpack.c.l.b16 %v2310
        %v2599 = vunpack.c.l.b16 %v2311
        %v2600 = vunpack.c.l.b16 %v2312
        %v2601 = vunpack.c.l.b16 %v2313
        %v2602 = vunpack.c.l.b16 %v2314
        %v2603 = vunpack.c.l.b16 %v2315
        %v2604 = vunpack.c.l.b16 %v2316
        %v2605 = vunpack.c.l.b16 %v2317
        %v2606 = vunpack.c.l.b16 %v2318
        %v2607 = vunpack.c.l.b16 %v2319
        %v2608 = vunpack.c.l.b16 %v2320
        %v2609 = vunpack.c.l.b16 %v2321
        %v2610 = vunpack.c.l.b16 %v2322
        %v2611 = vunpack.c.l.b16 %v2323
        %v2612 = vunpack.c.l.b16 %v2324
        %v2613 = vunpack.c.l.b16 %v2325
        %v2614 = vpack.c.b16 %v2579, %v2578
        %v2615 = vpack.c.b16 %v2581, %v2580
        %v2616 = vpack.c.b16 %v2583, %v2582
        %v2617 = vpack.c.b16 %v2585, %v2584
        %v2618 = vpack.c.b16 %v2587, %v2586
        %v2619 = vpack.c.b16 %v2589, %v2588
        %v2620 = vpack.c.b16 %v2591, %v2590
        %v2621 = vpack.c.b16 %v2593, %v2592
        %v2622 = vpack.c.b16 %v2595, %v2594
        %v2623 = vpack.c.b16 %v2597, %v2596
        %v2624 = vpack.c.b16 %v2599, %v2598
        %v2625 = vpack.c.b16 %v2601, %v2600
        %v2626 = vpack.c.b16 %v2603, %v2602
        %v2627 = vpack.c.b16 %v2605, %v2604
        %v2628 = vpack.c.b16 %v2607, %v2606
        %v2629 = vpack.c.b16 %v2609, %v2608
        %v2630 = vpack.c.b16 %v2611, %v2610
        %v2631 = vpack.c.b16 %v2613, %v2612
        %v2650 = vld [vmem:[#allocation8] sm:$0xf]
        %v2651 = vld [vmem:[#allocation8 + $0x4] sm:$0xf]
        %v2652 = vld [vmem:[#allocation8 + $0x8] sm:$0xf]
        %v2653 = vld [vmem:[#allocation8 + $0xc] sm:$0xf]
        %v2654 = vld [vmem:[#allocation8 + $0x10] sm:$0xf]
        %v2655 = vld [vmem:[#allocation8 + $0x14] sm:$0xf]
        %v2656 = vld [vmem:[#allocation8 + $0x18] sm:$0xf]
        %v2657 = vld [vmem:[#allocation8 + $0x1c] sm:$0xf]
        %v2658 = vld [vmem:[#allocation8 + $0x20] sm:$0xf]
        %v2659 = vld [vmem:[#allocation8 + $0x24] sm:$0xf]
        %v2660 = vld [vmem:[#allocation8 + $0x28] sm:$0xf]
        %v2661 = vld [vmem:[#allocation8 + $0x2c] sm:$0xf]
        %v2662 = vld [vmem:[#allocation8 + $0x30] sm:$0xf]
        %v2663 = vld [vmem:[#allocation8 + $0x34] sm:$0xf]
        %v2664 = vld [vmem:[#allocation8 + $0x38] sm:$0xf]
        %v2665 = vld [vmem:[#allocation8 + $0x3c] sm:$0xf]
        %v2666 = vld [vmem:[#allocation8 + $0x40] sm:$0xf]
        %v2667 = vld [vmem:[#allocation8 + $0x44] sm:$0xf]
        %v2668 = vld [vmem:[#allocation8 + $0x48] sm:$0xf]
        %v2669 = vld [vmem:[#allocation8 + $0x4c] sm:$0xf]
        %v2670 = vld [vmem:[#allocation8 + $0x50] sm:$0xf]
        %v2671 = vld [vmem:[#allocation8 + $0x54] sm:$0xf]
        %v2672 = vld [vmem:[#allocation8 + $0x58] sm:$0xf]
        %v2673 = vld [vmem:[#allocation8 + $0x5c] sm:$0xf]
        %v2674 = vld [vmem:[#allocation8 + $0x60] sm:$0xf]
        %v2675 = vld [vmem:[#allocation8 + $0x64] sm:$0xf]
        %v2676 = vld [vmem:[#allocation8 + $0x68] sm:$0xf]
        %v2677 = vld [vmem:[#allocation8 + $0x6c] sm:$0xf]
        %v2678 = vld [vmem:[#allocation8 + $0x70] sm:$0xf]
        %v2679 = vld [vmem:[#allocation8 + $0x74] sm:$0xf]
        %v2680 = vld [vmem:[#allocation8 + $0x78] sm:$0xf]
        %v2681 = vld [vmem:[#allocation8 + $0x7c] sm:$0xf]
        %v2682 = vld [vmem:[#allocation8 + $0x80] sm:$0xf]
        %v2683 = vld [vmem:[#allocation8 + $0x84] sm:$0xf]
        %v2684 = vld [vmem:[#allocation8 + $0x88] sm:$0xf]
        %v2685 = vld [vmem:[#allocation8 + $0x8c] sm:$0xf]
        %v2686 = vld [vmem:[#allocation8 + $0x90] sm:$0xf]
        %v2687 = vld [vmem:[#allocation8 + $0x94] sm:$0xf]
        %v2688 = vld [vmem:[#allocation8 + $0x98] sm:$0xf]
        %v2689 = vld [vmem:[#allocation8 + $0x9c] sm:$0xf]
        %v2690 = vld [vmem:[#allocation8 + $0xa0] sm:$0xf]
        %v2691 = vld [vmem:[#allocation8 + $0xa4] sm:$0xf]
        %v2692 = vld [vmem:[#allocation8 + $0xa8] sm:$0xf]
        %v2693 = vld [vmem:[#allocation8 + $0xac] sm:$0xf]
        %v2694 = vld [vmem:[#allocation8 + $0xb0] sm:$0xf]
        %v2695 = vld [vmem:[#allocation8 + $0xb4] sm:$0xf]
        %v2696 = vld [vmem:[#allocation8 + $0xb8] sm:$0xf]
        %v2697 = vld [vmem:[#allocation8 + $0xbc] sm:$0xf]
        %s2698 = scalar_lea.vmem [#allocation8], 192
        %v2699 = vld [vmem:[%s2698] sm:$0xf]
        %v2700 = vld [vmem:[%s2698 + $0x4] sm:$0xf]
        %v2701 = vld [vmem:[%s2698 + $0x8] sm:$0xf]
        %v2702 = vld [vmem:[%s2698 + $0xc] sm:$0xf]
        %v2703 = vld [vmem:[%s2698 + $0x10] sm:$0xf]
        %v2704 = vld [vmem:[%s2698 + $0x14] sm:$0xf]
        %v2705 = vld [vmem:[%s2698 + $0x18] sm:$0xf]
        %v2706 = vld [vmem:[%s2698 + $0x1c] sm:$0xf]
        %v2707 = vld [vmem:[%s2698 + $0x20] sm:$0xf]
        %v2708 = vld [vmem:[%s2698 + $0x24] sm:$0xf]
        %v2709 = vld [vmem:[%s2698 + $0x28] sm:$0xf]
        %v2710 = vld [vmem:[%s2698 + $0x2c] sm:$0xf]
        %v2711 = vld [vmem:[%s2698 + $0x30] sm:$0xf]
        %v2712 = vld [vmem:[%s2698 + $0x34] sm:$0xf]
        %v2713 = vld [vmem:[%s2698 + $0x38] sm:$0xf]
        %v2714 = vld [vmem:[%s2698 + $0x3c] sm:$0xf]
        %v2715 = vld [vmem:[%s2698 + $0x40] sm:$0xf]
        %v2716 = vld [vmem:[%s2698 + $0x44] sm:$0xf]
        %v2717 = vld [vmem:[%s2698 + $0x48] sm:$0xf]
        %v2718 = vld [vmem:[%s2698 + $0x4c] sm:$0xf]
        %v2719 = vld [vmem:[%s2698 + $0x50] sm:$0xf]
        %v2720 = vld [vmem:[%s2698 + $0x54] sm:$0xf]
        %v2721 = vld [vmem:[%s2698 + $0x58] sm:$0xf]
        %v2722 = vld [vmem:[%s2698 + $0x5c] sm:$0xf]
        %v2723 = vld [vmem:[%s2698 + $0x60] sm:$0xf]
        %v2724 = vld [vmem:[%s2698 + $0x64] sm:$0xf]
        %v2725 = vld [vmem:[%s2698 + $0x68] sm:$0xf]
        %v2726 = vld [vmem:[%s2698 + $0x6c] sm:$0xf]
        %v2727 = vld [vmem:[%s2698 + $0x70] sm:$0xf]
        %v2728 = vld [vmem:[%s2698 + $0x74] sm:$0xf]
        %v2729 = vld [vmem:[%s2698 + $0x78] sm:$0xf]
        %v2730 = vld [vmem:[%s2698 + $0x7c] sm:$0xf]
        %v2731 = vld [vmem:[%s2698 + $0x80] sm:$0xf]
        %v2732 = vld [vmem:[%s2698 + $0x84] sm:$0xf]
        %v2733 = vld [vmem:[%s2698 + $0x88] sm:$0xf]
        %v2734 = vld [vmem:[%s2698 + $0x8c] sm:$0xf]
        %v2735 = vld [vmem:[%s2698 + $0x90] sm:$0xf]
        %v2736 = vld [vmem:[%s2698 + $0x94] sm:$0xf]
        %v2737 = vld [vmem:[%s2698 + $0x98] sm:$0xf]
        %v2738 = vld [vmem:[%s2698 + $0x9c] sm:$0xf]
        %v2739 = vld [vmem:[%s2698 + $0xa0] sm:$0xf]
        %v2740 = vld [vmem:[%s2698 + $0xa4] sm:$0xf]
        %v2741 = vld [vmem:[%s2698 + $0xa8] sm:$0xf]
        %v2742 = vld [vmem:[%s2698 + $0xac] sm:$0xf]
        %v2743 = vld [vmem:[%s2698 + $0xb0] sm:$0xf]
        %v2744 = vld [vmem:[%s2698 + $0xb4] sm:$0xf]
        %v2745 = vld [vmem:[%s2698 + $0xb8] sm:$0xf]
        %v2746 = vld [vmem:[%s2698 + $0xbc] sm:$0xf]
        %v2795 = vunpack.c.l.b16 %v2699
        %v2796 = vunpack.c.l.b16 %v2700
        %v2797 = vunpack.c.l.b16 %v2701
        %v2798 = vunpack.c.l.b16 %v2702
        %v2799 = vunpack.c.l.b16 %v2703
        %v2800 = vunpack.c.l.b16 %v2704
        %v2801 = vunpack.c.l.b16 %v2705
        %v2802 = vunpack.c.l.b16 %v2706
        %v2803 = vunpack.c.l.b16 %v2707
        %v2804 = vunpack.c.l.b16 %v2708
        %v2805 = vunpack.c.l.b16 %v2709
        %v2806 = vunpack.c.l.b16 %v2710
        %v2807 = vunpack.c.l.b16 %v2711
        %v2808 = vunpack.c.l.b16 %v2712
        %v2809 = vunpack.c.l.b16 %v2713
        %v2810 = vunpack.c.l.b16 %v2714
        %v2811 = vunpack.c.l.b16 %v2715
        %v2812 = vunpack.c.l.b16 %v2716
        %v2813 = vunpack.c.l.b16 %v2717
        %v2814 = vunpack.c.l.b16 %v2718
        %v2815 = vunpack.c.l.b16 %v2719
        %v2816 = vunpack.c.l.b16 %v2720
        %v2817 = vunpack.c.l.b16 %v2721
        %v2818 = vunpack.c.l.b16 %v2722
        %v2819 = vunpack.c.l.b16 %v2723
        %v2820 = vunpack.c.l.b16 %v2724
        %v2821 = vunpack.c.l.b16 %v2725
        %v2822 = vunpack.c.l.b16 %v2726
        %v2823 = vunpack.c.l.b16 %v2727
        %v2824 = vunpack.c.l.b16 %v2728
        %v2825 = vunpack.c.l.b16 %v2729
        %v2826 = vunpack.c.l.b16 %v2730
        %v2827 = vunpack.c.l.b16 %v2731
        %v2828 = vunpack.c.l.b16 %v2732
        %v2829 = vunpack.c.l.b16 %v2733
        %v2830 = vunpack.c.l.b16 %v2734
        %v2831 = vunpack.c.l.b16 %v2735
        %v2832 = vunpack.c.l.b16 %v2736
        %v2833 = vunpack.c.l.b16 %v2737
        %v2834 = vunpack.c.l.b16 %v2738
        %v2835 = vunpack.c.l.b16 %v2739
        %v2836 = vunpack.c.l.b16 %v2740
        %v2837 = vunpack.c.l.b16 %v2741
        %v2838 = vunpack.c.l.b16 %v2742
        %v2839 = vunpack.c.l.b16 %v2743
        %v2840 = vunpack.c.l.b16 %v2744
        %v2841 = vunpack.c.l.b16 %v2745
        %v2842 = vunpack.c.l.b16 %v2746
        %v2843 = vpack.c.b16 %v2796, %v2795
        %v2844 = vpack.c.b16 %v2798, %v2797
        %v2845 = vpack.c.b16 %v2800, %v2799
        %v2846 = vpack.c.b16 %v2802, %v2801
        %v2847 = vpack.c.b16 %v2804, %v2803
        %v2848 = vpack.c.b16 %v2806, %v2805
        %v2849 = vpack.c.b16 %v2808, %v2807
        %v2850 = vpack.c.b16 %v2810, %v2809
        %v2851 = vpack.c.b16 %v2812, %v2811
        %v2852 = vpack.c.b16 %v2814, %v2813
        %v2853 = vpack.c.b16 %v2816, %v2815
        %v2854 = vpack.c.b16 %v2818, %v2817
        %v2855 = vpack.c.b16 %v2820, %v2819
        %v2856 = vpack.c.b16 %v2822, %v2821
        %v2857 = vpack.c.b16 %v2824, %v2823
        %v2858 = vpack.c.b16 %v2826, %v2825
        %v2859 = vpack.c.b16 %v2828, %v2827
        %v2860 = vpack.c.b16 %v2830, %v2829
        %v2861 = vpack.c.b16 %v2832, %v2831
        %v2862 = vpack.c.b16 %v2834, %v2833
        %v2863 = vpack.c.b16 %v2836, %v2835
        %v2864 = vpack.c.b16 %v2838, %v2837
        %v2865 = vpack.c.b16 %v2840, %v2839
        %v2866 = vpack.c.b16 %v2842, %v2841
        %2891 = vmatpush.bf16.msra.mxu0 %v2850
        %2892 = vmatpush.bf16.msra.mxu0 %v2849
        %2893 = vmatpush.bf16.msra.mxu0 %v2848
        %2894 = vmatpush.bf16.msra.mxu0 %v2847
        %2895 = vmatpush.bf16.msra.mxu0 %v2846
        %2896 = vmatpush.bf16.msra.mxu0 %v2845
        %2897 = vmatpush.bf16.msra.mxu0 %v2844
        %2898 = vmatpush.bf16.msra.mxu0 %v2843
        %2899 = vmatmul.bf16.gmra.mxu0 %v2399
        %v2900 = vpop.f32.mrf.mxu0
        %v2901 = vadd.f32 0.0, %v2900
        %v2902 = vpop.f32.mrf.mxu0
        %v2903 = vadd.f32 0.0, %v2902
        %2904 = vmatmul.bf16.gmra.mxu0 %v2400
        %v2905 = vpop.f32.mrf.mxu0
        %v2906 = vadd.f32 0.0, %v2905
        %v2907 = vpop.f32.mrf.mxu0
        %v2908 = vadd.f32 0.0, %v2907
        %2909 = vmatmul.bf16.gmra.mxu0 %v2401
        %v2910 = vpop.f32.mrf.mxu0
        %v2911 = vadd.f32 0.0, %v2910
        %v2912 = vpop.f32.mrf.mxu0
        %v2913 = vadd.f32 0.0, %v2912
        %2914 = vmatmul.bf16.gmra.mxu0 %v2402
        %v2915 = vpop.f32.mrf.mxu0
        %v2916 = vadd.f32 0.0, %v2915
        %v2917 = vpop.f32.mrf.mxu0
        %v2918 = vadd.f32 0.0, %v2917
        %2919 = vmatmul.bf16.gmra.mxu0 %v2403
        %v2920 = vpop.f32.mrf.mxu0
        %v2921 = vadd.f32 0.0, %v2920
        %v2922 = vpop.f32.mrf.mxu0
        %v2923 = vadd.f32 0.0, %v2922
        %2924 = vmatmul.bf16.gmra.mxu0 %v2404
        %v2925 = vpop.f32.mrf.mxu0
        %v2926 = vadd.f32 0.0, %v2925
        %v2927 = vpop.f32.mrf.mxu0
        %v2928 = vadd.f32 0.0, %v2927
        %2929 = vmatmul.bf16.gmra.mxu0 %v2405
        %v2930 = vpop.f32.mrf.mxu0
        %v2931 = vadd.f32 0.0, %v2930
        %v2932 = vpop.f32.mrf.mxu0
        %v2933 = vadd.f32 0.0, %v2932
        %2934 = vmatmul.bf16.gmra.mxu0 %v2406
        %v2935 = vpop.f32.mrf.mxu0
        %v2936 = vadd.f32 0.0, %v2935
        %v2937 = vpop.f32.mrf.mxu0
        %v2938 = vadd.f32 0.0, %v2937
        %2939 = vmatmul.bf16.gmra.mxu0 %v2407
        %v2940 = vpop.f32.mrf.mxu0
        %v2941 = vadd.f32 0.0, %v2940
        %v2942 = vpop.f32.mrf.mxu0
        %v2943 = vadd.f32 0.0, %v2942
        %2944 = vmatmul.bf16.gmra.mxu0 %v2408
        %v2945 = vpop.f32.mrf.mxu0
        %v2946 = vadd.f32 0.0, %v2945
        %v2947 = vpop.f32.mrf.mxu0
        %v2948 = vadd.f32 0.0, %v2947
        %2949 = vmatmul.bf16.gmra.mxu0 %v2409
        %v2950 = vpop.f32.mrf.mxu0
        %v2951 = vadd.f32 0.0, %v2950
        %v2952 = vpop.f32.mrf.mxu0
        %v2953 = vadd.f32 0.0, %v2952
        %2954 = vmatmul.bf16.gmra.mxu0 %v2410
        %v2955 = vpop.f32.mrf.mxu0
        %v2956 = vadd.f32 0.0, %v2955
        %v2957 = vpop.f32.mrf.mxu0
        %v2958 = vadd.f32 0.0, %v2957
        %2959 = vmatmul.bf16.gmra.mxu0 %v2411
        %v2960 = vpop.f32.mrf.mxu0
        %v2961 = vadd.f32 0.0, %v2960
        %v2962 = vpop.f32.mrf.mxu0
        %v2963 = vadd.f32 0.0, %v2962
        %2964 = vmatmul.bf16.gmra.mxu0 %v2412
        %v2965 = vpop.f32.mrf.mxu0
        %v2966 = vadd.f32 0.0, %v2965
        %v2967 = vpop.f32.mrf.mxu0
        %v2968 = vadd.f32 0.0, %v2967
        %2969 = vmatmul.bf16.gmra.mxu0 %v2413
        %v2970 = vpop.f32.mrf.mxu0
        %v2971 = vadd.f32 0.0, %v2970
        %v2972 = vpop.f32.mrf.mxu0
        %v2973 = vadd.f32 0.0, %v2972
        %2974 = vmatmul.bf16.gmra.mxu0 %v2414
        %v2975 = vpop.f32.mrf.mxu0
        %v2976 = vadd.f32 0.0, %v2975
        %v2977 = vpop.f32.mrf.mxu0
        %v2978 = vadd.f32 0.0, %v2977
        %2979 = vdwg.mxu0
        %2980 = vmatpush.bf16.msra.mxu0 %v2858
        %2981 = vmatpush.bf16.msra.mxu0 %v2857
        %2982 = vmatpush.bf16.msra.mxu0 %v2856
        %2983 = vmatpush.bf16.msra.mxu0 %v2855
        %2984 = vmatpush.bf16.msra.mxu0 %v2854
        %2985 = vmatpush.bf16.msra.mxu0 %v2853
        %2986 = vmatpush.bf16.msra.mxu0 %v2852
        %2987 = vmatpush.bf16.msra.mxu0 %v2851
        %2988 = vmatmul.bf16.gmra.mxu0 %v2507
        %v2989 = vpop.f32.mrf.mxu0
        %v2990 = vadd.f32 %v2901, %v2989
        %v2991 = vpop.f32.mrf.mxu0
        %v2992 = vadd.f32 %v2903, %v2991
        %2993 = vmatmul.bf16.gmra.mxu0 %v2508
        %v2994 = vpop.f32.mrf.mxu0
        %v2995 = vadd.f32 %v2906, %v2994
        %v2996 = vpop.f32.mrf.mxu0
        %v2997 = vadd.f32 %v2908, %v2996
        %2998 = vmatmul.bf16.gmra.mxu0 %v2509
        %v2999 = vpop.f32.mrf.mxu0
        %v3000 = vadd.f32 %v2911, %v2999
        %v3001 = vpop.f32.mrf.mxu0
        %v3002 = vadd.f32 %v2913, %v3001
        %3003 = vmatmul.bf16.gmra.mxu0 %v2510
        %v3004 = vpop.f32.mrf.mxu0
        %v3005 = vadd.f32 %v2916, %v3004
        %v3006 = vpop.f32.mrf.mxu0
        %v3007 = vadd.f32 %v2918, %v3006
        %3008 = vmatmul.bf16.gmra.mxu0 %v2511
        %v3009 = vpop.f32.mrf.mxu0
        %v3010 = vadd.f32 %v2921, %v3009
        %v3011 = vpop.f32.mrf.mxu0
        %v3012 = vadd.f32 %v2923, %v3011
        %3013 = vmatmul.bf16.gmra.mxu0 %v2512
        %v3014 = vpop.f32.mrf.mxu0
        %v3015 = vadd.f32 %v2926, %v3014
        %v3016 = vpop.f32.mrf.mxu0
        %v3017 = vadd.f32 %v2928, %v3016
        %3018 = vmatmul.bf16.gmra.mxu0 %v2513
        %v3019 = vpop.f32.mrf.mxu0
        %v3020 = vadd.f32 %v2931, %v3019
        %v3021 = vpop.f32.mrf.mxu0
        %v3022 = vadd.f32 %v2933, %v3021
        %3023 = vmatmul.bf16.gmra.mxu0 %v2514
        %v3024 = vpop.f32.mrf.mxu0
        %v3025 = vadd.f32 %v2936, %v3024
        %v3026 = vpop.f32.mrf.mxu0
        %v3027 = vadd.f32 %v2938, %v3026
        %3028 = vmatmul.bf16.gmra.mxu0 %v2515
        %v3029 = vpop.f32.mrf.mxu0
        %v3030 = vadd.f32 %v2941, %v3029
        %v3031 = vpop.f32.mrf.mxu0
        %v3032 = vadd.f32 %v2943, %v3031
        %3033 = vmatmul.bf16.gmra.mxu0 %v2516
        %v3034 = vpop.f32.mrf.mxu0
        %v3035 = vadd.f32 %v2946, %v3034
        %v3036 = vpop.f32.mrf.mxu0
        %v3037 = vadd.f32 %v2948, %v3036
        %3038 = vmatmul.bf16.gmra.mxu0 %v2517
        %v3039 = vpop.f32.mrf.mxu0
        %v3040 = vadd.f32 %v2951, %v3039
        %v3041 = vpop.f32.mrf.mxu0
        %v3042 = vadd.f32 %v2953, %v3041
        %3043 = vmatmul.bf16.gmra.mxu0 %v2518
        %v3044 = vpop.f32.mrf.mxu0
        %v3045 = vadd.f32 %v2956, %v3044
        %v3046 = vpop.f32.mrf.mxu0
        %v3047 = vadd.f32 %v2958, %v3046
        %3048 = vmatmul.bf16.gmra.mxu0 %v2519
        %v3049 = vpop.f32.mrf.mxu0
        %v3050 = vadd.f32 %v2961, %v3049
        %v3051 = vpop.f32.mrf.mxu0
        %v3052 = vadd.f32 %v2963, %v3051
        %3053 = vmatmul.bf16.gmra.mxu0 %v2520
        %v3054 = vpop.f32.mrf.mxu0
        %v3055 = vadd.f32 %v2966, %v3054
        %v3056 = vpop.f32.mrf.mxu0
        %v3057 = vadd.f32 %v2968, %v3056
        %3058 = vmatmul.bf16.gmra.mxu0 %v2521
        %v3059 = vpop.f32.mrf.mxu0
        %v3060 = vadd.f32 %v2971, %v3059
        %v3061 = vpop.f32.mrf.mxu0
        %v3062 = vadd.f32 %v2973, %v3061
        %3063 = vmatmul.bf16.gmra.mxu0 %v2522
        %v3064 = vpop.f32.mrf.mxu0
        %v3065 = vadd.f32 %v2976, %v3064
        %v3066 = vpop.f32.mrf.mxu0
        %v3067 = vadd.f32 %v2978, %v3066
        %3068 = vdwg.mxu0
        %3069 = vmatpush.bf16.msra.mxu0 %v2866
        %3070 = vmatpush.bf16.msra.mxu0 %v2865
        %3071 = vmatpush.bf16.msra.mxu0 %v2864
        %3072 = vmatpush.bf16.msra.mxu0 %v2863
        %3073 = vmatpush.bf16.msra.mxu0 %v2862
        %3074 = vmatpush.bf16.msra.mxu0 %v2861
        %3075 = vmatpush.bf16.msra.mxu0 %v2860
        %3076 = vmatpush.bf16.msra.mxu0 %v2859
        %3077 = vmatmul.bf16.gmra.mxu0 %v2615
        %v3078 = vpop.f32.mrf.mxu0
        %v3079 = vadd.f32 %v2990, %v3078
        %v3080 = vpop.f32.mrf.mxu0
        %v3081 = vadd.f32 %v2992, %v3080
        %3082 = vmatmul.bf16.gmra.mxu0 %v2616
        %v3083 = vpop.f32.mrf.mxu0
        %v3084 = vadd.f32 %v2995, %v3083
        %v3085 = vpop.f32.mrf.mxu0
        %v3086 = vadd.f32 %v2997, %v3085
        %3087 = vmatmul.bf16.gmra.mxu0 %v2617
        %v3088 = vpop.f32.mrf.mxu0
        %v3089 = vadd.f32 %v3000, %v3088
        %v3090 = vpop.f32.mrf.mxu0
        %v3091 = vadd.f32 %v3002, %v3090
        %3092 = vmatmul.bf16.gmra.mxu0 %v2618
        %v3093 = vpop.f32.mrf.mxu0
        %v3094 = vadd.f32 %v3005, %v3093
        %v3095 = vpop.f32.mrf.mxu0
        %v3096 = vadd.f32 %v3007, %v3095
        %3097 = vmatmul.bf16.gmra.mxu0 %v2619
        %v3098 = vpop.f32.mrf.mxu0
        %v3099 = vadd.f32 %v3010, %v3098
        %v3100 = vpop.f32.mrf.mxu0
        %v3101 = vadd.f32 %v3012, %v3100
        %3102 = vmatmul.bf16.gmra.mxu0 %v2620
        %v3103 = vpop.f32.mrf.mxu0
        %v3104 = vadd.f32 %v3015, %v3103
        %v3105 = vpop.f32.mrf.mxu0
        %v3106 = vadd.f32 %v3017, %v3105
        %3107 = vmatmul.bf16.gmra.mxu0 %v2621
        %v3108 = vpop.f32.mrf.mxu0
        %v3109 = vadd.f32 %v3020, %v3108
        %v3110 = vpop.f32.mrf.mxu0
        %v3111 = vadd.f32 %v3022, %v3110
        %3112 = vmatmul.bf16.gmra.mxu0 %v2622
        %v3113 = vpop.f32.mrf.mxu0
        %v3114 = vadd.f32 %v3025, %v3113
        %v3115 = vpop.f32.mrf.mxu0
        %v3116 = vadd.f32 %v3027, %v3115
        %3117 = vmatmul.bf16.gmra.mxu0 %v2623
        %v3118 = vpop.f32.mrf.mxu0
        %v3119 = vadd.f32 %v3030, %v3118
        %v3120 = vpop.f32.mrf.mxu0
        %v3121 = vadd.f32 %v3032, %v3120
        %3122 = vmatmul.bf16.gmra.mxu0 %v2624
        %v3123 = vpop.f32.mrf.mxu0
        %v3124 = vadd.f32 %v3035, %v3123
        %v3125 = vpop.f32.mrf.mxu0
        %v3126 = vadd.f32 %v3037, %v3125
        %3127 = vmatmul.bf16.gmra.mxu0 %v2625
        %v3128 = vpop.f32.mrf.mxu0
        %v3129 = vadd.f32 %v3040, %v3128
        %v3130 = vpop.f32.mrf.mxu0
        %v3131 = vadd.f32 %v3042, %v3130
        %3132 = vmatmul.bf16.gmra.mxu0 %v2626
        %v3133 = vpop.f32.mrf.mxu0
        %v3134 = vadd.f32 %v3045, %v3133
        %v3135 = vpop.f32.mrf.mxu0
        %v3136 = vadd.f32 %v3047, %v3135
        %3137 = vmatmul.bf16.gmra.mxu0 %v2627
        %v3138 = vpop.f32.mrf.mxu0
        %v3139 = vadd.f32 %v3050, %v3138
        %v3140 = vpop.f32.mrf.mxu0
        %v3141 = vadd.f32 %v3052, %v3140
        %3142 = vmatmul.bf16.gmra.mxu0 %v2628
        %v3143 = vpop.f32.mrf.mxu0
        %v3144 = vadd.f32 %v3055, %v3143
        %v3145 = vpop.f32.mrf.mxu0
        %v3146 = vadd.f32 %v3057, %v3145
        %3147 = vmatmul.bf16.gmra.mxu0 %v2629
        %v3148 = vpop.f32.mrf.mxu0
        %v3149 = vadd.f32 %v3060, %v3148
        %v3150 = vpop.f32.mrf.mxu0
        %v3151 = vadd.f32 %v3062, %v3150
        %3152 = vmatmul.bf16.gmra.mxu0 %v2630
        %v3153 = vpop.f32.mrf.mxu0
        %v3154 = vadd.f32 %v3065, %v3153
        %v3155 = vpop.f32.mrf.mxu0
        %v3156 = vadd.f32 %v3067, %v3155
        %3157 = vdwg.mxu0
        %v3206 = vunpack.c.l.b16 %v2650
        %v3207 = vunpack.c.l.b16 %v2651
        %v3208 = vunpack.c.l.b16 %v2652
        %v3209 = vunpack.c.l.b16 %v2653
        %v3210 = vunpack.c.l.b16 %v2654
        %v3211 = vunpack.c.l.b16 %v2655
        %v3212 = vunpack.c.l.b16 %v2656
        %v3213 = vunpack.c.l.b16 %v2657
        %v3214 = vunpack.c.l.b16 %v2658
        %v3215 = vunpack.c.l.b16 %v2659
        %v3216 = vunpack.c.l.b16 %v2660
        %v3217 = vunpack.c.l.b16 %v2661
        %v3218 = vunpack.c.l.b16 %v2662
        %v3219 = vunpack.c.l.b16 %v2663
        %v3220 = vunpack.c.l.b16 %v2664
        %v3221 = vunpack.c.l.b16 %v2665
        %v3222 = vunpack.c.l.b16 %v2666
        %v3223 = vunpack.c.l.b16 %v2667
        %v3224 = vunpack.c.l.b16 %v2668
        %v3225 = vunpack.c.l.b16 %v2669
        %v3226 = vunpack.c.l.b16 %v2670
        %v3227 = vunpack.c.l.b16 %v2671
        %v3228 = vunpack.c.l.b16 %v2672
        %v3229 = vunpack.c.l.b16 %v2673
        %v3230 = vunpack.c.l.b16 %v2674
        %v3231 = vunpack.c.l.b16 %v2675
        %v3232 = vunpack.c.l.b16 %v2676
        %v3233 = vunpack.c.l.b16 %v2677
        %v3234 = vunpack.c.l.b16 %v2678
        %v3235 = vunpack.c.l.b16 %v2679
        %v3236 = vunpack.c.l.b16 %v2680
        %v3237 = vunpack.c.l.b16 %v2681
        %v3238 = vunpack.c.l.b16 %v2682
        %v3239 = vunpack.c.l.b16 %v2683
        %v3240 = vunpack.c.l.b16 %v2684
        %v3241 = vunpack.c.l.b16 %v2685
        %v3242 = vunpack.c.l.b16 %v2686
        %v3243 = vunpack.c.l.b16 %v2687
        %v3244 = vunpack.c.l.b16 %v2688
        %v3245 = vunpack.c.l.b16 %v2689
        %v3246 = vunpack.c.l.b16 %v2690
        %v3247 = vunpack.c.l.b16 %v2691
        %v3248 = vunpack.c.l.b16 %v2692
        %v3249 = vunpack.c.l.b16 %v2693
        %v3250 = vunpack.c.l.b16 %v2694
        %v3251 = vunpack.c.l.b16 %v2695
        %v3252 = vunpack.c.l.b16 %v2696
        %v3253 = vunpack.c.l.b16 %v2697
        %v3254 = vpack.c.b16 %v3207, %v3206
        %v3255 = vpack.c.b16 %v3209, %v3208
        %v3256 = vpack.c.b16 %v3211, %v3210
        %v3257 = vpack.c.b16 %v3213, %v3212
        %v3258 = vpack.c.b16 %v3215, %v3214
        %v3259 = vpack.c.b16 %v3217, %v3216
        %v3260 = vpack.c.b16 %v3219, %v3218
        %v3261 = vpack.c.b16 %v3221, %v3220
        %v3262 = vpack.c.b16 %v3223, %v3222
        %v3263 = vpack.c.b16 %v3225, %v3224
        %v3264 = vpack.c.b16 %v3227, %v3226
        %v3265 = vpack.c.b16 %v3229, %v3228
        %v3266 = vpack.c.b16 %v3231, %v3230
        %v3267 = vpack.c.b16 %v3233, %v3232
        %v3268 = vpack.c.b16 %v3235, %v3234
        %v3269 = vpack.c.b16 %v3237, %v3236
        %v3270 = vpack.c.b16 %v3239, %v3238
        %v3271 = vpack.c.b16 %v3241, %v3240
        %v3272 = vpack.c.b16 %v3243, %v3242
        %v3273 = vpack.c.b16 %v3245, %v3244
        %v3274 = vpack.c.b16 %v3247, %v3246
        %v3275 = vpack.c.b16 %v3249, %v3248
        %v3276 = vpack.c.b16 %v3251, %v3250
        %v3277 = vpack.c.b16 %v3253, %v3252
        %3302 = vmatpush.bf16.msra.mxu0 %v3261
        %3303 = vmatpush.bf16.msra.mxu0 %v3260
        %3304 = vmatpush.bf16.msra.mxu0 %v3259
        %3305 = vmatpush.bf16.msra.mxu0 %v3258
        %3306 = vmatpush.bf16.msra.mxu0 %v3257
        %3307 = vmatpush.bf16.msra.mxu0 %v3256
        %3308 = vmatpush.bf16.msra.mxu0 %v3255
        %3309 = vmatpush.bf16.msra.mxu0 %v3254
        %3310 = vmatmul.bf16.gmra.mxu0 %v2398
        %v3311 = vpop.f32.mrf.mxu0
        %v3312 = vadd.f32 %v3079, %v3311
        %v3313 = vpop.f32.mrf.mxu0
        %v3314 = vadd.f32 %v3081, %v3313
        %3315 = vmatmul.bf16.gmra.mxu0 %v2399
        %v3316 = vpop.f32.mrf.mxu0
        %v3317 = vadd.f32 %v3084, %v3316
        %v3318 = vpop.f32.mrf.mxu0
        %v3319 = vadd.f32 %v3086, %v3318
        %3320 = vmatmul.bf16.gmra.mxu0 %v2400
        %v3321 = vpop.f32.mrf.mxu0
        %v3322 = vadd.f32 %v3089, %v3321
        %v3323 = vpop.f32.mrf.mxu0
        %v3324 = vadd.f32 %v3091, %v3323
        %3325 = vmatmul.bf16.gmra.mxu0 %v2401
        %v3326 = vpop.f32.mrf.mxu0
        %v3327 = vadd.f32 %v3094, %v3326
        %v3328 = vpop.f32.mrf.mxu0
        %v3329 = vadd.f32 %v3096, %v3328
        %3330 = vmatmul.bf16.gmra.mxu0 %v2402
        %v3331 = vpop.f32.mrf.mxu0
        %v3332 = vadd.f32 %v3099, %v3331
        %v3333 = vpop.f32.mrf.mxu0
        %v3334 = vadd.f32 %v3101, %v3333
        %3335 = vmatmul.bf16.gmra.mxu0 %v2403
        %v3336 = vpop.f32.mrf.mxu0
        %v3337 = vadd.f32 %v3104, %v3336
        %v3338 = vpop.f32.mrf.mxu0
        %v3339 = vadd.f32 %v3106, %v3338
        %3340 = vmatmul.bf16.gmra.mxu0 %v2404
        %v3341 = vpop.f32.mrf.mxu0
        %v3342 = vadd.f32 %v3109, %v3341
        %v3343 = vpop.f32.mrf.mxu0
        %v3344 = vadd.f32 %v3111, %v3343
        %3345 = vmatmul.bf16.gmra.mxu0 %v2405
        %v3346 = vpop.f32.mrf.mxu0
        %v3347 = vadd.f32 %v3114, %v3346
        %v3348 = vpop.f32.mrf.mxu0
        %v3349 = vadd.f32 %v3116, %v3348
        %3350 = vmatmul.bf16.gmra.mxu0 %v2406
        %v3351 = vpop.f32.mrf.mxu0
        %v3352 = vadd.f32 %v3119, %v3351
        %v3353 = vpop.f32.mrf.mxu0
        %v3354 = vadd.f32 %v3121, %v3353
        %3355 = vmatmul.bf16.gmra.mxu0 %v2407
        %v3356 = vpop.f32.mrf.mxu0
        %v3357 = vadd.f32 %v3124, %v3356
        %v3358 = vpop.f32.mrf.mxu0
        %v3359 = vadd.f32 %v3126, %v3358
        %3360 = vmatmul.bf16.gmra.mxu0 %v2408
        %v3361 = vpop.f32.mrf.mxu0
        %v3362 = vadd.f32 %v3129, %v3361
        %v3363 = vpop.f32.mrf.mxu0
        %v3364 = vadd.f32 %v3131, %v3363
        %3365 = vmatmul.bf16.gmra.mxu0 %v2409
        %v3366 = vpop.f32.mrf.mxu0
        %v3367 = vadd.f32 %v3134, %v3366
        %v3368 = vpop.f32.mrf.mxu0
        %v3369 = vadd.f32 %v3136, %v3368
        %3370 = vmatmul.bf16.gmra.mxu0 %v2410
        %v3371 = vpop.f32.mrf.mxu0
        %v3372 = vadd.f32 %v3139, %v3371
        %v3373 = vpop.f32.mrf.mxu0
        %v3374 = vadd.f32 %v3141, %v3373
        %3375 = vmatmul.bf16.gmra.mxu0 %v2411
        %v3376 = vpop.f32.mrf.mxu0
        %v3377 = vadd.f32 %v3144, %v3376
        %v3378 = vpop.f32.mrf.mxu0
        %v3379 = vadd.f32 %v3146, %v3378
        %3380 = vmatmul.bf16.gmra.mxu0 %v2412
        %v3381 = vpop.f32.mrf.mxu0
        %v3382 = vadd.f32 %v3149, %v3381
        %v3383 = vpop.f32.mrf.mxu0
        %v3384 = vadd.f32 %v3151, %v3383
        %3385 = vmatmul.bf16.gmra.mxu0 %v2413
        %v3386 = vpop.f32.mrf.mxu0
        %v3387 = vadd.f32 %v3154, %v3386
        %v3388 = vpop.f32.mrf.mxu0
        %v3389 = vadd.f32 %v3156, %v3388
        %3390 = vdwg.mxu0
        %3391 = vmatpush.bf16.msra.mxu0 %v3269
        %3392 = vmatpush.bf16.msra.mxu0 %v3268
        %3393 = vmatpush.bf16.msra.mxu0 %v3267
        %3394 = vmatpush.bf16.msra.mxu0 %v3266
        %3395 = vmatpush.bf16.msra.mxu0 %v3265
        %3396 = vmatpush.bf16.msra.mxu0 %v3264
        %3397 = vmatpush.bf16.msra.mxu0 %v3263
        %3398 = vmatpush.bf16.msra.mxu0 %v3262
        %3399 = vmatmul.bf16.gmra.mxu0 %v2506
        %v3400 = vpop.f32.mrf.mxu0
        %v3401 = vadd.f32 %v3312, %v3400
        %v3402 = vpop.f32.mrf.mxu0
        %v3403 = vadd.f32 %v3314, %v3402
        %3404 = vmatmul.bf16.gmra.mxu0 %v2507
        %v3405 = vpop.f32.mrf.mxu0
        %v3406 = vadd.f32 %v3317, %v3405
        %v3407 = vpop.f32.mrf.mxu0
        %v3408 = vadd.f32 %v3319, %v3407
        %3409 = vmatmul.bf16.gmra.mxu0 %v2508
        %v3410 = vpop.f32.mrf.mxu0
        %v3411 = vadd.f32 %v3322, %v3410
        %v3412 = vpop.f32.mrf.mxu0
        %v3413 = vadd.f32 %v3324, %v3412
        %3414 = vmatmul.bf16.gmra.mxu0 %v2509
        %v3415 = vpop.f32.mrf.mxu0
        %v3416 = vadd.f32 %v3327, %v3415
        %v3417 = vpop.f32.mrf.mxu0
        %v3418 = vadd.f32 %v3329, %v3417
        %3419 = vmatmul.bf16.gmra.mxu0 %v2510
        %v3420 = vpop.f32.mrf.mxu0
        %v3421 = vadd.f32 %v3332, %v3420
        %v3422 = vpop.f32.mrf.mxu0
        %v3423 = vadd.f32 %v3334, %v3422
        %3424 = vmatmul.bf16.gmra.mxu0 %v2511
        %v3425 = vpop.f32.mrf.mxu0
        %v3426 = vadd.f32 %v3337, %v3425
        %v3427 = vpop.f32.mrf.mxu0
        %v3428 = vadd.f32 %v3339, %v3427
        %3429 = vmatmul.bf16.gmra.mxu0 %v2512
        %v3430 = vpop.f32.mrf.mxu0
        %v3431 = vadd.f32 %v3342, %v3430
        %v3432 = vpop.f32.mrf.mxu0
        %v3433 = vadd.f32 %v3344, %v3432
        %3434 = vmatmul.bf16.gmra.mxu0 %v2513
        %v3435 = vpop.f32.mrf.mxu0
        %v3436 = vadd.f32 %v3347, %v3435
        %v3437 = vpop.f32.mrf.mxu0
        %v3438 = vadd.f32 %v3349, %v3437
        %3439 = vmatmul.bf16.gmra.mxu0 %v2514
        %v3440 = vpop.f32.mrf.mxu0
        %v3441 = vadd.f32 %v3352, %v3440
        %v3442 = vpop.f32.mrf.mxu0
        %v3443 = vadd.f32 %v3354, %v3442
        %3444 = vmatmul.bf16.gmra.mxu0 %v2515
        %v3445 = vpop.f32.mrf.mxu0
        %v3446 = vadd.f32 %v3357, %v3445
        %v3447 = vpop.f32.mrf.mxu0
        %v3448 = vadd.f32 %v3359, %v3447
        %3449 = vmatmul.bf16.gmra.mxu0 %v2516
        %v3450 = vpop.f32.mrf.mxu0
        %v3451 = vadd.f32 %v3362, %v3450
        %v3452 = vpop.f32.mrf.mxu0
        %v3453 = vadd.f32 %v3364, %v3452
        %3454 = vmatmul.bf16.gmra.mxu0 %v2517
        %v3455 = vpop.f32.mrf.mxu0
        %v3456 = vadd.f32 %v3367, %v3455
        %v3457 = vpop.f32.mrf.mxu0
        %v3458 = vadd.f32 %v3369, %v3457
        %3459 = vmatmul.bf16.gmra.mxu0 %v2518
        %v3460 = vpop.f32.mrf.mxu0
        %v3461 = vadd.f32 %v3372, %v3460
        %v3462 = vpop.f32.mrf.mxu0
        %v3463 = vadd.f32 %v3374, %v3462
        %3464 = vmatmul.bf16.gmra.mxu0 %v2519
        %v3465 = vpop.f32.mrf.mxu0
        %v3466 = vadd.f32 %v3377, %v3465
        %v3467 = vpop.f32.mrf.mxu0
        %v3468 = vadd.f32 %v3379, %v3467
        %3469 = vmatmul.bf16.gmra.mxu0 %v2520
        %v3470 = vpop.f32.mrf.mxu0
        %v3471 = vadd.f32 %v3382, %v3470
        %v3472 = vpop.f32.mrf.mxu0
        %v3473 = vadd.f32 %v3384, %v3472
        %3474 = vmatmul.bf16.gmra.mxu0 %v2521
        %v3475 = vpop.f32.mrf.mxu0
        %v3476 = vadd.f32 %v3387, %v3475
        %v3477 = vpop.f32.mrf.mxu0
        %v3478 = vadd.f32 %v3389, %v3477
        %3479 = vdwg.mxu0
        %3480 = vmatpush.bf16.msra.mxu0 %v3277
        %3481 = vmatpush.bf16.msra.mxu0 %v3276
        %3482 = vmatpush.bf16.msra.mxu0 %v3275
        %3483 = vmatpush.bf16.msra.mxu0 %v3274
        %3484 = vmatpush.bf16.msra.mxu0 %v3273
        %3485 = vmatpush.bf16.msra.mxu0 %v3272
        %3486 = vmatpush.bf16.msra.mxu0 %v3271
        %3487 = vmatpush.bf16.msra.mxu0 %v3270
        %3488 = vmatmul.bf16.gmra.mxu0 %v2614
        %v3489 = vpop.f32.mrf.mxu0
        %v3490 = vadd.f32 %v3401, %v3489
        %v3491 = vpop.f32.mrf.mxu0
        %v3492 = vadd.f32 %v3403, %v3491
        %3493 = vmatmul.bf16.gmra.mxu0 %v2615
        %v3494 = vpop.f32.mrf.mxu0
        %v3495 = vadd.f32 %v3406, %v3494
        %v3496 = vpop.f32.mrf.mxu0
        %v3497 = vadd.f32 %v3408, %v3496
        %3498 = vmatmul.bf16.gmra.mxu0 %v2616
        %v3499 = vpop.f32.mrf.mxu0
        %v3500 = vadd.f32 %v3411, %v3499
        %v3501 = vpop.f32.mrf.mxu0
        %v3502 = vadd.f32 %v3413, %v3501
        %3503 = vmatmul.bf16.gmra.mxu0 %v2617
        %v3504 = vpop.f32.mrf.mxu0
        %v3505 = vadd.f32 %v3416, %v3504
        %v3506 = vpop.f32.mrf.mxu0
        %v3507 = vadd.f32 %v3418, %v3506
        %3508 = vmatmul.bf16.gmra.mxu0 %v2618
        %v3509 = vpop.f32.mrf.mxu0
        %v3510 = vadd.f32 %v3421, %v3509
        %v3511 = vpop.f32.mrf.mxu0
        %v3512 = vadd.f32 %v3423, %v3511
        %3513 = vmatmul.bf16.gmra.mxu0 %v2619
        %v3514 = vpop.f32.mrf.mxu0
        %v3515 = vadd.f32 %v3426, %v3514
        %v3516 = vpop.f32.mrf.mxu0
        %v3517 = vadd.f32 %v3428, %v3516
        %3518 = vmatmul.bf16.gmra.mxu0 %v2620
        %v3519 = vpop.f32.mrf.mxu0
        %v3520 = vadd.f32 %v3431, %v3519
        %v3521 = vpop.f32.mrf.mxu0
        %v3522 = vadd.f32 %v3433, %v3521
        %3523 = vmatmul.bf16.gmra.mxu0 %v2621
        %v3524 = vpop.f32.mrf.mxu0
        %v3525 = vadd.f32 %v3436, %v3524
        %v3526 = vpop.f32.mrf.mxu0
        %v3527 = vadd.f32 %v3438, %v3526
        %3528 = vmatmul.bf16.gmra.mxu0 %v2622
        %v3529 = vpop.f32.mrf.mxu0
        %v3530 = vadd.f32 %v3441, %v3529
        %v3531 = vpop.f32.mrf.mxu0
        %v3532 = vadd.f32 %v3443, %v3531
        %3533 = vmatmul.bf16.gmra.mxu0 %v2623
        %v3534 = vpop.f32.mrf.mxu0
        %v3535 = vadd.f32 %v3446, %v3534
        %v3536 = vpop.f32.mrf.mxu0
        %v3537 = vadd.f32 %v3448, %v3536
        %3538 = vmatmul.bf16.gmra.mxu0 %v2624
        %v3539 = vpop.f32.mrf.mxu0
        %v3540 = vadd.f32 %v3451, %v3539
        %v3541 = vpop.f32.mrf.mxu0
        %v3542 = vadd.f32 %v3453, %v3541
        %3543 = vmatmul.bf16.gmra.mxu0 %v2625
        %v3544 = vpop.f32.mrf.mxu0
        %v3545 = vadd.f32 %v3456, %v3544
        %v3546 = vpop.f32.mrf.mxu0
        %v3547 = vadd.f32 %v3458, %v3546
        %3548 = vmatmul.bf16.gmra.mxu0 %v2626
        %v3549 = vpop.f32.mrf.mxu0
        %v3550 = vadd.f32 %v3461, %v3549
        %v3551 = vpop.f32.mrf.mxu0
        %v3552 = vadd.f32 %v3463, %v3551
        %3553 = vmatmul.bf16.gmra.mxu0 %v2627
        %v3554 = vpop.f32.mrf.mxu0
        %v3555 = vadd.f32 %v3466, %v3554
        %v3556 = vpop.f32.mrf.mxu0
        %v3557 = vadd.f32 %v3468, %v3556
        %3558 = vmatmul.bf16.gmra.mxu0 %v2628
        %v3559 = vpop.f32.mrf.mxu0
        %v3560 = vadd.f32 %v3471, %v3559
        %v3561 = vpop.f32.mrf.mxu0
        %v3562 = vadd.f32 %v3473, %v3561
        %3563 = vmatmul.bf16.gmra.mxu0 %v2629
        %v3564 = vpop.f32.mrf.mxu0
        %v3565 = vadd.f32 %v3476, %v3564
        %v3566 = vpop.f32.mrf.mxu0
        %v3567 = vadd.f32 %v3478, %v3566
        %3568 = vdwg.mxu0
        %s3569 = scalar_lea.vmem [#allocation8], 384
        %v3570 = vld [vmem:[%s3569] sm:$0xf]
        %v3571 = vld [vmem:[%s3569 + $0x4] sm:$0xf]
        %v3572 = vld [vmem:[%s3569 + $0x8] sm:$0xf]
        %v3573 = vld [vmem:[%s3569 + $0xc] sm:$0xf]
        %v3574 = vld [vmem:[%s3569 + $0x10] sm:$0xf]
        %v3575 = vld [vmem:[%s3569 + $0x14] sm:$0xf]
        %v3576 = vld [vmem:[%s3569 + $0x18] sm:$0xf]
        %v3577 = vld [vmem:[%s3569 + $0x1c] sm:$0xf]
        %v3578 = vld [vmem:[%s3569 + $0x20] sm:$0xf]
        %v3579 = vld [vmem:[%s3569 + $0x24] sm:$0xf]
        %v3580 = vld [vmem:[%s3569 + $0x28] sm:$0xf]
        %v3581 = vld [vmem:[%s3569 + $0x2c] sm:$0xf]
        %v3582 = vld [vmem:[%s3569 + $0x30] sm:$0xf]
        %v3583 = vld [vmem:[%s3569 + $0x34] sm:$0xf]
        %v3584 = vld [vmem:[%s3569 + $0x38] sm:$0xf]
        %v3585 = vld [vmem:[%s3569 + $0x3c] sm:$0xf]
        %v3586 = vld [vmem:[%s3569 + $0x40] sm:$0xf]
        %v3587 = vld [vmem:[%s3569 + $0x44] sm:$0xf]
        %v3588 = vld [vmem:[%s3569 + $0x48] sm:$0xf]
        %v3589 = vld [vmem:[%s3569 + $0x4c] sm:$0xf]
        %v3590 = vld [vmem:[%s3569 + $0x50] sm:$0xf]
        %v3591 = vld [vmem:[%s3569 + $0x54] sm:$0xf]
        %v3592 = vld [vmem:[%s3569 + $0x58] sm:$0xf]
        %v3593 = vld [vmem:[%s3569 + $0x5c] sm:$0xf]
        %v3594 = vld [vmem:[%s3569 + $0x60] sm:$0xf]
        %v3595 = vld [vmem:[%s3569 + $0x64] sm:$0xf]
        %v3596 = vld [vmem:[%s3569 + $0x68] sm:$0xf]
        %v3597 = vld [vmem:[%s3569 + $0x6c] sm:$0xf]
        %v3598 = vld [vmem:[%s3569 + $0x70] sm:$0xf]
        %v3599 = vld [vmem:[%s3569 + $0x74] sm:$0xf]
        %v3600 = vld [vmem:[%s3569 + $0x78] sm:$0xf]
        %v3601 = vld [vmem:[%s3569 + $0x7c] sm:$0xf]
        %v3602 = vld [vmem:[%s3569 + $0x80] sm:$0xf]
        %v3603 = vld [vmem:[%s3569 + $0x84] sm:$0xf]
        %v3604 = vld [vmem:[%s3569 + $0x88] sm:$0xf]
        %v3605 = vld [vmem:[%s3569 + $0x8c] sm:$0xf]
        %v3606 = vld [vmem:[%s3569 + $0x90] sm:$0xf]
        %v3607 = vld [vmem:[%s3569 + $0x94] sm:$0xf]
        %v3608 = vld [vmem:[%s3569 + $0x98] sm:$0xf]
        %v3609 = vld [vmem:[%s3569 + $0x9c] sm:$0xf]
        %v3610 = vld [vmem:[%s3569 + $0xa0] sm:$0xf]
        %v3611 = vld [vmem:[%s3569 + $0xa4] sm:$0xf]
        %v3612 = vld [vmem:[%s3569 + $0xa8] sm:$0xf]
        %v3613 = vld [vmem:[%s3569 + $0xac] sm:$0xf]
        %v3614 = vld [vmem:[%s3569 + $0xb0] sm:$0xf]
        %v3615 = vld [vmem:[%s3569 + $0xb4] sm:$0xf]
        %v3616 = vld [vmem:[%s3569 + $0xb8] sm:$0xf]
        %v3617 = vld [vmem:[%s3569 + $0xbc] sm:$0xf]
        %v3666 = vunpack.c.l.b16 %v3570
        %v3667 = vunpack.c.l.b16 %v3571
        %v3668 = vunpack.c.l.b16 %v3572
        %v3669 = vunpack.c.l.b16 %v3573
        %v3670 = vunpack.c.l.b16 %v3574
        %v3671 = vunpack.c.l.b16 %v3575
        %v3672 = vunpack.c.l.b16 %v3576
        %v3673 = vunpack.c.l.b16 %v3577
        %v3674 = vunpack.c.l.b16 %v3578
        %v3675 = vunpack.c.l.b16 %v3579
        %v3676 = vunpack.c.l.b16 %v3580
        %v3677 = vunpack.c.l.b16 %v3581
        %v3678 = vunpack.c.l.b16 %v3582
        %v3679 = vunpack.c.l.b16 %v3583
        %v3680 = vunpack.c.l.b16 %v3584
        %v3681 = vunpack.c.l.b16 %v3585
        %v3682 = vunpack.c.l.b16 %v3586
        %v3683 = vunpack.c.l.b16 %v3587
        %v3684 = vunpack.c.l.b16 %v3588
        %v3685 = vunpack.c.l.b16 %v3589
        %v3686 = vunpack.c.l.b16 %v3590
        %v3687 = vunpack.c.l.b16 %v3591
        %v3688 = vunpack.c.l.b16 %v3592
        %v3689 = vunpack.c.l.b16 %v3593
        %v3690 = vunpack.c.l.b16 %v3594
        %v3691 = vunpack.c.l.b16 %v3595
        %v3692 = vunpack.c.l.b16 %v3596
        %v3693 = vunpack.c.l.b16 %v3597
        %v3694 = vunpack.c.l.b16 %v3598
        %v3695 = vunpack.c.l.b16 %v3599
        %v3696 = vunpack.c.l.b16 %v3600
        %v3697 = vunpack.c.l.b16 %v3601
        %v3698 = vunpack.c.l.b16 %v3602
        %v3699 = vunpack.c.l.b16 %v3603
        %v3700 = vunpack.c.l.b16 %v3604
        %v3701 = vunpack.c.l.b16 %v3605
        %v3702 = vunpack.c.l.b16 %v3606
        %v3703 = vunpack.c.l.b16 %v3607
        %v3704 = vunpack.c.l.b16 %v3608
        %v3705 = vunpack.c.l.b16 %v3609
        %v3706 = vunpack.c.l.b16 %v3610
        %v3707 = vunpack.c.l.b16 %v3611
        %v3708 = vunpack.c.l.b16 %v3612
        %v3709 = vunpack.c.l.b16 %v3613
        %v3710 = vunpack.c.l.b16 %v3614
        %v3711 = vunpack.c.l.b16 %v3615
        %v3712 = vunpack.c.l.b16 %v3616
        %v3713 = vunpack.c.l.b16 %v3617
        %v3714 = vpack.c.b16 %v3667, %v3666
        %v3715 = vpack.c.b16 %v3669, %v3668
        %v3716 = vpack.c.b16 %v3671, %v3670
        %v3717 = vpack.c.b16 %v3673, %v3672
        %v3718 = vpack.c.b16 %v3675, %v3674
        %v3719 = vpack.c.b16 %v3677, %v3676
        %v3720 = vpack.c.b16 %v3679, %v3678
        %v3721 = vpack.c.b16 %v3681, %v3680
        %v3722 = vpack.c.b16 %v3683, %v3682
        %v3723 = vpack.c.b16 %v3685, %v3684
        %v3724 = vpack.c.b16 %v3687, %v3686
        %v3725 = vpack.c.b16 %v3689, %v3688
        %v3726 = vpack.c.b16 %v3691, %v3690
        %v3727 = vpack.c.b16 %v3693, %v3692
        %v3728 = vpack.c.b16 %v3695, %v3694
        %v3729 = vpack.c.b16 %v3697, %v3696
        %v3730 = vpack.c.b16 %v3699, %v3698
        %v3731 = vpack.c.b16 %v3701, %v3700
        %v3732 = vpack.c.b16 %v3703, %v3702
        %v3733 = vpack.c.b16 %v3705, %v3704
        %v3734 = vpack.c.b16 %v3707, %v3706
        %v3735 = vpack.c.b16 %v3709, %v3708
        %v3736 = vpack.c.b16 %v3711, %v3710
        %v3737 = vpack.c.b16 %v3713, %v3712
        %3762 = vmatpush.bf16.msra.mxu0 %v3721
        %3763 = vmatpush.bf16.msra.mxu0 %v3720
        %3764 = vmatpush.bf16.msra.mxu0 %v3719
        %3765 = vmatpush.bf16.msra.mxu0 %v3718
        %3766 = vmatpush.bf16.msra.mxu0 %v3717
        %3767 = vmatpush.bf16.msra.mxu0 %v3716
        %3768 = vmatpush.bf16.msra.mxu0 %v3715
        %3769 = vmatpush.bf16.msra.mxu0 %v3714
        %3770 = vmatmul.bf16.gmra.mxu0 %v2400
        %v3771 = vpop.f32.mrf.mxu0
        %v3772 = vadd.f32 0.0, %v3771
        %v3773 = vpop.f32.mrf.mxu0
        %v3774 = vadd.f32 0.0, %v3773
        %3775 = vmatmul.bf16.gmra.mxu0 %v2401
        %v3776 = vpop.f32.mrf.mxu0
        %v3777 = vadd.f32 0.0, %v3776
        %v3778 = vpop.f32.mrf.mxu0
        %v3779 = vadd.f32 0.0, %v3778
        %3780 = vmatmul.bf16.gmra.mxu0 %v2402
        %v3781 = vpop.f32.mrf.mxu0
        %v3782 = vadd.f32 0.0, %v3781
        %v3783 = vpop.f32.mrf.mxu0
        %v3784 = vadd.f32 0.0, %v3783
        %3785 = vmatmul.bf16.gmra.mxu0 %v2403
        %v3786 = vpop.f32.mrf.mxu0
        %v3787 = vadd.f32 0.0, %v3786
        %v3788 = vpop.f32.mrf.mxu0
        %v3789 = vadd.f32 0.0, %v3788
        %3790 = vmatmul.bf16.gmra.mxu0 %v2404
        %v3791 = vpop.f32.mrf.mxu0
        %v3792 = vadd.f32 0.0, %v3791
        %v3793 = vpop.f32.mrf.mxu0
        %v3794 = vadd.f32 0.0, %v3793
        %3795 = vmatmul.bf16.gmra.mxu0 %v2405
        %v3796 = vpop.f32.mrf.mxu0
        %v3797 = vadd.f32 0.0, %v3796
        %v3798 = vpop.f32.mrf.mxu0
        %v3799 = vadd.f32 0.0, %v3798
        %3800 = vmatmul.bf16.gmra.mxu0 %v2406
        %v3801 = vpop.f32.mrf.mxu0
        %v3802 = vadd.f32 0.0, %v3801
        %v3803 = vpop.f32.mrf.mxu0
        %v3804 = vadd.f32 0.0, %v3803
        %3805 = vmatmul.bf16.gmra.mxu0 %v2407
        %v3806 = vpop.f32.mrf.mxu0
        %v3807 = vadd.f32 0.0, %v3806
        %v3808 = vpop.f32.mrf.mxu0
        %v3809 = vadd.f32 0.0, %v3808
        %3810 = vmatmul.bf16.gmra.mxu0 %v2408
        %v3811 = vpop.f32.mrf.mxu0
        %v3812 = vadd.f32 0.0, %v3811
        %v3813 = vpop.f32.mrf.mxu0
        %v3814 = vadd.f32 0.0, %v3813
        %3815 = vmatmul.bf16.gmra.mxu0 %v2409
        %v3816 = vpop.f32.mrf.mxu0
        %v3817 = vadd.f32 0.0, %v3816
        %v3818 = vpop.f32.mrf.mxu0
        %v3819 = vadd.f32 0.0, %v3818
        %3820 = vmatmul.bf16.gmra.mxu0 %v2410
        %v3821 = vpop.f32.mrf.mxu0
        %v3822 = vadd.f32 0.0, %v3821
        %v3823 = vpop.f32.mrf.mxu0
        %v3824 = vadd.f32 0.0, %v3823
        %3825 = vmatmul.bf16.gmra.mxu0 %v2411
        %v3826 = vpop.f32.mrf.mxu0
        %v3827 = vadd.f32 0.0, %v3826
        %v3828 = vpop.f32.mrf.mxu0
        %v3829 = vadd.f32 0.0, %v3828
        %3830 = vmatmul.bf16.gmra.mxu0 %v2412
        %v3831 = vpop.f32.mrf.mxu0
        %v3832 = vadd.f32 0.0, %v3831
        %v3833 = vpop.f32.mrf.mxu0
        %v3834 = vadd.f32 0.0, %v3833
        %3835 = vmatmul.bf16.gmra.mxu0 %v2413
        %v3836 = vpop.f32.mrf.mxu0
        %v3837 = vadd.f32 0.0, %v3836
        %v3838 = vpop.f32.mrf.mxu0
        %v3839 = vadd.f32 0.0, %v3838
        %3840 = vmatmul.bf16.gmra.mxu0 %v2414
        %v3841 = vpop.f32.mrf.mxu0
        %v3842 = vadd.f32 0.0, %v3841
        %v3843 = vpop.f32.mrf.mxu0
        %v3844 = vadd.f32 0.0, %v3843
        %3845 = vmatmul.bf16.gmra.mxu0 %v2415
        %v3846 = vpop.f32.mrf.mxu0
        %v3847 = vadd.f32 0.0, %v3846
        %v3848 = vpop.f32.mrf.mxu0
        %v3849 = vadd.f32 0.0, %v3848
        %3850 = vdwg.mxu0
        %3851 = vmatpush.bf16.msra.mxu0 %v3729
        %3852 = vmatpush.bf16.msra.mxu0 %v3728
        %3853 = vmatpush.bf16.msra.mxu0 %v3727
        %3854 = vmatpush.bf16.msra.mxu0 %v3726
        %3855 = vmatpush.bf16.msra.mxu0 %v3725
        %3856 = vmatpush.bf16.msra.mxu0 %v3724
        %3857 = vmatpush.bf16.msra.mxu0 %v3723
        %3858 = vmatpush.bf16.msra.mxu0 %v3722
        %3859 = vmatmul.bf16.gmra.mxu0 %v2508
        %v3860 = vpop.f32.mrf.mxu0
        %v3861 = vadd.f32 %v3772, %v3860
        %v3862 = vpop.f32.mrf.mxu0
        %v3863 = vadd.f32 %v3774, %v3862
        %3864 = vmatmul.bf16.gmra.mxu0 %v2509
        %v3865 = vpop.f32.mrf.mxu0
        %v3866 = vadd.f32 %v3777, %v3865
        %v3867 = vpop.f32.mrf.mxu0
        %v3868 = vadd.f32 %v3779, %v3867
        %3869 = vmatmul.bf16.gmra.mxu0 %v2510
        %v3870 = vpop.f32.mrf.mxu0
        %v3871 = vadd.f32 %v3782, %v3870
        %v3872 = vpop.f32.mrf.mxu0
        %v3873 = vadd.f32 %v3784, %v3872
        %3874 = vmatmul.bf16.gmra.mxu0 %v2511
        %v3875 = vpop.f32.mrf.mxu0
        %v3876 = vadd.f32 %v3787, %v3875
        %v3877 = vpop.f32.mrf.mxu0
        %v3878 = vadd.f32 %v3789, %v3877
        %3879 = vmatmul.bf16.gmra.mxu0 %v2512
        %v3880 = vpop.f32.mrf.mxu0
        %v3881 = vadd.f32 %v3792, %v3880
        %v3882 = vpop.f32.mrf.mxu0
        %v3883 = vadd.f32 %v3794, %v3882
        %3884 = vmatmul.bf16.gmra.mxu0 %v2513
        %v3885 = vpop.f32.mrf.mxu0
        %v3886 = vadd.f32 %v3797, %v3885
        %v3887 = vpop.f32.mrf.mxu0
        %v3888 = vadd.f32 %v3799, %v3887
        %3889 = vmatmul.bf16.gmra.mxu0 %v2514
        %v3890 = vpop.f32.mrf.mxu0
        %v3891 = vadd.f32 %v3802, %v3890
        %v3892 = vpop.f32.mrf.mxu0
        %v3893 = vadd.f32 %v3804, %v3892
        %3894 = vmatmul.bf16.gmra.mxu0 %v2515
        %v3895 = vpop.f32.mrf.mxu0
        %v3896 = vadd.f32 %v3807, %v3895
        %v3897 = vpop.f32.mrf.mxu0
        %v3898 = vadd.f32 %v3809, %v3897
        %3899 = vmatmul.bf16.gmra.mxu0 %v2516
        %v3900 = vpop.f32.mrf.mxu0
        %v3901 = vadd.f32 %v3812, %v3900
        %v3902 = vpop.f32.mrf.mxu0
        %v3903 = vadd.f32 %v3814, %v3902
        %3904 = vmatmul.bf16.gmra.mxu0 %v2517
        %v3905 = vpop.f32.mrf.mxu0
        %v3906 = vadd.f32 %v3817, %v3905
        %v3907 = vpop.f32.mrf.mxu0
        %v3908 = vadd.f32 %v3819, %v3907
        %3909 = vmatmul.bf16.gmra.mxu0 %v2518
        %v3910 = vpop.f32.mrf.mxu0
        %v3911 = vadd.f32 %v3822, %v3910
        %v3912 = vpop.f32.mrf.mxu0
        %v3913 = vadd.f32 %v3824, %v3912
        %3914 = vmatmul.bf16.gmra.mxu0 %v2519
        %v3915 = vpop.f32.mrf.mxu0
        %v3916 = vadd.f32 %v3827, %v3915
        %v3917 = vpop.f32.mrf.mxu0
        %v3918 = vadd.f32 %v3829, %v3917
        %3919 = vmatmul.bf16.gmra.mxu0 %v2520
        %v3920 = vpop.f32.mrf.mxu0
        %v3921 = vadd.f32 %v3832, %v3920
        %v3922 = vpop.f32.mrf.mxu0
        %v3923 = vadd.f32 %v3834, %v3922
        %3924 = vmatmul.bf16.gmra.mxu0 %v2521
        %v3925 = vpop.f32.mrf.mxu0
        %v3926 = vadd.f32 %v3837, %v3925
        %v3927 = vpop.f32.mrf.mxu0
        %v3928 = vadd.f32 %v3839, %v3927
        %3929 = vmatmul.bf16.gmra.mxu0 %v2522
        %v3930 = vpop.f32.mrf.mxu0
        %v3931 = vadd.f32 %v3842, %v3930
        %v3932 = vpop.f32.mrf.mxu0
        %v3933 = vadd.f32 %v3844, %v3932
        %3934 = vmatmul.bf16.gmra.mxu0 %v2523
        %v3935 = vpop.f32.mrf.mxu0
        %v3936 = vadd.f32 %v3847, %v3935
        %v3937 = vpop.f32.mrf.mxu0
        %v3938 = vadd.f32 %v3849, %v3937
        %3939 = vdwg.mxu0
        %3940 = vmatpush.bf16.msra.mxu0 %v3737
        %3941 = vmatpush.bf16.msra.mxu0 %v3736
        %3942 = vmatpush.bf16.msra.mxu0 %v3735
        %3943 = vmatpush.bf16.msra.mxu0 %v3734
        %3944 = vmatpush.bf16.msra.mxu0 %v3733
        %3945 = vmatpush.bf16.msra.mxu0 %v3732
        %3946 = vmatpush.bf16.msra.mxu0 %v3731
        %3947 = vmatpush.bf16.msra.mxu0 %v3730
        %3948 = vmatmul.bf16.gmra.mxu0 %v2616
        %v3949 = vpop.f32.mrf.mxu0
        %v3950 = vadd.f32 %v3861, %v3949
        %v3951 = vpop.f32.mrf.mxu0
        %v3952 = vadd.f32 %v3863, %v3951
        %3953 = vmatmul.bf16.gmra.mxu0 %v2617
        %v3954 = vpop.f32.mrf.mxu0
        %v3955 = vadd.f32 %v3866, %v3954
        %v3956 = vpop.f32.mrf.mxu0
        %v3957 = vadd.f32 %v3868, %v3956
        %3958 = vmatmul.bf16.gmra.mxu0 %v2618
        %v3959 = vpop.f32.mrf.mxu0
        %v3960 = vadd.f32 %v3871, %v3959
        %v3961 = vpop.f32.mrf.mxu0
        %v3962 = vadd.f32 %v3873, %v3961
        %3963 = vmatmul.bf16.gmra.mxu0 %v2619
        %v3964 = vpop.f32.mrf.mxu0
        %v3965 = vadd.f32 %v3876, %v3964
        %v3966 = vpop.f32.mrf.mxu0
        %v3967 = vadd.f32 %v3878, %v3966
        %3968 = vmatmul.bf16.gmra.mxu0 %v2620
        %v3969 = vpop.f32.mrf.mxu0
        %v3970 = vadd.f32 %v3881, %v3969
        %v3971 = vpop.f32.mrf.mxu0
        %v3972 = vadd.f32 %v3883, %v3971
        %3973 = vmatmul.bf16.gmra.mxu0 %v2621
        %v3974 = vpop.f32.mrf.mxu0
        %v3975 = vadd.f32 %v3886, %v3974
        %v3976 = vpop.f32.mrf.mxu0
        %v3977 = vadd.f32 %v3888, %v3976
        %3978 = vmatmul.bf16.gmra.mxu0 %v2622
        %v3979 = vpop.f32.mrf.mxu0
        %v3980 = vadd.f32 %v3891, %v3979
        %v3981 = vpop.f32.mrf.mxu0
        %v3982 = vadd.f32 %v3893, %v3981
        %3983 = vmatmul.bf16.gmra.mxu0 %v2623
        %v3984 = vpop.f32.mrf.mxu0
        %v3985 = vadd.f32 %v3896, %v3984
        %v3986 = vpop.f32.mrf.mxu0
        %v3987 = vadd.f32 %v3898, %v3986
        %3988 = vmatmul.bf16.gmra.mxu0 %v2624
        %v3989 = vpop.f32.mrf.mxu0
        %v3990 = vadd.f32 %v3901, %v3989
        %v3991 = vpop.f32.mrf.mxu0
        %v3992 = vadd.f32 %v3903, %v3991
        %3993 = vmatmul.bf16.gmra.mxu0 %v2625
        %v3994 = vpop.f32.mrf.mxu0
        %v3995 = vadd.f32 %v3906, %v3994
        %v3996 = vpop.f32.mrf.mxu0
        %v3997 = vadd.f32 %v3908, %v3996
        %3998 = vmatmul.bf16.gmra.mxu0 %v2626
        %v3999 = vpop.f32.mrf.mxu0
        %v4000 = vadd.f32 %v3911, %v3999
        %v4001 = vpop.f32.mrf.mxu0
        %v4002 = vadd.f32 %v3913, %v4001
        %4003 = vmatmul.bf16.gmra.mxu0 %v2627
        %v4004 = vpop.f32.mrf.mxu0
        %v4005 = vadd.f32 %v3916, %v4004
        %v4006 = vpop.f32.mrf.mxu0
        %v4007 = vadd.f32 %v3918, %v4006
        %4008 = vmatmul.bf16.gmra.mxu0 %v2628
        %v4009 = vpop.f32.mrf.mxu0
        %v4010 = vadd.f32 %v3921, %v4009
        %v4011 = vpop.f32.mrf.mxu0
        %v4012 = vadd.f32 %v3923, %v4011
        %4013 = vmatmul.bf16.gmra.mxu0 %v2629
        %v4014 = vpop.f32.mrf.mxu0
        %v4015 = vadd.f32 %v3926, %v4014
        %v4016 = vpop.f32.mrf.mxu0
        %v4017 = vadd.f32 %v3928, %v4016
        %4018 = vmatmul.bf16.gmra.mxu0 %v2630
        %v4019 = vpop.f32.mrf.mxu0
        %v4020 = vadd.f32 %v3931, %v4019
        %v4021 = vpop.f32.mrf.mxu0
        %v4022 = vadd.f32 %v3933, %v4021
        %4023 = vmatmul.bf16.gmra.mxu0 %v2631
        %v4024 = vpop.f32.mrf.mxu0
        %v4025 = vadd.f32 %v3936, %v4024
        %v4026 = vpop.f32.mrf.mxu0
        %v4027 = vadd.f32 %v3938, %v4026
        %4028 = vdwg.mxu0
        %v4029 = vadd.f32 %v3490, %v3950
        %v4030 = vadd.f32 %v3492, %v3952
        %v4031 = vadd.f32 %v3495, %v3955
        %v4032 = vadd.f32 %v3497, %v3957
        %v4033 = vadd.f32 %v3500, %v3960
        %v4034 = vadd.f32 %v3502, %v3962
        %v4035 = vadd.f32 %v3505, %v3965
        %v4036 = vadd.f32 %v3507, %v3967
        %v4037 = vadd.f32 %v3510, %v3970
        %v4038 = vadd.f32 %v3512, %v3972
        %v4039 = vadd.f32 %v3515, %v3975
        %v4040 = vadd.f32 %v3517, %v3977
        %v4041 = vadd.f32 %v3520, %v3980
        %v4042 = vadd.f32 %v3522, %v3982
        %v4043 = vadd.f32 %v3525, %v3985
        %v4044 = vadd.f32 %v3527, %v3987
        %v4045 = vadd.f32 %v3530, %v3990
        %v4046 = vadd.f32 %v3532, %v3992
        %v4047 = vadd.f32 %v3535, %v3995
        %v4048 = vadd.f32 %v3537, %v3997
        %v4049 = vadd.f32 %v3540, %v4000
        %v4050 = vadd.f32 %v3542, %v4002
        %v4051 = vadd.f32 %v3545, %v4005
        %v4052 = vadd.f32 %v3547, %v4007
        %v4053 = vadd.f32 %v3550, %v4010
        %v4054 = vadd.f32 %v3552, %v4012
        %v4055 = vadd.f32 %v3555, %v4015
        %v4056 = vadd.f32 %v3557, %v4017
        %v4057 = vadd.f32 %v3560, %v4020
        %v4058 = vadd.f32 %v3562, %v4022
        %v4059 = vadd.f32 %v3565, %v4025
        %v4060 = vadd.f32 %v3567, %v4027
        %v4061 = vld [vmem:[%s7] sm:$0x1]
        %v4063 = vperm.slane %v4061, 0
        %v4065 = vmul.f32 %v4029, %v4063
        %v4066 = vmul.f32 %v4030, %v4063
        %v4067 = vmul.f32 %v4031, %v4063
        %v4068 = vmul.f32 %v4032, %v4063
        %v4069 = vmul.f32 %v4033, %v4063
        %v4070 = vmul.f32 %v4034, %v4063
        %v4071 = vmul.f32 %v4035, %v4063
        %v4072 = vmul.f32 %v4036, %v4063
        %v4073 = vmul.f32 %v4037, %v4063
        %v4074 = vmul.f32 %v4038, %v4063
        %v4075 = vmul.f32 %v4039, %v4063
        %v4076 = vmul.f32 %v4040, %v4063
        %v4077 = vmul.f32 %v4041, %v4063
        %v4078 = vmul.f32 %v4042, %v4063
        %v4079 = vmul.f32 %v4043, %v4063
        %v4080 = vmul.f32 %v4044, %v4063
        %v4081 = vmul.f32 %v4045, %v4063
        %v4082 = vmul.f32 %v4046, %v4063
        %v4083 = vmul.f32 %v4047, %v4063
        %v4084 = vmul.f32 %v4048, %v4063
        %v4085 = vmul.f32 %v4049, %v4063
        %v4086 = vmul.f32 %v4050, %v4063
        %v4087 = vmul.f32 %v4051, %v4063
        %v4088 = vmul.f32 %v4052, %v4063
        %v4089 = vmul.f32 %v4053, %v4063
        %v4090 = vmul.f32 %v4054, %v4063
        %v4091 = vmul.f32 %v4055, %v4063
        %v4092 = vmul.f32 %v4056, %v4063
        %v4093 = vmul.f32 %v4057, %v4063
        %v4094 = vmul.f32 %v4058, %v4063
        %v4095 = vmul.f32 %v4059, %v4063
        %v4096 = vmul.f32 %v4060, %v4063
        %v4097 = vld [vmem:[%s8] sm:$0x1]
        %v4099 = vperm.slane %v4097, 0
        %v4101 = vadd.f32 %v4065, %v4099
        %v4102 = vadd.f32 %v4066, %v4099
        %v4103 = vadd.f32 %v4067, %v4099
        %v4104 = vadd.f32 %v4068, %v4099
        %v4105 = vadd.f32 %v4069, %v4099
        %v4106 = vadd.f32 %v4070, %v4099
        %v4107 = vadd.f32 %v4071, %v4099
        %v4108 = vadd.f32 %v4072, %v4099
        %v4109 = vadd.f32 %v4073, %v4099
        %v4110 = vadd.f32 %v4074, %v4099
        %v4111 = vadd.f32 %v4075, %v4099
        %v4112 = vadd.f32 %v4076, %v4099
        %v4113 = vadd.f32 %v4077, %v4099
        %v4114 = vadd.f32 %v4078, %v4099
        %v4115 = vadd.f32 %v4079, %v4099
        %v4116 = vadd.f32 %v4080, %v4099
        %v4117 = vadd.f32 %v4081, %v4099
        %v4118 = vadd.f32 %v4082, %v4099
        %v4119 = vadd.f32 %v4083, %v4099
        %v4120 = vadd.f32 %v4084, %v4099
        %v4121 = vadd.f32 %v4085, %v4099
        %v4122 = vadd.f32 %v4086, %v4099
        %v4123 = vadd.f32 %v4087, %v4099
        %v4124 = vadd.f32 %v4088, %v4099
        %v4125 = vadd.f32 %v4089, %v4099
        %v4126 = vadd.f32 %v4090, %v4099
        %v4127 = vadd.f32 %v4091, %v4099
        %v4128 = vadd.f32 %v4092, %v4099
        %v4129 = vadd.f32 %v4093, %v4099
        %v4130 = vadd.f32 %v4094, %v4099
        %v4131 = vadd.f32 %v4095, %v4099
        %v4132 = vadd.f32 %v4096, %v4099
        %v4133 = vmax.f32 %v4101, 0.0
        %v4134 = vmax.f32 %v4102, 0.0
        %v4135 = vmax.f32 %v4103, 0.0
        %v4136 = vmax.f32 %v4104, 0.0
        %v4137 = vmax.f32 %v4105, 0.0
        %v4138 = vmax.f32 %v4106, 0.0
        %v4139 = vmax.f32 %v4107, 0.0
        %v4140 = vmax.f32 %v4108, 0.0
        %v4141 = vmax.f32 %v4109, 0.0
        %v4142 = vmax.f32 %v4110, 0.0
        %v4143 = vmax.f32 %v4111, 0.0
        %v4144 = vmax.f32 %v4112, 0.0
        %v4145 = vmax.f32 %v4113, 0.0
        %v4146 = vmax.f32 %v4114, 0.0
        %v4147 = vmax.f32 %v4115, 0.0
        %v4148 = vmax.f32 %v4116, 0.0
        %v4149 = vmax.f32 %v4117, 0.0
        %v4150 = vmax.f32 %v4118, 0.0
        %v4151 = vmax.f32 %v4119, 0.0
        %v4152 = vmax.f32 %v4120, 0.0
        %v4153 = vmax.f32 %v4121, 0.0
        %v4154 = vmax.f32 %v4122, 0.0
        %v4155 = vmax.f32 %v4123, 0.0
        %v4156 = vmax.f32 %v4124, 0.0
        %v4157 = vmax.f32 %v4125, 0.0
        %v4158 = vmax.f32 %v4126, 0.0
        %v4159 = vmax.f32 %v4127, 0.0
        %v4160 = vmax.f32 %v4128, 0.0
        %v4161 = vmax.f32 %v4129, 0.0
        %v4162 = vmax.f32 %v4130, 0.0
        %v4163 = vmax.f32 %v4131, 0.0
        %v4164 = vmax.f32 %v4132, 0.0
        %v4165 = vpack.c.bf16 %v4134, %v4133
        %v4166 = vpack.c.bf16 %v4136, %v4135
        %v4167 = vpack.c.bf16 %v4138, %v4137
        %v4168 = vpack.c.bf16 %v4140, %v4139
        %v4169 = vpack.c.bf16 %v4142, %v4141
        %v4170 = vpack.c.bf16 %v4144, %v4143
        %v4171 = vpack.c.bf16 %v4146, %v4145
        %v4172 = vpack.c.bf16 %v4148, %v4147
        %v4173 = vpack.c.bf16 %v4150, %v4149
        %v4174 = vpack.c.bf16 %v4152, %v4151
        %v4175 = vpack.c.bf16 %v4154, %v4153
        %v4176 = vpack.c.bf16 %v4156, %v4155
        %v4177 = vpack.c.bf16 %v4158, %v4157
        %v4178 = vpack.c.bf16 %v4160, %v4159
        %v4179 = vpack.c.bf16 %v4162, %v4161
        %v4180 = vpack.c.bf16 %v4164, %v4163
        %v4181 = vld [vmem:[#allocation10] sm:$0xf]
        %v4182 = vld [vmem:[#allocation10 + $0x4] sm:$0xf]
        %v4183 = vld [vmem:[#allocation10 + $0x8] sm:$0xf]
        %v4184 = vld [vmem:[#allocation10 + $0xc] sm:$0xf]
        %v4185 = vld [vmem:[#allocation10 + $0x10] sm:$0xf]
        %v4186 = vld [vmem:[#allocation10 + $0x14] sm:$0xf]
        %v4187 = vld [vmem:[#allocation10 + $0x18] sm:$0xf]
        %v4188 = vld [vmem:[#allocation10 + $0x1c] sm:$0xf]
        %v4189 = vld [vmem:[#allocation10 + $0x20] sm:$0xf]
        %v4190 = vld [vmem:[#allocation10 + $0x24] sm:$0xf]
        %v4191 = vld [vmem:[#allocation10 + $0x28] sm:$0xf]
        %v4192 = vld [vmem:[#allocation10 + $0x2c] sm:$0xf]
        %v4193 = vld [vmem:[#allocation10 + $0x30] sm:$0xf]
        %v4194 = vld [vmem:[#allocation10 + $0x34] sm:$0xf]
        %v4195 = vld [vmem:[#allocation10 + $0x38] sm:$0xf]
        %v4196 = vld [vmem:[#allocation10 + $0x3c] sm:$0xf]
        %s4197 = sadd.s32 %s530, 1
        %s4198 = smul.u32 %s4197, 2
        %s4199 = smul.addr %s4198, 4
        %s4200 = scalar_lea.vmem %s462, %s4199 [#allocation2]
        %v4201 = vld [vmem:[%s4200] sm:$0xf]
        %v4202 = vld [vmem:[%s4200 + $0x4] sm:$0xf]
        %v4203 = vld [vmem:[%s4200 + $0x8] sm:$0xf]
        %v4204 = vld [vmem:[%s4200 + $0xc] sm:$0xf]
        %v4205 = vld [vmem:[%s4200 + $0x10] sm:$0xf]
        %v4206 = vld [vmem:[%s4200 + $0x14] sm:$0xf]
        %v4207 = vld [vmem:[%s4200 + $0x18] sm:$0xf]
        %v4208 = vld [vmem:[%s4200 + $0x1c] sm:$0xf]
        %v4209 = vld [vmem:[%s4200 + $0x20] sm:$0xf]
        %v4210 = vld [vmem:[%s4200 + $0x24] sm:$0xf]
        %v4211 = vld [vmem:[%s4200 + $0x28] sm:$0xf]
        %v4212 = vld [vmem:[%s4200 + $0x2c] sm:$0xf]
        %v4213 = vld [vmem:[%s4200 + $0x30] sm:$0xf]
        %v4214 = vld [vmem:[%s4200 + $0x34] sm:$0xf]
        %v4215 = vld [vmem:[%s4200 + $0x38] sm:$0xf]
        %v4216 = vld [vmem:[%s4200 + $0x3c] sm:$0xf]
        %v4217 = vld [vmem:[%s4200 + $0x40] sm:$0xf]
        %v4218 = vld [vmem:[%s4200 + $0x44] sm:$0xf]
        %v4219 = vld [vmem:[%s4200 + $0x48] sm:$0xf]
        %v4220 = vld [vmem:[%s4200 + $0x4c] sm:$0xf]
        %v4221 = vld [vmem:[%s4200 + $0x50] sm:$0xf]
        %v4222 = vld [vmem:[%s4200 + $0x54] sm:$0xf]
        %v4223 = vld [vmem:[%s4200 + $0x58] sm:$0xf]
        %v4224 = vld [vmem:[%s4200 + $0x5c] sm:$0xf]
        %v4225 = vld [vmem:[%s4200 + $0x60] sm:$0xf]
        %v4226 = vld [vmem:[%s4200 + $0x64] sm:$0xf]
        %v4227 = vld [vmem:[%s4200 + $0x68] sm:$0xf]
        %v4228 = vld [vmem:[%s4200 + $0x6c] sm:$0xf]
        %v4229 = vld [vmem:[%s4200 + $0x70] sm:$0xf]
        %v4230 = vld [vmem:[%s4200 + $0x74] sm:$0xf]
        %v4231 = vld [vmem:[%s4200 + $0x78] sm:$0xf]
        %v4232 = vld [vmem:[%s4200 + $0x7c] sm:$0xf]
        %v4233 = vld [vmem:[#allocation11] sm:$0xf]
        %v4234 = vld [vmem:[#allocation11 + $0x4] sm:$0xf]
        %v4235 = vld [vmem:[#allocation11 + $0x8] sm:$0xf]
        %v4236 = vld [vmem:[#allocation11 + $0xc] sm:$0xf]
        %v4237 = vld [vmem:[#allocation11 + $0x10] sm:$0xf]
        %v4238 = vld [vmem:[#allocation11 + $0x14] sm:$0xf]
        %v4239 = vld [vmem:[#allocation11 + $0x18] sm:$0xf]
        %v4240 = vld [vmem:[#allocation11 + $0x1c] sm:$0xf]
        %v4241 = vld [vmem:[#allocation11 + $0x20] sm:$0xf]
        %v4242 = vld [vmem:[#allocation11 + $0x24] sm:$0xf]
        %v4243 = vld [vmem:[#allocation11 + $0x28] sm:$0xf]
        %v4244 = vld [vmem:[#allocation11 + $0x2c] sm:$0xf]
        %v4245 = vld [vmem:[#allocation11 + $0x30] sm:$0xf]
        %v4246 = vld [vmem:[#allocation11 + $0x34] sm:$0xf]
        %v4247 = vld [vmem:[#allocation11 + $0x38] sm:$0xf]
        %v4248 = vld [vmem:[#allocation11 + $0x3c] sm:$0xf]
        %v4281 = vunpack.c.l.b16 %v4201
        %v4282 = vunpack.c.l.b16 %v4202
        %v4283 = vunpack.c.l.b16 %v4203
        %v4284 = vunpack.c.l.b16 %v4204
        %v4285 = vunpack.c.l.b16 %v4205
        %v4286 = vunpack.c.l.b16 %v4206
        %v4287 = vunpack.c.l.b16 %v4207
        %v4288 = vunpack.c.l.b16 %v4208
        %v4289 = vunpack.c.l.b16 %v4209
        %v4290 = vunpack.c.l.b16 %v4210
        %v4291 = vunpack.c.l.b16 %v4211
        %v4292 = vunpack.c.l.b16 %v4212
        %v4293 = vunpack.c.l.b16 %v4213
        %v4294 = vunpack.c.l.b16 %v4214
        %v4295 = vunpack.c.l.b16 %v4215
        %v4296 = vunpack.c.l.b16 %v4216
        %v4297 = vunpack.c.l.b16 %v4217
        %v4298 = vunpack.c.l.b16 %v4218
        %v4299 = vunpack.c.l.b16 %v4219
        %v4300 = vunpack.c.l.b16 %v4220
        %v4301 = vunpack.c.l.b16 %v4221
        %v4302 = vunpack.c.l.b16 %v4222
        %v4303 = vunpack.c.l.b16 %v4223
        %v4304 = vunpack.c.l.b16 %v4224
        %v4305 = vunpack.c.l.b16 %v4225
        %v4306 = vunpack.c.l.b16 %v4226
        %v4307 = vunpack.c.l.b16 %v4227
        %v4308 = vunpack.c.l.b16 %v4228
        %v4309 = vunpack.c.l.b16 %v4229
        %v4310 = vunpack.c.l.b16 %v4230
        %v4311 = vunpack.c.l.b16 %v4231
        %v4312 = vunpack.c.l.b16 %v4232
        %v4313 = vpack.c.b16 %v4282, %v4281
        %v4314 = vpack.c.b16 %v4284, %v4283
        %v4315 = vpack.c.b16 %v4286, %v4285
        %v4316 = vpack.c.b16 %v4288, %v4287
        %v4317 = vpack.c.b16 %v4290, %v4289
        %v4318 = vpack.c.b16 %v4292, %v4291
        %v4319 = vpack.c.b16 %v4294, %v4293
        %v4320 = vpack.c.b16 %v4296, %v4295
        %v4321 = vpack.c.b16 %v4298, %v4297
        %v4322 = vpack.c.b16 %v4300, %v4299
        %v4323 = vpack.c.b16 %v4302, %v4301
        %v4324 = vpack.c.b16 %v4304, %v4303
        %v4325 = vpack.c.b16 %v4306, %v4305
        %v4326 = vpack.c.b16 %v4308, %v4307
        %v4327 = vpack.c.b16 %v4310, %v4309
        %v4328 = vpack.c.b16 %v4312, %v4311
        %v4361 = vunpack.c.l.b16 %v4233
        %v4362 = vunpack.c.l.b16 %v4234
        %v4363 = vunpack.c.l.b16 %v4235
        %v4364 = vunpack.c.l.b16 %v4236
        %v4365 = vunpack.c.l.b16 %v4237
        %v4366 = vunpack.c.l.b16 %v4238
        %v4367 = vunpack.c.l.b16 %v4239
        %v4368 = vunpack.c.l.b16 %v4240
        %v4369 = vunpack.c.l.b16 %v4241
        %v4370 = vunpack.c.l.b16 %v4242
        %v4371 = vunpack.c.l.b16 %v4243
        %v4372 = vunpack.c.l.b16 %v4244
        %v4373 = vunpack.c.l.b16 %v4245
        %v4374 = vunpack.c.l.b16 %v4246
        %v4375 = vunpack.c.l.b16 %v4247
        %v4376 = vunpack.c.l.b16 %v4248
        %v4377 = vpack.c.b16 %v4362, %v4361
        %v4378 = vpack.c.b16 %v4364, %v4363
        %v4379 = vpack.c.b16 %v4366, %v4365
        %v4380 = vpack.c.b16 %v4368, %v4367
        %v4381 = vpack.c.b16 %v4370, %v4369
        %v4382 = vpack.c.b16 %v4372, %v4371
        %v4383 = vpack.c.b16 %v4374, %v4373
        %v4384 = vpack.c.b16 %v4376, %v4375
        %4393 = vmatpush.bf16.msra.mxu0 %v4384
        %4394 = vmatpush.bf16.msra.mxu0 %v4383
        %4395 = vmatpush.bf16.msra.mxu0 %v4382
        %4396 = vmatpush.bf16.msra.mxu0 %v4381
        %4397 = vmatpush.bf16.msra.mxu0 %v4380
        %4398 = vmatpush.bf16.msra.mxu0 %v4379
        %4399 = vmatpush.bf16.msra.mxu0 %v4378
        %4400 = vmatpush.bf16.msra.mxu0 %v4377
        %4401 = vmatmul.bf16.gmra.mxu0 %v4313
        %v4402 = vpop.f32.mrf.mxu0
        %v4403 = vadd.f32 0.0, %v4402
        %v4404 = vpop.f32.mrf.mxu0
        %v4405 = vadd.f32 0.0, %v4404
        %4406 = vmatmul.bf16.gmra.mxu0 %v4314
        %v4407 = vpop.f32.mrf.mxu0
        %v4408 = vadd.f32 0.0, %v4407
        %v4409 = vpop.f32.mrf.mxu0
        %v4410 = vadd.f32 0.0, %v4409
        %4411 = vmatmul.bf16.gmra.mxu0 %v4315
        %v4412 = vpop.f32.mrf.mxu0
        %v4413 = vadd.f32 0.0, %v4412
        %v4414 = vpop.f32.mrf.mxu0
        %v4415 = vadd.f32 0.0, %v4414
        %4416 = vmatmul.bf16.gmra.mxu0 %v4316
        %v4417 = vpop.f32.mrf.mxu0
        %v4418 = vadd.f32 0.0, %v4417
        %v4419 = vpop.f32.mrf.mxu0
        %v4420 = vadd.f32 0.0, %v4419
        %4421 = vmatmul.bf16.gmra.mxu0 %v4317
        %v4422 = vpop.f32.mrf.mxu0
        %v4423 = vadd.f32 0.0, %v4422
        %v4424 = vpop.f32.mrf.mxu0
        %v4425 = vadd.f32 0.0, %v4424
        %4426 = vmatmul.bf16.gmra.mxu0 %v4318
        %v4427 = vpop.f32.mrf.mxu0
        %v4428 = vadd.f32 0.0, %v4427
        %v4429 = vpop.f32.mrf.mxu0
        %v4430 = vadd.f32 0.0, %v4429
        %4431 = vmatmul.bf16.gmra.mxu0 %v4319
        %v4432 = vpop.f32.mrf.mxu0
        %v4433 = vadd.f32 0.0, %v4432
        %v4434 = vpop.f32.mrf.mxu0
        %v4435 = vadd.f32 0.0, %v4434
        %4436 = vmatmul.bf16.gmra.mxu0 %v4320
        %v4437 = vpop.f32.mrf.mxu0
        %v4438 = vadd.f32 0.0, %v4437
        %v4439 = vpop.f32.mrf.mxu0
        %v4440 = vadd.f32 0.0, %v4439
        %4441 = vmatmul.bf16.gmra.mxu0 %v4321
        %v4442 = vpop.f32.mrf.mxu0
        %v4443 = vadd.f32 0.0, %v4442
        %v4444 = vpop.f32.mrf.mxu0
        %v4445 = vadd.f32 0.0, %v4444
        %4446 = vmatmul.bf16.gmra.mxu0 %v4322
        %v4447 = vpop.f32.mrf.mxu0
        %v4448 = vadd.f32 0.0, %v4447
        %v4449 = vpop.f32.mrf.mxu0
        %v4450 = vadd.f32 0.0, %v4449
        %4451 = vmatmul.bf16.gmra.mxu0 %v4323
        %v4452 = vpop.f32.mrf.mxu0
        %v4453 = vadd.f32 0.0, %v4452
        %v4454 = vpop.f32.mrf.mxu0
        %v4455 = vadd.f32 0.0, %v4454
        %4456 = vmatmul.bf16.gmra.mxu0 %v4324
        %v4457 = vpop.f32.mrf.mxu0
        %v4458 = vadd.f32 0.0, %v4457
        %v4459 = vpop.f32.mrf.mxu0
        %v4460 = vadd.f32 0.0, %v4459
        %4461 = vmatmul.bf16.gmra.mxu0 %v4325
        %v4462 = vpop.f32.mrf.mxu0
        %v4463 = vadd.f32 0.0, %v4462
        %v4464 = vpop.f32.mrf.mxu0
        %v4465 = vadd.f32 0.0, %v4464
        %4466 = vmatmul.bf16.gmra.mxu0 %v4326
        %v4467 = vpop.f32.mrf.mxu0
        %v4468 = vadd.f32 0.0, %v4467
        %v4469 = vpop.f32.mrf.mxu0
        %v4470 = vadd.f32 0.0, %v4469
        %4471 = vmatmul.bf16.gmra.mxu0 %v4327
        %v4472 = vpop.f32.mrf.mxu0
        %v4473 = vadd.f32 0.0, %v4472
        %v4474 = vpop.f32.mrf.mxu0
        %v4475 = vadd.f32 0.0, %v4474
        %4476 = vmatmul.bf16.gmra.mxu0 %v4328
        %v4477 = vpop.f32.mrf.mxu0
        %v4478 = vadd.f32 0.0, %v4477
        %v4479 = vpop.f32.mrf.mxu0
        %v4480 = vadd.f32 0.0, %v4479
        %4481 = vdwg.mxu0
        %v4498 = vunpack.c.l.b16 %v4181
        %v4499 = vunpack.c.l.b16 %v4182
        %v4500 = vunpack.c.l.b16 %v4183
        %v4501 = vunpack.c.l.b16 %v4184
        %v4502 = vunpack.c.l.b16 %v4185
        %v4503 = vunpack.c.l.b16 %v4186
        %v4504 = vunpack.c.l.b16 %v4187
        %v4505 = vunpack.c.l.b16 %v4188
        %v4506 = vunpack.c.l.b16 %v4189
        %v4507 = vunpack.c.l.b16 %v4190
        %v4508 = vunpack.c.l.b16 %v4191
        %v4509 = vunpack.c.l.b16 %v4192
        %v4510 = vunpack.c.l.b16 %v4193
        %v4511 = vunpack.c.l.b16 %v4194
        %v4512 = vunpack.c.l.b16 %v4195
        %v4513 = vunpack.c.l.b16 %v4196
        %v4514 = vpack.c.b16 %v4499, %v4498
        %v4515 = vpack.c.b16 %v4501, %v4500
        %v4516 = vpack.c.b16 %v4503, %v4502
        %v4517 = vpack.c.b16 %v4505, %v4504
        %v4518 = vpack.c.b16 %v4507, %v4506
        %v4519 = vpack.c.b16 %v4509, %v4508
        %v4520 = vpack.c.b16 %v4511, %v4510
        %v4521 = vpack.c.b16 %v4513, %v4512
        %4530 = vmatpush.bf16.msra.mxu0 %v4521
        %4531 = vmatpush.bf16.msra.mxu0 %v4520
        %4532 = vmatpush.bf16.msra.mxu0 %v4519
        %4533 = vmatpush.bf16.msra.mxu0 %v4518
        %4534 = vmatpush.bf16.msra.mxu0 %v4517
        %4535 = vmatpush.bf16.msra.mxu0 %v4516
        %4536 = vmatpush.bf16.msra.mxu0 %v4515
        %4537 = vmatpush.bf16.msra.mxu0 %v4514
        %4538 = vmatmul.bf16.gmra.mxu0 %v4165
        %v4539 = vpop.f32.mrf.mxu0
        %v4540 = vadd.f32 %v4403, %v4539
        %v4541 = vpop.f32.mrf.mxu0
        %v4542 = vadd.f32 %v4405, %v4541
        %4543 = vmatmul.bf16.gmra.mxu0 %v4166
        %v4544 = vpop.f32.mrf.mxu0
        %v4545 = vadd.f32 %v4408, %v4544
        %v4546 = vpop.f32.mrf.mxu0
        %v4547 = vadd.f32 %v4410, %v4546
        %4548 = vmatmul.bf16.gmra.mxu0 %v4167
        %v4549 = vpop.f32.mrf.mxu0
        %v4550 = vadd.f32 %v4413, %v4549
        %v4551 = vpop.f32.mrf.mxu0
        %v4552 = vadd.f32 %v4415, %v4551
        %4553 = vmatmul.bf16.gmra.mxu0 %v4168
        %v4554 = vpop.f32.mrf.mxu0
        %v4555 = vadd.f32 %v4418, %v4554
        %v4556 = vpop.f32.mrf.mxu0
        %v4557 = vadd.f32 %v4420, %v4556
        %4558 = vmatmul.bf16.gmra.mxu0 %v4169
        %v4559 = vpop.f32.mrf.mxu0
        %v4560 = vadd.f32 %v4423, %v4559
        %v4561 = vpop.f32.mrf.mxu0
        %v4562 = vadd.f32 %v4425, %v4561
        %4563 = vmatmul.bf16.gmra.mxu0 %v4170
        %v4564 = vpop.f32.mrf.mxu0
        %v4565 = vadd.f32 %v4428, %v4564
        %v4566 = vpop.f32.mrf.mxu0
        %v4567 = vadd.f32 %v4430, %v4566
        %4568 = vmatmul.bf16.gmra.mxu0 %v4171
        %v4569 = vpop.f32.mrf.mxu0
        %v4570 = vadd.f32 %v4433, %v4569
        %v4571 = vpop.f32.mrf.mxu0
        %v4572 = vadd.f32 %v4435, %v4571
        %4573 = vmatmul.bf16.gmra.mxu0 %v4172
        %v4574 = vpop.f32.mrf.mxu0
        %v4575 = vadd.f32 %v4438, %v4574
        %v4576 = vpop.f32.mrf.mxu0
        %v4577 = vadd.f32 %v4440, %v4576
        %4578 = vmatmul.bf16.gmra.mxu0 %v4173
        %v4579 = vpop.f32.mrf.mxu0
        %v4580 = vadd.f32 %v4443, %v4579
        %v4581 = vpop.f32.mrf.mxu0
        %v4582 = vadd.f32 %v4445, %v4581
        %4583 = vmatmul.bf16.gmra.mxu0 %v4174
        %v4584 = vpop.f32.mrf.mxu0
        %v4585 = vadd.f32 %v4448, %v4584
        %v4586 = vpop.f32.mrf.mxu0
        %v4587 = vadd.f32 %v4450, %v4586
        %4588 = vmatmul.bf16.gmra.mxu0 %v4175
        %v4589 = vpop.f32.mrf.mxu0
        %v4590 = vadd.f32 %v4453, %v4589
        %v4591 = vpop.f32.mrf.mxu0
        %v4592 = vadd.f32 %v4455, %v4591
        %4593 = vmatmul.bf16.gmra.mxu0 %v4176
        %v4594 = vpop.f32.mrf.mxu0
        %v4595 = vadd.f32 %v4458, %v4594
        %v4596 = vpop.f32.mrf.mxu0
        %v4597 = vadd.f32 %v4460, %v4596
        %4598 = vmatmul.bf16.gmra.mxu0 %v4177
        %v4599 = vpop.f32.mrf.mxu0
        %v4600 = vadd.f32 %v4463, %v4599
        %v4601 = vpop.f32.mrf.mxu0
        %v4602 = vadd.f32 %v4465, %v4601
        %4603 = vmatmul.bf16.gmra.mxu0 %v4178
        %v4604 = vpop.f32.mrf.mxu0
        %v4605 = vadd.f32 %v4468, %v4604
        %v4606 = vpop.f32.mrf.mxu0
        %v4607 = vadd.f32 %v4470, %v4606
        %4608 = vmatmul.bf16.gmra.mxu0 %v4179
        %v4609 = vpop.f32.mrf.mxu0
        %v4610 = vadd.f32 %v4473, %v4609
        %v4611 = vpop.f32.mrf.mxu0
        %v4612 = vadd.f32 %v4475, %v4611
        %4613 = vmatmul.bf16.gmra.mxu0 %v4180
        %v4614 = vpop.f32.mrf.mxu0
        %v4615 = vadd.f32 %v4478, %v4614
        %v4616 = vpop.f32.mrf.mxu0
        %v4617 = vadd.f32 %v4480, %v4616
        %4618 = vdwg.mxu0
        %v4619 = vld [vmem:[%s11] sm:$0x1]
        %v4621 = vperm.slane %v4619, 0
        %v4623 = vadd.f32 %v4540, %v4621
        %v4624 = vadd.f32 %v4542, %v4621
        %v4625 = vadd.f32 %v4545, %v4621
        %v4626 = vadd.f32 %v4547, %v4621
        %v4627 = vadd.f32 %v4550, %v4621
        %v4628 = vadd.f32 %v4552, %v4621
        %v4629 = vadd.f32 %v4555, %v4621
        %v4630 = vadd.f32 %v4557, %v4621
        %v4631 = vadd.f32 %v4560, %v4621
        %v4632 = vadd.f32 %v4562, %v4621
        %v4633 = vadd.f32 %v4565, %v4621
        %v4634 = vadd.f32 %v4567, %v4621
        %v4635 = vadd.f32 %v4570, %v4621
        %v4636 = vadd.f32 %v4572, %v4621
        %v4637 = vadd.f32 %v4575, %v4621
        %v4638 = vadd.f32 %v4577, %v4621
        %v4639 = vadd.f32 %v4580, %v4621
        %v4640 = vadd.f32 %v4582, %v4621
        %v4641 = vadd.f32 %v4585, %v4621
        %v4642 = vadd.f32 %v4587, %v4621
        %v4643 = vadd.f32 %v4590, %v4621
        %v4644 = vadd.f32 %v4592, %v4621
        %v4645 = vadd.f32 %v4595, %v4621
        %v4646 = vadd.f32 %v4597, %v4621
        %v4647 = vadd.f32 %v4600, %v4621
        %v4648 = vadd.f32 %v4602, %v4621
        %v4649 = vadd.f32 %v4605, %v4621
        %v4650 = vadd.f32 %v4607, %v4621
        %v4651 = vadd.f32 %v4610, %v4621
        %v4652 = vadd.f32 %v4612, %v4621
        %v4653 = vadd.f32 %v4615, %v4621
        %v4654 = vadd.f32 %v4617, %v4621
        %4655 = vst [vmem:[%s528] sm:$0xff] %v4623
        %4656 = vst [vmem:[%s528 + $0x8] sm:$0xff] %v4624
        %4657 = vst [vmem:[%s528 + $0x10] sm:$0xff] %v4625
        %4658 = vst [vmem:[%s528 + $0x18] sm:$0xff] %v4626
        %4659 = vst [vmem:[%s528 + $0x20] sm:$0xff] %v4627
        %4660 = vst [vmem:[%s528 + $0x28] sm:$0xff] %v4628
        %4661 = vst [vmem:[%s528 + $0x30] sm:$0xff] %v4629
        %4662 = vst [vmem:[%s528 + $0x38] sm:$0xff] %v4630
        %4663 = vst [vmem:[%s528 + $0x40] sm:$0xff] %v4631
        %4664 = vst [vmem:[%s528 + $0x48] sm:$0xff] %v4632
        %4665 = vst [vmem:[%s528 + $0x50] sm:$0xff] %v4633
        %4666 = vst [vmem:[%s528 + $0x58] sm:$0xff] %v4634
        %4667 = vst [vmem:[%s528 + $0x60] sm:$0xff] %v4635
        %4668 = vst [vmem:[%s528 + $0x68] sm:$0xff] %v4636
        %4669 = vst [vmem:[%s528 + $0x70] sm:$0xff] %v4637
        %4670 = vst [vmem:[%s528 + $0x78] sm:$0xff] %v4638
        %4671 = vst [vmem:[%s528 + $0x80] sm:$0xff] %v4639
        %4672 = vst [vmem:[%s528 + $0x88] sm:$0xff] %v4640
        %4673 = vst [vmem:[%s528 + $0x90] sm:$0xff] %v4641
        %4674 = vst [vmem:[%s528 + $0x98] sm:$0xff] %v4642
        %4675 = vst [vmem:[%s528 + $0xa0] sm:$0xff] %v4643
        %4676 = vst [vmem:[%s528 + $0xa8] sm:$0xff] %v4644
        %4677 = vst [vmem:[%s528 + $0xb0] sm:$0xff] %v4645
        %4678 = vst [vmem:[%s528 + $0xb8] sm:$0xff] %v4646
        %4679 = vst [vmem:[%s528 + $0xc0] sm:$0xff] %v4647
        %4680 = vst [vmem:[%s528 + $0xc8] sm:$0xff] %v4648
        %4681 = vst [vmem:[%s528 + $0xd0] sm:$0xff] %v4649
        %4682 = vst [vmem:[%s528 + $0xd8] sm:$0xff] %v4650
        %4683 = vst [vmem:[%s528 + $0xe0] sm:$0xff] %v4651
        %4684 = vst [vmem:[%s528 + $0xe8] sm:$0xff] %v4652
        %4685 = vst [vmem:[%s528 + $0xf0] sm:$0xff] %v4653
        %4686 = vst [vmem:[%s528 + $0xf8] sm:$0xff] %v4654
        %s4687 = sand.u32 %s311, 1
        %s4688 = scalar_lea.sflag [#allocation4], %s4687
        %s4689 = sand.u32 %s311, 1
        %s4690 = smul.addr %s4689, 256
        %s4691 = scalar_lea.vmem [#allocation13], %s4690
        // Predicated region
        $region93: #{tpu_custom_call.1} parent=67 // pred_check
          %p4692 = pneg %p321
        $region94: #{tpu_custom_call.1} parent=67 // pred_check_branch
          %4694 = sbr.rel (%p4692) target = $region96
        $region95: #{tpu_custom_call.1} parent=67 // pred_region
          %s4695 = smul.u32 16, %s37
          %4697 = vsyncadd %s4688, 0
          %s4698 = smul.addr %s4695, 2
          %s4699 = smul.addr %s36, 32
          %s4700 = sadd.s32 %s4698, %s4699
          %s4701 = smul.addr %s4700, 8
          %s4702 = scalar_lea.hbm %s12, %s4701
          %s4703 = sshll.u32 %s4691, 4
          %s4704 = int_to_ptr.vmem [resolvable:$true] %s4703
          %s4705 = sshll.u32 %s4702, 4
          %s4706 = int_to_ptr.hbm [resolvable:$true] %s4705
          %4711 = dma.vmem_to_hbm [thread:$0]  %s4704, 4096, %s4706, %s4688, 128, 128, 8
        $region96: #{tpu_custom_call.1} parent=67 // pred_fallthru
          _
      $region68: #{tpu_custom_call.1} parent=5 // pred_fallthru
        _
      %p4712 = scmp.le.s32.totalorder 2, %s27
      // Predicated region
      $region97: #{tpu_custom_call.1} parent=5 // pred_check
        %p4713 = pneg %p4712
      $region98: #{tpu_custom_call.1} parent=5 // pred_check_branch
        %4715 = sbr.rel (%p4713) target = $region100
      $region99: #{tpu_custom_call.1} parent=5 // pred_region
        %s4716 = ssub.s32 %s27, 2
        // Predicated region
        $region101: #{tpu_custom_call.1} parent=99 // pred_check
          %p4717 = pneg %p327
        $region102: #{tpu_custom_call.1} parent=99 // pred_check_branch
          %4719 = sbr.rel (%p4717) target = $region104
        $region103: #{tpu_custom_call.1} parent=99 // pred_region
          %s4720 = sand.u32 %s312, 1
          %s4721 = scalar_lea.sflag [#allocation4], %s4720
          %s4722 = sand.u32 %s312, 1
          %s4723 = smul.addr %s4722, 256
          %s4724 = scalar_lea.vmem [#allocation13], %s4723
          %4726 = dma.done %s4721, 4096
        $region104: #{tpu_custom_call.1} parent=99 // pred_fallthru
          _
      $region100: #{tpu_custom_call.1} parent=5 // pred_fallthru
        _
    $region6: #{tpu_custom_call.1} parent=1 // loop_footer
      %s31 = sadd.s32 1, %s27
    $region7: #{tpu_custom_call.1} parent=1 // loop_footer_branch
      %26 = sbr.rel target = $region3
    $region8: #{tpu_custom_call.1} parent=1 // loop_exit
      _
    %4727 = vsyncpa [#allocation3], 1
    %s4728 = scalar_lea.sflag [#allocation3], 1
    %4729 = vsyncpa %s4728, 1
    %4730 = vsyncpa [#allocation6], 1
    %4731 = vsyncpa [#allocation9], 1
    %4732 = vsyncpa [#allocation12], 1
    %4733 = vsyncpa [#allocation4], 1
    %s4734 = scalar_lea.sflag [#allocation4], 1
    %4735 = vsyncpa %s4734, 1

</llo_original>
